<compile_context>
chip_gen: v6e
topology: v6e:2x2x1
jax: 0.10.0
libtpu: 0.0.40
codegen_flags: <defaults>
</compile_context>

<pallas_src>
import functools

import jax
import jax.numpy as jnp
from jax.experimental import pallas as pl
from jax.experimental.pallas import tpu as pltpu

EPS = 1e-5
LANE = 128
# Set to jnp.bfloat16 to halve patch-stream HBM traffic and double MXU
# throughput (at reduced precision); f32 keeps the module's f32 numerics.
MATMUL_DTYPE = jnp.float32
VMEM_LIMIT = 32 * 1024 * 1024      # safe on v5e/v6e (128 MiB) and v7x (64 MiB)
TILE_BUDGET = 12 * 1024 * 1024     # budget for double-buffered row streams


# ----------------------------- helpers --------------------------------------

def _round_up(x, m):
    return ((x + m - 1) // m) * m


def _choose_tm(m, row_bytes):
    """Largest row tile (multiple of 8, <=1024) whose double-buffered streams
    fit the per-step VMEM budget."""
    cap = max(8, TILE_BUDGET // (2 * max(row_bytes, 1)))
    tm = 1024
    while tm > 8 and tm > cap:
        tm //= 2
    tm = min(tm, _round_up(m, 8))
    return max(8, (tm // 8) * 8)


def _compiler_params():
    return pltpu.CompilerParams(dimension_semantics=("parallel",),
                                vmem_limit_bytes=VMEM_LIMIT)


# ----------------------------- Pallas kernels -------------------------------

def _conv_stats_kernel(p_ref, w_ref, y_ref, s_ref, q_ref, *, m_true, tm):
    """y = patches @ w, plus per-block per-channel partial sum / sum-of-sq."""
    y = jnp.dot(p_ref[...], w_ref[...], preferred_element_type=jnp.float32)
    y_ref[...] = y
    rows = pl.program_id(0) * tm + jax.lax.broadcasted_iota(jnp.int32, (tm, 1), 0)
    ym = jnp.where(rows < m_true, y, 0.0)
    c = y.shape[1]
    s_ref[...] = jnp.broadcast_to(
        jnp.sum(ym, axis=0, keepdims=True).reshape(1, 1, c), (1, 8, c))
    q_ref[...] = jnp.broadcast_to(
        jnp.sum(ym * ym, axis=0, keepdims=True).reshape(1, 1, c), (1, 8, c))


def _conv2_shortcut_kernel(p_ref, sc1_ref, sh1_ref, w2_ref, xs_ref, ws_ref,
                           y2_ref, ys_ref, s2_ref, q2_ref, ss_ref, qs_ref,
                           *, m_true, tm):
    """Fused: o1 = relu(bn1(patch tile)); y2 = o1 @ w2 ; ys = xs @ ws ;
    per-block BN partial stats for both y2 and ys."""
    a = jnp.maximum(p_ref[...].astype(jnp.float32) * sc1_ref[...] + sh1_ref[...],
                    0.0)
    y2 = jnp.dot(a.astype(w2_ref.dtype), w2_ref[...],
                 preferred_element_type=jnp.float32)
    ys = jnp.dot(xs_ref[...], ws_ref[...], preferred_element_type=jnp.float32)
    y2_ref[...] = y2
    ys_ref[...] = ys

    rows = pl.program_id(0) * tm + jax.lax.broadcasted_iota(jnp.int32, (tm, 1), 0)
    valid = rows < m_true
    y2m = jnp.where(valid, y2, 0.0)
    ysm = jnp.where(valid, ys, 0.0)
    c = y2.shape[1]
    s2_ref[...] = jnp.broadcast_to(
        jnp.sum(y2m, axis=0, keepdims=True).reshape(1, 1, c), (1, 8, c))
    q2_ref[...] = jnp.broadcast_to(
        jnp.sum(y2m * y2m, axis=0, keepdims=True).reshape(1, 1, c), (1, 8, c))
    ss_ref[...] = jnp.broadcast_to(
        jnp.sum(ysm, axis=0, keepdims=True).reshape(1, 1, c), (1, 8, c))
    qs_ref[...] = jnp.broadcast_to(
        jnp.sum(ysm * ysm, axis=0, keepdims=True).reshape(1, 1, c), (1, 8, c))


def _conv2_id_kernel(p_ref, sc1_ref, sh1_ref, w2_ref,
                     y2_ref, s2_ref, q2_ref, *, m_true, tm):
    """Identity-shortcut variant: fused bn1+relu prologue + conv2 + stats."""
    a = jnp.maximum(p_ref[...].astype(jnp.float32) * sc1_ref[...] + sh1_ref[...],
                    0.0)
    y2 = jnp.dot(a.astype(w2_ref.dtype), w2_ref[...],
                 preferred_element_type=jnp.float32)
    y2_ref[...] = y2
    rows = pl.program_id(0) * tm + jax.lax.broadcasted_iota(jnp.int32, (tm, 1), 0)
    y2m = jnp.where(rows < m_true, y2, 0.0)
    c = y2.shape[1]
    s2_ref[...] = jnp.broadcast_to(
        jnp.sum(y2m, axis=0, keepdims=True).reshape(1, 1, c), (1, 8, c))
    q2_ref[...] = jnp.broadcast_to(
        jnp.sum(y2m * y2m, axis=0, keepdims=True).reshape(1, 1, c), (1, 8, c))


def _bn_add_relu_kernel(y2_ref, sc2_ref, sh2_ref, ys_ref, scs_ref, shs_ref,
                        o_ref):
    main = y2_ref[...] * sc2_ref[...] + sh2_ref[...]
    short = ys_ref[...] * scs_ref[...] + shs_ref[...]
    o_ref[...] = jnp.maximum(main + short, 0.0)


# ----------------------------- pallas_call wrappers --------------------------

def conv_with_stats(patches, w_mat):
    """(M, K) @ (K, C) with fused per-channel sum / sumsq (training BN stats)."""
    m, k = patches.shape
    c = w_mat.shape[1]
    tm = _choose_tm(m, (k + 3 * c) * 4)
    mp = _round_up(m, tm)
    grid = mp // tm
    if mp != m:
        patches = jnp.pad(patches, ((0, mp - m), (0, 0)))
    patches = patches.astype(MATMUL_DTYPE)
    w_mat = w_mat.astype(MATMUL_DTYPE)

    y, ps, pq = pl.pallas_call(
        functools.partial(_conv_stats_kernel, m_true=m, tm=tm),
        out_shape=(jax.ShapeDtypeStruct((mp, c), jnp.float32),
                   jax.ShapeDtypeStruct((grid, 8, c), jnp.float32),
                   jax.ShapeDtypeStruct((grid, 8, c), jnp.float32)),
        grid=(grid,),
        in_specs=[pl.BlockSpec((tm, k), lambda i: (i, 0)),
                  pl.BlockSpec((k, c), lambda i: (0, 0))],
        out_specs=(pl.BlockSpec((tm, c), lambda i: (i, 0)),
                   pl.BlockSpec((1, 8, c), lambda i: (i, 0, 0)),
                   pl.BlockSpec((1, 8, c), lambda i: (i, 0, 0))),
        compiler_params=_compiler_params(),
    )(patches, w_mat)
    return y[:m], jnp.sum(ps[:, 0, :], axis=0), jnp.sum(pq[:, 0, :], axis=0)


def conv2_shortcut_fused(p2, sc1e, sh1e, w2_mat, xs, ws_mat):
    """Fused conv2 (with bn1+relu prologue) + 1x1 projection shortcut + stats."""
    m, k = p2.shape
    c = w2_mat.shape[1]
    cin = xs.shape[1]
    tm = _choose_tm(m, (k + cin + 6 * c) * 4)
    mp = _round_up(m, tm)
    grid = mp // tm
    if mp != m:
        p2 = jnp.pad(p2, ((0, mp - m), (0, 0)))
        xs = jnp.pad(xs, ((0, mp - m), (0, 0)))
    p2 = p2.astype(MATMUL_DTYPE)
    xs = xs.astype(MATMUL_DTYPE)
    w2_mat = w2_mat.astype(MATMUL_DTYPE)
    ws_mat = ws_mat.astype(MATMUL_DTYPE)

    y2, ys, s2, q2, ss, qs = pl.pallas_call(
        functools.partial(_conv2_shortcut_kernel, m_true=m, tm=tm),
        out_shape=(jax.ShapeDtypeStruct((mp, c), jnp.float32),
                   jax.ShapeDtypeStruct((mp, c), jnp.float32),
                   jax.ShapeDtypeStruct((grid, 8, c), jnp.float32),
                   jax.ShapeDtypeStruct((grid, 8, c), jnp.float32),
                   jax.ShapeDtypeStruct((grid, 8, c), jnp.float32),
                   jax.ShapeDtypeStruct((grid, 8, c), jnp.float32)),
        grid=(grid,),
        in_specs=[pl.BlockSpec((tm, k), lambda i: (i, 0)),
                  pl.BlockSpec((1, k), lambda i: (0, 0)),
                  pl.BlockSpec((1, k), lambda i: (0, 0)),
                  pl.BlockSpec((k, c), lambda i: (0, 0)),
                  pl.BlockSpec((tm, cin), lambda i: (i, 0)),
                  pl.BlockSpec((cin, c), lambda i: (0, 0))],
        out_specs=(pl.BlockSpec((tm, c), lambda i: (i, 0)),
                   pl.BlockSpec((tm, c), lambda i: (i, 0)),
                   pl.BlockSpec((1, 8, c), lambda i: (i, 0, 0)),
                   pl.BlockSpec((1, 8, c), lambda i: (i, 0, 0)),
                   pl.BlockSpec((1, 8, c), lambda i: (i, 0, 0)),
                   pl.BlockSpec((1, 8, c), lambda i: (i, 0, 0))),
        compiler_params=_compiler_params(),
    )(p2, sc1e, sh1e, w2_mat, xs, ws_mat)
    return (y2[:m], ys[:m],
            jnp.sum(s2[:, 0, :], axis=0), jnp.sum(q2[:, 0, :], axis=0),
            jnp.sum(ss[:, 0, :], axis=0), jnp.sum(qs[:, 0, :], axis=0))


def conv2_id_fused(p2, sc1e, sh1e, w2_mat):
    """Fused conv2 (with bn1+relu prologue) + stats; identity shortcut path."""
    m, k = p2.shape
    c = w2_mat.shape[1]
    tm = _choose_tm(m, (k + 3 * c) * 4)
    mp = _round_up(m, tm)
    grid = mp // tm
    if mp != m:
        p2 = jnp.pad(p2, ((0, mp - m), (0, 0)))
    p2 = p2.astype(MATMUL_DTYPE)
    w2_mat = w2_mat.astype(MATMUL_DTYPE)

    y2, s2, q2 = pl.pallas_call(
        functools.partial(_conv2_id_kernel, m_true=m, tm=tm),
        out_shape=(jax.ShapeDtypeStruct((mp, c), jnp.float32),
                   jax.ShapeDtypeStruct((grid, 8, c), jnp.float32),
                   jax.ShapeDtypeStruct((grid, 8, c), jnp.float32)),
        grid=(grid,),
        in_specs=[pl.BlockSpec((tm, k), lambda i: (i, 0)),
                  pl.BlockSpec((1, k), lambda i: (0, 0)),
                  pl.BlockSpec((1, k), lambda i: (0, 0)),
                  pl.BlockSpec((k, c), lambda i: (0, 0))],
        out_specs=(pl.BlockSpec((tm, c), lambda i: (i, 0)),
                   pl.BlockSpec((1, 8, c), lambda i: (i, 0, 0)),
                   pl.BlockSpec((1, 8, c), lambda i: (i, 0, 0))),
        compiler_params=_compiler_params(),
    )(p2, sc1e, sh1e, w2_mat)
    return y2[:m], jnp.sum(s2[:, 0, :], axis=0), jnp.sum(q2[:, 0, :], axis=0)


def bn_add_relu(y2, sc2, sh2, ys, scs, shs):
    m, c = y2.shape
    tm = _choose_tm(m, 3 * c * 4)
    mp = _round_up(m, tm)
    grid = mp // tm
    if mp != m:
        y2 = jnp.pad(y2, ((0, mp - m), (0, 0)))
        ys = jnp.pad(ys, ((0, mp - m), (0, 0)))
    out = pl.pallas_call(
        _bn_add_relu_kernel,
        out_shape=jax.ShapeDtypeStruct((mp, c), jnp.float32),
        grid=(grid,),
        in_specs=[pl.BlockSpec((tm, c), lambda i: (i, 0)),
                  pl.BlockSpec((1, c), lambda i: (0, 0)),
                  pl.BlockSpec((1, c), lambda i: (0, 0)),
                  pl.BlockSpec((tm, c), lambda i: (i, 0)),
                  pl.BlockSpec((1, c), lambda i: (0, 0)),
                  pl.BlockSpec((1, c), lambda i: (0, 0))],
        out_specs=pl.BlockSpec((tm, c), lambda i: (i, 0)),
        compiler_params=_compiler_params(),
    )(y2.astype(jnp.float32), sc2, sh2, ys.astype(jnp.float32), scs, shs)
    return out[:m]


# ----------------------------- JAX glue --------------------------------------

def im2col(x_nhwc, ksize, stride, pad):
    """Extract conv patches; returns ((M, k*k*C), (N, H_out, W_out)).
    K layout is [kh, kw, c_in] (position-major, channel-minor)."""
    n, h, w, c = x_nhwc.shape
    if pad:
        x_nhwc = jnp.pad(x_nhwc, ((0, 0), (pad, pad), (pad, pad), (0, 0)))
    h1 = (h + 2 * pad - ksize) // stride + 1
    w1 = (w + 2 * pad - ksize) // stride + 1
    cols = []
    for kh in range(ksize):
        for kw in range(ksize):
            cols.append(x_nhwc[:, kh:kh + stride * (h1 - 1) + 1:stride,
                               kw:kw + stride * (w1 - 1) + 1:stride, :])
    patches = jnp.stack(cols, axis=3)        # (N, H1, W1, k*k, C)
    return patches.reshape(n * h1 * w1, ksize * ksize * c), (n, h1, w1)


def _conv_w_to_mat(w_oihw, cin_p, cout_p):
    """PyTorch (Cout, Cin, kh, kw) -> (kh*kw*cin_p, cout_p), channel-padded."""
    cout, cin, kh, kw = w_oihw.shape
    w = jnp.pad(w_oihw, ((0, cout_p - cout), (0, cin_p - cin), (0, 0), (0, 0)))
    return jnp.transpose(w, (2, 3, 1, 0)).reshape(kh * kw * cin_p, cout_p)


def _pad_vec(v, cp):
    return jnp.pad(v, (0, cp - v.shape[0]))


def _bn_scale_shift(gamma_p, beta_p, s, q, m):
    mean = s / m
    var = q / m - mean * mean                       # biased, training-mode BN
    scale = gamma_p / jnp.sqrt(var + EPS)
    shift = beta_p - mean * scale
    return scale.reshape(1, -1), shift.reshape(1, -1)


@functools.partial(jax.jit, static_argnums=(2,))
def resblk_forward(x_nchw, params, stride):
    ch_in = x_nchw.shape[1]
    ch_out = params["w1"].shape[0]
    cin_p = _round_up(ch_in, LANE)
    cout_p = _round_up(ch_out, LANE)

    x = jnp.transpose(x_nchw, (0, 2, 3, 1)).astype(jnp.float32)       # NHWC
    x = jnp.pad(x, ((0, 0), (0, 0), (0, 0), (0, cin_p - ch_in)))      # lane pad

    # conv1 + fused bn1 batch stats (conv biases dropped: cancelled by BN)
    p1, (n, h1, w1) = im2col(x, 3, stride, 1)
    m = n * h1 * w1
    y1, s1, q1 = conv_with_stats(p1, _conv_w_to_mat(params["w1"], cin_p, cout_p))
    sc1, sh1 = _bn_scale_shift(_pad_vec(params["g1"], cout_p),
                               _pad_vec(params["be1"], cout_p), s1, q1, m)

    # conv2 patches built directly from raw y1; bn1+relu folded into the conv2
    # kernel.  The o1 spatial zero padding is reproduced by padding y1 with the
    # per-channel value that bn1+relu maps exactly to zero.
    y1_img = y1.reshape(n, h1, w1, cout_p)
    safe_sc1 = jnp.where(sc1 != 0.0, sc1, 1.0)
    pad_val = jnp.where(sc1 != 0.0, -sh1 / safe_sc1, 0.0)
    y1_pad = jnp.broadcast_to(pad_val.reshape(1, 1, 1, cout_p),
                              (n, h1 + 2, w1 + 2, cout_p))
    y1_pad = y1_pad.at[:, 1:h1 + 1, 1:w1 + 1, :].set(y1_img)
    p2, _ = im2col(y1_pad, 3, 1, 0)
    sc1e = jnp.tile(sc1, (1, 9))
    sh1e = jnp.tile(sh1, (1, 9))
    w2m = _conv_w_to_mat(params["w2"], cout_p, cout_p)

    if ch_in != ch_out:
        # projection shortcut (1x1 conv, stride s, no pad) fused into conv2 call
        xs = x[:, ::stride, ::stride, :].reshape(m, cin_p)
        wsm = _conv_w_to_mat(params["ws"], cin_p, cout_p)
        y2, ys, s2, q2, ss, qs = conv2_shortcut_fused(p2, sc1e, sh1e, w2m, xs, wsm)
        sc2, sh2 = _bn_scale_shift(_pad_vec(params["g2"], cout_p),
                                   _pad_vec(params["be2"], cout_p), s2, q2, m)
        scs, shs = _bn_scale_shift(_pad_vec(params["gs"], cout_p),
                                   _pad_vec(params["bes"], cout_p), ss, qs, m)
    else:
        # identity shortcut (the PyTorch module only supports this with
        # stride == 1; stride > 1 would shape-mismatch at the add)
        assert stride == 1, "identity shortcut requires stride == 1"
        y2, s2, q2 = conv2_id_fused(p2, sc1e, sh1e, w2m)
        sc2, sh2 = _bn_scale_shift(_pad_vec(params["g2"], cout_p),
                                   _pad_vec(params["be2"], cout_p), s2, q2, m)
        ys = x.reshape(m, cin_p)
        scs = jnp.ones((1, cout_p), jnp.float32)
        shs = jnp.zeros((1, cout_p), jnp.float32)

    out = bn_add_relu(y2, sc2, sh2, ys, scs, shs)
    out = out[:, :ch_out].reshape(n, h1, w1, ch_out)
    return jnp.transpose(out, (0, 3, 1, 2))                           # NCHW


# ----------------------------- pure-JAX reference ----------------------------

def resblk_reference(x, params, stride):
    def conv(x_, w, b, s, pad):
        y = jax.lax.conv_general_dilated(
            x_, w, (s, s), [(pad, pad), (pad, pad)],
            dimension_numbers=("NCHW", "OIHW", "NCHW"))
        return y + b[None, :, None, None]

    def bn(y, gamma, beta):
        mean = y.mean(axis=(0, 2, 3), keepdims=True)
        var = y.var(axis=(0, 2, 3), keepdims=True)   # biased, training-mode BN
        return ((y - mean) / jnp.sqrt(var + EPS)
                * gamma[None, :, None, None] + beta[None, :, None, None])

    ch_in = x.shape[1]
    ch_out = params["w1"].shape[0]
    out = jax.nn.relu(bn(conv(x, params["w1"], params["b1"], stride, 1),
                         params["g1"], params["be1"]))
    out = bn(conv(out, params["w2"], params["b2"], 1, 1),
             params["g2"], params["be2"])
    if ch_in != ch_out:
        sc = bn(conv(x, params["ws"], params["bs"], stride, 0),
                params["gs"], params["bes"])
    else:
        sc = x
    return jax.nn.relu(out + sc)


# ----------------------------- main ------------------------------------------

def init_params(key, ch_in, ch_out):
    ks = jax.random.split(key, 12)
    p = {
        "w1": jax.random.normal(ks[0], (ch_out, ch_in, 3, 3), jnp.float32) * 0.2,
        "b1": jax.random.normal(ks[1], (ch_out,), jnp.float32) * 0.1,
        "g1": 1.0 + 0.1 * jax.random.normal(ks[2], (ch_out,), jnp.float32),
        "be1": 0.1 * jax.random.normal(ks[3], (ch_out,), jnp.float32),
        "w2": jax.random.normal(ks[4], (ch_out, ch_out, 3, 3), jnp.float32) * 0.2,
        "b2": jax.random.normal(ks[5], (ch_out,), jnp.float32) * 0.1,
        "g2": 1.0 + 0.1 * jax.random.normal(ks[6], (ch_out,), jnp.float32),
        "be2": 0.1 * jax.random.normal(ks[7], (ch_out,), jnp.float32),
    }
    if ch_in != ch_out:
        p.update({
            "ws": jax.random.normal(ks[8], (ch_out, ch_in, 1, 1), jnp.float32) * 0.2,
            "bs": jax.random.normal(ks[9], (ch_out,), jnp.float32) * 0.1,
            "gs": 1.0 + 0.1 * jax.random.normal(ks[10], (ch_out,), jnp.float32),
            "bes": 0.1 * jax.random.normal(ks[11], (ch_out,), jnp.float32),
        })
    return p


if __name__ == "__main__":
    key = jax.random.PRNGKey(0)
    k1, k2, k3, k4 = jax.random.split(key, 4)

    # Case 1: projection shortcut (ch_in != ch_out, stride 2)
    ch_in, ch_out, stride = 4, 8, 2
    x = jax.random.normal(k1, (2, ch_in, 16, 16), jnp.float32)  # NCHW
    params = init_params(k2, ch_in, ch_out)
    out = jax.block_until_ready(resblk_forward(x, params, stride))
    ref = jax.block_until_ready(resblk_reference(x, params, stride))
    assert out.shape == ref.shape, (out.shape, ref.shape)
    assert jnp.allclose(out, ref, atol=1e-3, rtol=1e-3), (
        float(jnp.max(jnp.abs(out - ref))))

    # Case 2: identity shortcut (ch_in == ch_out, stride 1)
    ch_in2, ch_out2, stride2 = 8, 8, 1
    x2 = jax.random.normal(k3, (2, ch_in2, 16, 16), jnp.float32)
    params2 = init_params(k4, ch_in2, ch_out2)
    out2 = jax.block_until_ready(resblk_forward(x2, params2, stride2))
    ref2 = jax.block_until_ready(resblk_reference(x2, params2, stride2))
    assert out2.shape == ref2.shape, (out2.shape, ref2.shape)
    assert jnp.allclose(out2, ref2, atol=1e-3, rtol=1e-3), (
        float(jnp.max(jnp.abs(out2 - ref2))))

    print("KERNEL_OK")
</pallas_src>

<mosaic_0001>
module attributes {stable_mosaic.version = 11 : i64} {
  func.func @_conv_stats_kernel(%arg0: i32, %arg1: memref<128x1152xf32, #tpu.memory_space<vmem>>, %arg2: memref<1152x128xf32, #tpu.memory_space<vmem>>, %arg3: memref<128x128xf32, #tpu.memory_space<vmem>>, %arg4: memref<1x8x128xf32, #tpu.memory_space<vmem>>, %arg5: memref<1x8x128xf32, #tpu.memory_space<vmem>>) attributes {dimension_semantics = [#tpu.dimension_semantics<parallel>], iteration_bounds = array<i64: 1>, scalar_prefetch = 0 : i64, scratch_operands = 0 : i64, tpu.core_type = #tpu.core_type<tc>, window_params = [{transform_indices = @transform_0, window_bounds = array<i64: 128, 1152>}, {pipeline_mode = #tpu.pipeline_mode<synchronous>, transform_indices = @transform_1, window_bounds = array<i64: 1152, 128>}, {transform_indices = @transform_2, window_bounds = array<i64: 128, 128>}, {transform_indices = @transform_3, window_bounds = array<i64: 1, 8, 128>}, {transform_indices = @transform_4, window_bounds = array<i64: 1, 8, 128>}]} {
    %c0 = arith.constant 0 : index
    %c0_0 = arith.constant 0 : index
    %0 = vector.load %arg1[%c0, %c0_0] : memref<128x1152xf32, #tpu.memory_space<vmem>>, vector<128x1152xf32>
    %c0_1 = arith.constant 0 : index
    %c0_2 = arith.constant 0 : index
    %1 = vector.load %arg2[%c0_1, %c0_2] : memref<1152x128xf32, #tpu.memory_space<vmem>>, vector<1152x128xf32>
    %cst = arith.constant dense<0.000000e+00> : vector<128x128xf32>
    %2 = tpu.matmul %0, %1, %cst {dimension_numbers = #tpu.dot_dimension_numbers<[1], [0], [0], [1], [0, 0, 1, 1], [], []>} : vector<128x1152xf32>, vector<1152x128xf32>, vector<128x128xf32> -> vector<128x128xf32>
    %c0_3 = arith.constant 0 : index
    %c0_4 = arith.constant 0 : index
    %3 = vector.load %arg3[%c0_3, %c0_4] : memref<128x128xf32, #tpu.memory_space<vmem>>, vector<128x128xf32>
    tpu.vector_store %arg3[%c0_3, %c0_4], %2 {strides = array<i32>} : memref<128x128xf32, #tpu.memory_space<vmem>>, vector<128x128xf32>,
    %c128_i32 = arith.constant 128 : i32
    %4 = arith.muli %arg0, %c128_i32 : i32
    %5 = tpu.iota {dimensions = array<i32: 0>} : vector<128x1xi32>
    %6 = vector.broadcast %4 : i32 to vector<128x1xi32>
    %7 = arith.addi %6, %5 : vector<128x1xi32>
    %c128_i32_5 = arith.constant 128 : i32
    %8 = vector.broadcast %c128_i32_5 : i32 to vector<128x1xi32>
    %9 = arith.cmpi slt, %7, %8 : vector<128x1xi32>
    %cst_6 = arith.constant 0.000000e+00 : f32
    %10 = vector.shape_cast %9 : vector<128x1xi1> to vector<128x1xi1>
    %11 = vector.broadcast %10 : vector<128x1xi1> to vector<128x128xi1>
    %12 = vector.broadcast %cst_6 : f32 to vector<128x128xf32>
    %13 = arith.select %11, %2, %12 : vector<128x128xi1>, vector<128x128xf32>
    %cst_7 = arith.constant dense<0.000000e+00> : vector<128xf32>
    %14 = vector.multi_reduction <add>, %13, %cst_7 [0] : vector<128x128xf32> to vector<128xf32>
    %15 = vector.shape_cast %14 : vector<128xf32> to vector<1x128xf32>
    %16 = vector.shape_cast %15 : vector<1x128xf32> to vector<1x1x128xf32>
    %17 = vector.shape_cast %16 : vector<1x1x128xf32> to vector<1x1x128xf32>
    %18 = vector.broadcast %17 : vector<1x1x128xf32> to vector<1x8x128xf32>
    %c0_8 = arith.constant 0 : index
    %c0_9 = arith.constant 0 : index
    %c0_10 = arith.constant 0 : index
    %19 = vector.load %arg4[%c0_8, %c0_9, %c0_10] : memref<1x8x128xf32, #tpu.memory_space<vmem>>, vector<1x8x128xf32>
    tpu.vector_store %arg4[%c0_8, %c0_9, %c0_10], %18 {strides = array<i32>} : memref<1x8x128xf32, #tpu.memory_space<vmem>>, vector<1x8x128xf32>,
    %20 = arith.mulf %13, %13 : vector<128x128xf32>
    %cst_11 = arith.constant dense<0.000000e+00> : vector<128xf32>
    %21 = vector.multi_reduction <add>, %20, %cst_11 [0] : vector<128x128xf32> to vector<128xf32>
    %22 = vector.shape_cast %21 : vector<128xf32> to vector<1x128xf32>
    %23 = vector.shape_cast %22 : vector<1x128xf32> to vector<1x1x128xf32>
    %24 = vector.shape_cast %23 : vector<1x1x128xf32> to vector<1x1x128xf32>
    %25 = vector.broadcast %24 : vector<1x1x128xf32> to vector<1x8x128xf32>
    %c0_12 = arith.constant 0 : index
    %c0_13 = arith.constant 0 : index
    %c0_14 = arith.constant 0 : index
    %26 = vector.load %arg5[%c0_12, %c0_13, %c0_14] : memref<1x8x128xf32, #tpu.memory_space<vmem>>, vector<1x8x128xf32>
    tpu.vector_store %arg5[%c0_12, %c0_13, %c0_14], %25 {strides = array<i32>} : memref<1x8x128xf32, #tpu.memory_space<vmem>>, vector<1x8x128xf32>,
    return
  }
  func.func @transform_0(%arg0: i32) -> (i32, i32) {
    %c0_i32 = arith.constant 0 : i32
    %c0_i32_0 = arith.constant 0 : i32
    return %arg0, %c0_i32 : i32, i32
  }
  func.func @transform_1(%arg0: i32) -> (i32, i32) {
    %c0_i32 = arith.constant 0 : i32
    %c0_i32_0 = arith.constant 0 : i32
    %c0_i32_1 = arith.constant 0 : i32
    return %c0_i32, %c0_i32_0 : i32, i32
  }
  func.func @transform_2(%arg0: i32) -> (i32, i32) {
    %c0_i32 = arith.constant 0 : i32
    %c0_i32_0 = arith.constant 0 : i32
    return %arg0, %c0_i32 : i32, i32
  }
  func.func @transform_3(%arg0: i32) -> (i32, i32, i32) {
    %c0_i32 = arith.constant 0 : i32
    %c0_i32_0 = arith.constant 0 : i32
    %c0_i32_1 = arith.constant 0 : i32
    return %arg0, %c0_i32, %c0_i32_0 : i32, i32, i32
  }
  func.func @transform_4(%arg0: i32) -> (i32, i32, i32) {
    %c0_i32 = arith.constant 0 : i32
    %c0_i32_0 = arith.constant 0 : i32
    %c0_i32_1 = arith.constant 0 : i32
    return %arg0, %c0_i32, %c0_i32_0 : i32, i32, i32
  }
}

module attributes {stable_mosaic.version = 11 : i64} {
  func.func @_conv2_shortcut_kernel(%arg0: i32, %arg1: memref<128x1152xf32, #tpu.memory_space<vmem>>, %arg2: memref<1x1152xf32, #tpu.memory_space<vmem>>, %arg3: memref<1x1152xf32, #tpu.memory_space<vmem>>, %arg4: memref<1152x128xf32, #tpu.memory_space<vmem>>, %arg5: memref<128x128xf32, #tpu.memory_space<vmem>>, %arg6: memref<128x128xf32, #tpu.memory_space<vmem>>, %arg7: memref<128x128xf32, #tpu.memory_space<vmem>>, %arg8: memref<128x128xf32, #tpu.memory_space<vmem>>, %arg9: memref<1x8x128xf32, #tpu.memory_space<vmem>>, %arg10: memref<1x8x128xf32, #tpu.memory_space<vmem>>, %arg11: memref<1x8x128xf32, #tpu.memory_space<vmem>>, %arg12: memref<1x8x128xf32, #tpu.memory_space<vmem>>) attributes {dimension_semantics = [#tpu.dimension_semantics<parallel>], iteration_bounds = array<i64: 1>, scalar_prefetch = 0 : i64, scratch_operands = 0 : i64, tpu.core_type = #tpu.core_type<tc>, window_params = [{transform_indices = @transform_0, window_bounds = array<i64: 128, 1152>}, {pipeline_mode = #tpu.pipeline_mode<synchronous>, transform_indices = @transform_1, window_bounds = array<i64: 1, 1152>}, {pipeline_mode = #tpu.pipeline_mode<synchronous>, transform_indices = @transform_2, window_bounds = array<i64: 1, 1152>}, {pipeline_mode = #tpu.pipeline_mode<synchronous>, transform_indices = @transform_3, window_bounds = array<i64: 1152, 128>}, {transform_indices = @transform_4, window_bounds = array<i64: 128, 128>}, {pipeline_mode = #tpu.pipeline_mode<synchronous>, transform_indices = @transform_5, window_bounds = array<i64: 128, 128>}, {transform_indices = @transform_6, window_bounds = array<i64: 128, 128>}, {transform_indices = @transform_7, window_bounds = array<i64: 128, 128>}, {transform_indices = @transform_8, window_bounds = array<i64: 1, 8, 128>}, {transform_indices = @transform_9, window_bounds = array<i64: 1, 8, 128>}, {transform_indices = @transform_10, window_bounds = array<i64: 1, 8, 128>}, {transform_indices = @transform_11, window_bounds = array<i64: 1, 8, 128>}]} {
    %c0 = arith.constant 0 : index
    %c0_0 = arith.constant 0 : index
    %0 = vector.load %arg1[%c0, %c0_0] : memref<128x1152xf32, #tpu.memory_space<vmem>>, vector<128x1152xf32>
    %c0_1 = arith.constant 0 : index
    %c0_2 = arith.constant 0 : index
    %1 = vector.load %arg2[%c0_1, %c0_2] : memref<1x1152xf32, #tpu.memory_space<vmem>>, vector<1x1152xf32>
    %2 = vector.broadcast %1 : vector<1x1152xf32> to vector<128x1152xf32>
    %3 = arith.mulf %0, %2 : vector<128x1152xf32>
    %c0_3 = arith.constant 0 : index
    %c0_4 = arith.constant 0 : index
    %4 = vector.load %arg3[%c0_3, %c0_4] : memref<1x1152xf32, #tpu.memory_space<vmem>>, vector<1x1152xf32>
    %5 = vector.broadcast %4 : vector<1x1152xf32> to vector<128x1152xf32>
    %6 = arith.addf %3, %5 : vector<128x1152xf32>
    %cst = arith.constant 0.000000e+00 : f32
    %7 = vector.broadcast %cst : f32 to vector<128x1152xf32>
    %8 = arith.maximumf %6, %7 : vector<128x1152xf32>
    %c0_5 = arith.constant 0 : index
    %c0_6 = arith.constant 0 : index
    %9 = vector.load %arg4[%c0_5, %c0_6] : memref<1152x128xf32, #tpu.memory_space<vmem>>, vector<1152x128xf32>
    %cst_7 = arith.constant dense<0.000000e+00> : vector<128x128xf32>
    %10 = tpu.matmul %8, %9, %cst_7 {dimension_numbers = #tpu.dot_dimension_numbers<[1], [0], [0], [1], [0, 0, 1, 1], [], []>} : vector<128x1152xf32>, vector<1152x128xf32>, vector<128x128xf32> -> vector<128x128xf32>
    %c0_8 = arith.constant 0 : index
    %c0_9 = arith.constant 0 : index
    %11 = vector.load %arg5[%c0_8, %c0_9] : memref<128x128xf32, #tpu.memory_space<vmem>>, vector<128x128xf32>
    %c0_10 = arith.constant 0 : index
    %c0_11 = arith.constant 0 : index
    %12 = vector.load %arg6[%c0_10, %c0_11] : memref<128x128xf32, #tpu.memory_space<vmem>>, vector<128x128xf32>
    %cst_12 = arith.constant dense<0.000000e+00> : vector<128x128xf32>
    %13 = tpu.matmul %11, %12, %cst_12 {dimension_numbers = #tpu.dot_dimension_numbers<[1], [0], [0], [1], [0, 0, 1, 1], [], []>} : vector<128x128xf32>, vector<128x128xf32>, vector<128x128xf32> -> vector<128x128xf32>
    %c0_13 = arith.constant 0 : index
    %c0_14 = arith.constant 0 : index
    %14 = vector.load %arg7[%c0_13, %c0_14] : memref<128x128xf32, #tpu.memory_space<vmem>>, vector<128x128xf32>
    tpu.vector_store %arg7[%c0_13, %c0_14], %10 {strides = array<i32>} : memref<128x128xf32, #tpu.memory_space<vmem>>, vector<128x128xf32>,
    %c0_15 = arith.constant 0 : index
    %c0_16 = arith.constant 0 : index
    %15 = vector.load %arg8[%c0_15, %c0_16] : memref<128x128xf32, #tpu.memory_space<vmem>>, vector<128x128xf32>
    tpu.vector_store %arg8[%c0_15, %c0_16], %13 {strides = array<i32>} : memref<128x128xf32, #tpu.memory_space<vmem>>, vector<128x128xf32>,
    %c128_i32 = arith.constant 128 : i32
    %16 = arith.muli %arg0, %c128_i32 : i32
    %17 = tpu.iota {dimensions = array<i32: 0>} : vector<128x1xi32>
    %18 = vector.broadcast %16 : i32 to vector<128x1xi32>
    %19 = arith.addi %18, %17 : vector<128x1xi32>
    %c128_i32_17 = arith.constant 128 : i32
    %20 = vector.broadcast %c128_i32_17 : i32 to vector<128x1xi32>
    %21 = arith.cmpi slt, %19, %20 : vector<128x1xi32>
    %cst_18 = arith.constant 0.000000e+00 : f32
    %22 = vector.shape_cast %21 : vector<128x1xi1> to vector<128x1xi1>
    %23 = vector.broadcast %22 : vector<128x1xi1> to vector<128x128xi1>
    %24 = vector.broadcast %cst_18 : f32 to vector<128x128xf32>
    %25 = arith.select %23, %10, %24 : vector<128x128xi1>, vector<128x128xf32>
    %cst_19 = arith.constant 0.000000e+00 : f32
    %26 = vector.shape_cast %21 : vector<128x1xi1> to vector<128x1xi1>
    %27 = vector.broadcast %26 : vector<128x1xi1> to vector<128x128xi1>
    %28 = vector.broadcast %cst_19 : f32 to vector<128x128xf32>
    %29 = arith.select %27, %13, %28 : vector<128x128xi1>, vector<128x128xf32>
    %cst_20 = arith.constant dense<0.000000e+00> : vector<128xf32>
    %30 = vector.multi_reduction <add>, %25, %cst_20 [0] : vector<128x128xf32> to vector<128xf32>
    %31 = vector.shape_cast %30 : vector<128xf32> to vector<1x128xf32>
    %32 = vector.shape_cast %31 : vector<1x128xf32> to vector<1x1x128xf32>
    %33 = vector.shape_cast %32 : vector<1x1x128xf32> to vector<1x1x128xf32>
    %34 = vector.broadcast %33 : vector<1x1x128xf32> to vector<1x8x128xf32>
    %c0_21 = arith.constant 0 : index
    %c0_22 = arith.constant 0 : index
    %c0_23 = arith.constant 0 : index
    %35 = vector.load %arg9[%c0_21, %c0_22, %c0_23] : memref<1x8x128xf32, #tpu.memory_space<vmem>>, vector<1x8x128xf32>
    tpu.vector_store %arg9[%c0_21, %c0_22, %c0_23], %34 {strides = array<i32>} : memref<1x8x128xf32, #tpu.memory_space<vmem>>, vector<1x8x128xf32>,
    %36 = arith.mulf %25, %25 : vector<128x128xf32>
    %cst_24 = arith.constant dense<0.000000e+00> : vector<128xf32>
    %37 = vector.multi_reduction <add>, %36, %cst_24 [0] : vector<128x128xf32> to vector<128xf32>
    %38 = vector.shape_cast %37 : vector<128xf32> to vector<1x128xf32>
    %39 = vector.shape_cast %38 : vector<1x128xf32> to vector<1x1x128xf32>
    %40 = vector.shape_cast %39 : vector<1x1x128xf32> to vector<1x1x128xf32>
    %41 = vector.broadcast %40 : vector<1x1x128xf32> to vector<1x8x128xf32>
    %c0_25 = arith.constant 0 : index
    %c0_26 = arith.constant 0 : index
    %c0_27 = arith.constant 0 : index
    %42 = vector.load %arg10[%c0_25, %c0_26, %c0_27] : memref<1x8x128xf32, #tpu.memory_space<vmem>>, vector<1x8x128xf32>
    tpu.vector_store %arg10[%c0_25, %c0_26, %c0_27], %41 {strides = array<i32>} : memref<1x8x128xf32, #tpu.memory_space<vmem>>, vector<1x8x128xf32>,
    %cst_28 = arith.constant dense<0.000000e+00> : vector<128xf32>
    %43 = vector.multi_reduction <add>, %29, %cst_28 [0] : vector<128x128xf32> to vector<128xf32>
    %44 = vector.shape_cast %43 : vector<128xf32> to vector<1x128xf32>
    %45 = vector.shape_cast %44 : vector<1x128xf32> to vector<1x1x128xf32>
    %46 = vector.shape_cast %45 : vector<1x1x128xf32> to vector<1x1x128xf32>
    %47 = vector.broadcast %46 : vector<1x1x128xf32> to vector<1x8x128xf32>
    %c0_29 = arith.constant 0 : index
    %c0_30 = arith.constant 0 : index
    %c0_31 = arith.constant 0 : index
    %48 = vector.load %arg11[%c0_29, %c0_30, %c0_31] : memref<1x8x128xf32, #tpu.memory_space<vmem>>, vector<1x8x128xf32>
    tpu.vector_store %arg11[%c0_29, %c0_30, %c0_31], %47 {strides = array<i32>} : memref<1x8x128xf32, #tpu.memory_space<vmem>>, vector<1x8x128xf32>,
    %49 = arith.mulf %29, %29 : vector<128x128xf32>
    %cst_32 = arith.constant dense<0.000000e+00> : vector<128xf32>
    %50 = vector.multi_reduction <add>, %49, %cst_32 [0] : vector<128x128xf32> to vector<128xf32>
    %51 = vector.shape_cast %50 : vector<128xf32> to vector<1x128xf32>
    %52 = vector.shape_cast %51 : vector<1x128xf32> to vector<1x1x128xf32>
    %53 = vector.shape_cast %52 : vector<1x1x128xf32> to vector<1x1x128xf32>
    %54 = vector.broadcast %53 : vector<1x1x128xf32> to vector<1x8x128xf32>
    %c0_33 = arith.constant 0 : index
    %c0_34 = arith.constant 0 : index
    %c0_35 = arith.constant 0 : index
    %55 = vector.load %arg12[%c0_33, %c0_34, %c0_35] : memref<1x8x128xf32, #tpu.memory_space<vmem>>, vector<1x8x128xf32>
    tpu.vector_store %arg12[%c0_33, %c0_34, %c0_35], %54 {strides = array<i32>} : memref<1x8x128xf32, #tpu.memory_space<vmem>>, vector<1x8x128xf32>,
    return
  }
  func.func @transform_0(%arg0: i32) -> (i32, i32) {
    %c0_i32 = arith.constant 0 : i32
    %c0_i32_0 = arith.constant 0 : i32
    return %arg0, %c0_i32 : i32, i32
  }
  func.func @transform_1(%arg0: i32) -> (i32, i32) {
    %c0_i32 = arith.constant 0 : i32
    %c0_i32_0 = arith.constant 0 : i32
    %c0_i32_1 = arith.constant 0 : i32
    return %c0_i32, %c0_i32_0 : i32, i32
  }
  func.func @transform_2(%arg0: i32) -> (i32, i32) {
    %c0_i32 = arith.constant 0 : i32
    %c0_i32_0 = arith.constant 0 : i32
    %c0_i32_1 = arith.constant 0 : i32
    return %c0_i32, %c0_i32_0 : i32, i32
  }
  func.func @transform_3(%arg0: i32) -> (i32, i32) {
    %c0_i32 = arith.constant 0 : i32
    %c0_i32_0 = arith.constant 0 : i32
    %c0_i32_1 = arith.constant 0 : i32
    return %c0_i32, %c0_i32_0 : i32, i32
  }
  func.func @transform_4(%arg0: i32) -> (i32, i32) {
    %c0_i32 = arith.constant 0 : i32
    %c0_i32_0 = arith.constant 0 : i32
    return %arg0, %c0_i32 : i32, i32
  }
  func.func @transform_5(%arg0: i32) -> (i32, i32) {
    %c0_i32 = arith.constant 0 : i32
    %c0_i32_0 = arith.constant 0 : i32
    %c0_i32_1 = arith.constant 0 : i32
    return %c0_i32, %c0_i32_0 : i32, i32
  }
  func.func @transform_6(%arg0: i32) -> (i32, i32) {
    %c0_i32 = arith.constant 0 : i32
    %c0_i32_0 = arith.constant 0 : i32
    return %arg0, %c0_i32 : i32, i32
  }
  func.func @transform_7(%arg0: i32) -> (i32, i32) {
    %c0_i32 = arith.constant 0 : i32
    %c0_i32_0 = arith.constant 0 : i32
    return %arg0, %c0_i32 : i32, i32
  }
  func.func @transform_8(%arg0: i32) -> (i32, i32, i32) {
    %c0_i32 = arith.constant 0 : i32
    %c0_i32_0 = arith.constant 0 : i32
    %c0_i32_1 = arith.constant 0 : i32
    return %arg0, %c0_i32, %c0_i32_0 : i32, i32, i32
  }
  func.func @transform_9(%arg0: i32) -> (i32, i32, i32) {
    %c0_i32 = arith.constant 0 : i32
    %c0_i32_0 = arith.constant 0 : i32
    %c0_i32_1 = arith.constant 0 : i32
    return %arg0, %c0_i32, %c0_i32_0 : i32, i32, i32
  }
  func.func @transform_10(%arg0: i32) -> (i32, i32, i32) {
    %c0_i32 = arith.constant 0 : i32
    %c0_i32_0 = arith.constant 0 : i32
    %c0_i32_1 = arith.constant 0 : i32
    return %arg0, %c0_i32, %c0_i32_0 : i32, i32, i32
  }
  func.func @transform_11(%arg0: i32) -> (i32, i32, i32) {
    %c0_i32 = arith.constant 0 : i32
    %c0_i32_0 = arith.constant 0 : i32
    %c0_i32_1 = arith.constant 0 : i32
    return %arg0, %c0_i32, %c0_i32_0 : i32, i32, i32
  }
}

module attributes {stable_mosaic.version = 11 : i64} {
  func.func @_bn_add_relu_kernel(%arg0: i32, %arg1: memref<128x128xf32, #tpu.memory_space<vmem>>, %arg2: memref<1x128xf32, #tpu.memory_space<vmem>>, %arg3: memref<1x128xf32, #tpu.memory_space<vmem>>, %arg4: memref<128x128xf32, #tpu.memory_space<vmem>>, %arg5: memref<1x128xf32, #tpu.memory_space<vmem>>, %arg6: memref<1x128xf32, #tpu.memory_space<vmem>>, %arg7: memref<128x128xf32, #tpu.memory_space<vmem>>) attributes {dimension_semantics = [#tpu.dimension_semantics<parallel>], iteration_bounds = array<i64: 1>, scalar_prefetch = 0 : i64, scratch_operands = 0 : i64, tpu.core_type = #tpu.core_type<tc>, window_params = [{transform_indices = @transform_0, window_bounds = array<i64: 128, 128>}, {pipeline_mode = #tpu.pipeline_mode<synchronous>, transform_indices = @transform_1, window_bounds = array<i64: 1, 128>}, {pipeline_mode = #tpu.pipeline_mode<synchronous>, transform_indices = @transform_2, window_bounds = array<i64: 1, 128>}, {transform_indices = @transform_3, window_bounds = array<i64: 128, 128>}, {pipeline_mode = #tpu.pipeline_mode<synchronous>, transform_indices = @transform_4, window_bounds = array<i64: 1, 128>}, {pipeline_mode = #tpu.pipeline_mode<synchronous>, transform_indices = @transform_5, window_bounds = array<i64: 1, 128>}, {transform_indices = @transform_6, window_bounds = array<i64: 128, 128>}]} {
    %c0 = arith.constant 0 : index
    %c0_0 = arith.constant 0 : index
    %0 = vector.load %arg1[%c0, %c0_0] : memref<128x128xf32, #tpu.memory_space<vmem>>, vector<128x128xf32>
    %c0_1 = arith.constant 0 : index
    %c0_2 = arith.constant 0 : index
    %1 = vector.load %arg2[%c0_1, %c0_2] : memref<1x128xf32, #tpu.memory_space<vmem>>, vector<1x128xf32>
    %2 = vector.broadcast %1 : vector<1x128xf32> to vector<128x128xf32>
    %3 = arith.mulf %0, %2 : vector<128x128xf32>
    %c0_3 = arith.constant 0 : index
    %c0_4 = arith.constant 0 : index
    %4 = vector.load %arg3[%c0_3, %c0_4] : memref<1x128xf32, #tpu.memory_space<vmem>>, vector<1x128xf32>
    %5 = vector.broadcast %4 : vector<1x128xf32> to vector<128x128xf32>
    %6 = arith.addf %3, %5 : vector<128x128xf32>
    %c0_5 = arith.constant 0 : index
    %c0_6 = arith.constant 0 : index
    %7 = vector.load %arg4[%c0_5, %c0_6] : memref<128x128xf32, #tpu.memory_space<vmem>>, vector<128x128xf32>
    %c0_7 = arith.constant 0 : index
    %c0_8 = arith.constant 0 : index
    %8 = vector.load %arg5[%c0_7, %c0_8] : memref<1x128xf32, #tpu.memory_space<vmem>>, vector<1x128xf32>
    %9 = vector.broadcast %8 : vector<1x128xf32> to vector<128x128xf32>
    %10 = arith.mulf %7, %9 : vector<128x128xf32>
    %c0_9 = arith.constant 0 : index
    %c0_10 = arith.constant 0 : index
    %11 = vector.load %arg6[%c0_9, %c0_10] : memref<1x128xf32, #tpu.memory_space<vmem>>, vector<1x128xf32>
    %12 = vector.broadcast %11 : vector<1x128xf32> to vector<128x128xf32>
    %13 = arith.addf %10, %12 : vector<128x128xf32>
    %14 = arith.addf %6, %13 : vector<128x128xf32>
    %cst = arith.constant 0.000000e+00 : f32
    %15 = vector.broadcast %cst : f32 to vector<128x128xf32>
    %16 = arith.maximumf %14, %15 : vector<128x128xf32>
    %c0_11 = arith.constant 0 : index
    %c0_12 = arith.constant 0 : index
    %17 = vector.load %arg7[%c0_11, %c0_12] : memref<128x128xf32, #tpu.memory_space<vmem>>, vector<128x128xf32>
    tpu.vector_store %arg7[%c0_11, %c0_12], %16 {strides = array<i32>} : memref<128x128xf32, #tpu.memory_space<vmem>>, vector<128x128xf32>,
    return
  }
  func.func @transform_0(%arg0: i32) -> (i32, i32) {
    %c0_i32 = arith.constant 0 : i32
    %c0_i32_0 = arith.constant 0 : i32
    return %arg0, %c0_i32 : i32, i32
  }
  func.func @transform_1(%arg0: i32) -> (i32, i32) {
    %c0_i32 = arith.constant 0 : i32
    %c0_i32_0 = arith.constant 0 : i32
    %c0_i32_1 = arith.constant 0 : i32
    return %c0_i32, %c0_i32_0 : i32, i32
  }
  func.func @transform_2(%arg0: i32) -> (i32, i32) {
    %c0_i32 = arith.constant 0 : i32
    %c0_i32_0 = arith.constant 0 : i32
    %c0_i32_1 = arith.constant 0 : i32
    return %c0_i32, %c0_i32_0 : i32, i32
  }
  func.func @transform_3(%arg0: i32) -> (i32, i32) {
    %c0_i32 = arith.constant 0 : i32
    %c0_i32_0 = arith.constant 0 : i32
    return %arg0, %c0_i32 : i32, i32
  }
  func.func @transform_4(%arg0: i32) -> (i32, i32) {
    %c0_i32 = arith.constant 0 : i32
    %c0_i32_0 = arith.constant 0 : i32
    %c0_i32_1 = arith.constant 0 : i32
    return %c0_i32, %c0_i32_0 : i32, i32
  }
  func.func @transform_5(%arg0: i32) -> (i32, i32) {
    %c0_i32 = arith.constant 0 : i32
    %c0_i32_0 = arith.constant 0 : i32
    %c0_i32_1 = arith.constant 0 : i32
    return %c0_i32, %c0_i32_0 : i32, i32
  }
  func.func @transform_6(%arg0: i32) -> (i32, i32) {
    %c0_i32 = arith.constant 0 : i32
    %c0_i32_0 = arith.constant 0 : i32
    return %arg0, %c0_i32 : i32, i32
  }
}

</mosaic_0001>

<llo_original>
// kernel: resblk_forward.5
$region0: #{resblk_forward.5}
  #allocation0 [shape = 'u32[]', space=smem, size = 0x4, offset = 0x4, fixed_abs, tag = 'smem constant byte address 0x4 - core index']
  #allocation1 [shape = 'u32[144,128]{1,0:T(1,128)}', space=vmem, size = 0x12000, scoped, tag = 'internal scratch']
  %s0 = inlined_call_operand.vmem [shape: f32[128,128], index: 0, kind: input, shape index: {}]
  %s1 = inlined_call_operand.vmem [shape: f32[1,128], index: 1, kind: input, shape index: {}]
  %s2 = inlined_call_operand.vmem [shape: f32[1,128], index: 2, kind: input, shape index: {}]
  %s3 = inlined_call_operand.vmem [shape: f32[128,128], index: 3, kind: input, shape index: {}]
  %s4 = inlined_call_operand.vmem [shape: f32[1,128], index: 4, kind: input, shape index: {}]
  %s5 = inlined_call_operand.vmem [shape: f32[1,128], index: 5, kind: input, shape index: {}]
  %s6 = inlined_call_operand.vmem [shape: f32[128,128], index: 6, kind: output, shape index: {}]
  %s7 = sld [smem:[#allocation0]]
  $region34: #{resblk_forward.5} parent=0
    _
  %s9 = ssub.s32 1, %s7
  %s10 = scalar_select 0, %s9, %s7
  // Predicated region
  $region2: #{resblk_forward.5} parent=0 // pred_check
    _
  $region3: #{resblk_forward.5} parent=0 // pred_check_branch
    %12 = sbr.rel (0) target = $region5
  $region4: #{resblk_forward.5} parent=0 // pred_region
    _
  $region5: #{resblk_forward.5} parent=0 // pred_fallthru
    _
  // Predicated region
  $region6: #{resblk_forward.5} parent=0 // pred_check
    _
  $region7: #{resblk_forward.5} parent=0 // pred_check_branch
    %14 = sbr.rel (0) target = $region9
  $region8: #{resblk_forward.5} parent=0 // pred_region
    _
  $region9: #{resblk_forward.5} parent=0 // pred_fallthru
    _
  // Predicated region
  $region10: #{resblk_forward.5} parent=0 // pred_check
    _
  $region11: #{resblk_forward.5} parent=0 // pred_check_branch
    %16 = sbr.rel (0) target = $region13
  $region12: #{resblk_forward.5} parent=0 // pred_region
    _
  $region13: #{resblk_forward.5} parent=0 // pred_fallthru
    _
  // Predicated region
  $region14: #{resblk_forward.5} parent=0 // pred_check
    _
  $region15: #{resblk_forward.5} parent=0 // pred_check_branch
    %18 = sbr.rel (0) target = $region17
  $region16: #{resblk_forward.5} parent=0 // pred_region
    _
  $region17: #{resblk_forward.5} parent=0 // pred_fallthru
    _
  // Predicated region
  $region18: #{resblk_forward.5} parent=0 // pred_check
    _
  $region19: #{resblk_forward.5} parent=0 // pred_check_branch
    %20 = sbr.rel (0) target = $region21
  $region20: #{resblk_forward.5} parent=0 // pred_region
    _
  $region21: #{resblk_forward.5} parent=0 // pred_fallthru
    _
  // Predicated region
  $region22: #{resblk_forward.5} parent=0 // pred_check
    _
  $region23: #{resblk_forward.5} parent=0 // pred_check_branch
    %22 = sbr.rel (0) target = $region25
  $region24: #{resblk_forward.5} parent=0 // pred_region
    _
  $region25: #{resblk_forward.5} parent=0 // pred_fallthru
    _
  %v23 = vld [vmem:[%s0] sm:$0xff]
  %v24 = vld [vmem:[%s0 + $0x8] sm:$0xff]
  %v25 = vld [vmem:[%s0 + $0x10] sm:$0xff]
  %v26 = vld [vmem:[%s0 + $0x18] sm:$0xff]
  %v27 = vld [vmem:[%s0 + $0x20] sm:$0xff]
  %v28 = vld [vmem:[%s0 + $0x28] sm:$0xff]
  %v29 = vld [vmem:[%s0 + $0x30] sm:$0xff]
  %v30 = vld [vmem:[%s0 + $0x38] sm:$0xff]
  %v31 = vld [vmem:[%s0 + $0x40] sm:$0xff]
  %v32 = vld [vmem:[%s0 + $0x48] sm:$0xff]
  %v33 = vld [vmem:[%s0 + $0x50] sm:$0xff]
  %v34 = vld [vmem:[%s0 + $0x58] sm:$0xff]
  %v35 = vld [vmem:[%s0 + $0x60] sm:$0xff]
  %v36 = vld [vmem:[%s0 + $0x68] sm:$0xff]
  %v37 = vld [vmem:[%s0 + $0x70] sm:$0xff]
  %v38 = vld [vmem:[%s0 + $0x78] sm:$0xff]
  %v39 = vld [vmem:[%s1] sm:$0x1]
  %v41 = vlaneseq
  %v42 = vshrl.u32 %v41, 7
  %v43 = vsub.s32 0, %v42
  %v44 = vrot.slane %v39, %v43
  %v46 = vmul.f32 %v23, %v44
  %v47 = vmul.f32 %v24, %v44
  %v48 = vmul.f32 %v25, %v44
  %v49 = vmul.f32 %v26, %v44
  %v50 = vmul.f32 %v27, %v44
  %v51 = vmul.f32 %v28, %v44
  %v52 = vmul.f32 %v29, %v44
  %v53 = vmul.f32 %v30, %v44
  %v54 = vmul.f32 %v31, %v44
  %v55 = vmul.f32 %v32, %v44
  %v56 = vmul.f32 %v33, %v44
  %v57 = vmul.f32 %v34, %v44
  %v58 = vmul.f32 %v35, %v44
  %v59 = vmul.f32 %v36, %v44
  %v60 = vmul.f32 %v37, %v44
  %v61 = vmul.f32 %v38, %v44
  %v62 = vld [vmem:[%s2] sm:$0x1]
  %v64 = vlaneseq
  %v65 = vshrl.u32 %v64, 7
  %v66 = vsub.s32 0, %v65
  %v67 = vrot.slane %v62, %v66
  %v69 = vadd.f32 %v46, %v67
  %v70 = vadd.f32 %v47, %v67
  %v71 = vadd.f32 %v48, %v67
  %v72 = vadd.f32 %v49, %v67
  %v73 = vadd.f32 %v50, %v67
  %v74 = vadd.f32 %v51, %v67
  %v75 = vadd.f32 %v52, %v67
  %v76 = vadd.f32 %v53, %v67
  %v77 = vadd.f32 %v54, %v67
  %v78 = vadd.f32 %v55, %v67
  %v79 = vadd.f32 %v56, %v67
  %v80 = vadd.f32 %v57, %v67
  %v81 = vadd.f32 %v58, %v67
  %v82 = vadd.f32 %v59, %v67
  %v83 = vadd.f32 %v60, %v67
  %v84 = vadd.f32 %v61, %v67
  %v85 = vld [vmem:[%s3] sm:$0xff]
  %v86 = vld [vmem:[%s3 + $0x8] sm:$0xff]
  %v87 = vld [vmem:[%s3 + $0x10] sm:$0xff]
  %v88 = vld [vmem:[%s3 + $0x18] sm:$0xff]
  %v89 = vld [vmem:[%s3 + $0x20] sm:$0xff]
  %v90 = vld [vmem:[%s3 + $0x28] sm:$0xff]
  %v91 = vld [vmem:[%s3 + $0x30] sm:$0xff]
  %v92 = vld [vmem:[%s3 + $0x38] sm:$0xff]
  %v93 = vld [vmem:[%s3 + $0x40] sm:$0xff]
  %v94 = vld [vmem:[%s3 + $0x48] sm:$0xff]
  %v95 = vld [vmem:[%s3 + $0x50] sm:$0xff]
  %v96 = vld [vmem:[%s3 + $0x58] sm:$0xff]
  %v97 = vld [vmem:[%s3 + $0x60] sm:$0xff]
  %v98 = vld [vmem:[%s3 + $0x68] sm:$0xff]
  %v99 = vld [vmem:[%s3 + $0x70] sm:$0xff]
  %v100 = vld [vmem:[%s3 + $0x78] sm:$0xff]
  %v101 = vld [vmem:[%s4] sm:$0x1]
  %v103 = vlaneseq
  %v104 = vshrl.u32 %v103, 7
  %v105 = vsub.s32 0, %v104
  %v106 = vrot.slane %v101, %v105
  %v108 = vmul.f32 %v85, %v106
  %v109 = vmul.f32 %v86, %v106
  %v110 = vmul.f32 %v87, %v106
  %v111 = vmul.f32 %v88, %v106
  %v112 = vmul.f32 %v89, %v106
  %v113 = vmul.f32 %v90, %v106
  %v114 = vmul.f32 %v91, %v106
  %v115 = vmul.f32 %v92, %v106
  %v116 = vmul.f32 %v93, %v106
  %v117 = vmul.f32 %v94, %v106
  %v118 = vmul.f32 %v95, %v106
  %v119 = vmul.f32 %v96, %v106
  %v120 = vmul.f32 %v97, %v106
  %v121 = vmul.f32 %v98, %v106
  %v122 = vmul.f32 %v99, %v106
  %v123 = vmul.f32 %v100, %v106
  %v124 = vld [vmem:[%s5] sm:$0x1]
  %v126 = vlaneseq
  %v127 = vshrl.u32 %v126, 7
  %v128 = vsub.s32 0, %v127
  %v129 = vrot.slane %v124, %v128
  %v131 = vadd.f32 %v108, %v129
  %v132 = vadd.f32 %v109, %v129
  %v133 = vadd.f32 %v110, %v129
  %v134 = vadd.f32 %v111, %v129
  %v135 = vadd.f32 %v112, %v129
  %v136 = vadd.f32 %v113, %v129
  %v137 = vadd.f32 %v114, %v129
  %v138 = vadd.f32 %v115, %v129
  %v139 = vadd.f32 %v116, %v129
  %v140 = vadd.f32 %v117, %v129
  %v141 = vadd.f32 %v118, %v129
  %v142 = vadd.f32 %v119, %v129
  %v143 = vadd.f32 %v120, %v129
  %v144 = vadd.f32 %v121, %v129
  %v145 = vadd.f32 %v122, %v129
  %v146 = vadd.f32 %v123, %v129
  %v147 = vadd.f32 %v69, %v131
  %v148 = vadd.f32 %v70, %v132
  %v149 = vadd.f32 %v71, %v133
  %v150 = vadd.f32 %v72, %v134
  %v151 = vadd.f32 %v73, %v135
  %v152 = vadd.f32 %v74, %v136
  %v153 = vadd.f32 %v75, %v137
  %v154 = vadd.f32 %v76, %v138
  %v155 = vadd.f32 %v77, %v139
  %v156 = vadd.f32 %v78, %v140
  %v157 = vadd.f32 %v79, %v141
  %v158 = vadd.f32 %v80, %v142
  %v159 = vadd.f32 %v81, %v143
  %v160 = vadd.f32 %v82, %v144
  %v161 = vadd.f32 %v83, %v145
  %v162 = vadd.f32 %v84, %v146
  %v163 = vmax.f32 %v147, 0.0
  %v164 = vmax.f32 %v148, 0.0
  %v165 = vmax.f32 %v149, 0.0
  %v166 = vmax.f32 %v150, 0.0
  %v167 = vmax.f32 %v151, 0.0
  %v168 = vmax.f32 %v152, 0.0
  %v169 = vmax.f32 %v153, 0.0
  %v170 = vmax.f32 %v154, 0.0
  %v171 = vmax.f32 %v155, 0.0
  %v172 = vmax.f32 %v156, 0.0
  %v173 = vmax.f32 %v157, 0.0
  %v174 = vmax.f32 %v158, 0.0
  %v175 = vmax.f32 %v159, 0.0
  %v176 = vmax.f32 %v160, 0.0
  %v177 = vmax.f32 %v161, 0.0
  %v178 = vmax.f32 %v162, 0.0
  %179 = vst [vmem:[%s6] sm:$0xff] %v163
  %180 = vst [vmem:[%s6 + $0x8] sm:$0xff] %v164
  %181 = vst [vmem:[%s6 + $0x10] sm:$0xff] %v165
  %182 = vst [vmem:[%s6 + $0x18] sm:$0xff] %v166
  %183 = vst [vmem:[%s6 + $0x20] sm:$0xff] %v167
  %184 = vst [vmem:[%s6 + $0x28] sm:$0xff] %v168
  %185 = vst [vmem:[%s6 + $0x30] sm:$0xff] %v169
  %186 = vst [vmem:[%s6 + $0x38] sm:$0xff] %v170
  %187 = vst [vmem:[%s6 + $0x40] sm:$0xff] %v171
  %188 = vst [vmem:[%s6 + $0x48] sm:$0xff] %v172
  %189 = vst [vmem:[%s6 + $0x50] sm:$0xff] %v173
  %190 = vst [vmem:[%s6 + $0x58] sm:$0xff] %v174
  %191 = vst [vmem:[%s6 + $0x60] sm:$0xff] %v175
  %192 = vst [vmem:[%s6 + $0x68] sm:$0xff] %v176
  %193 = vst [vmem:[%s6 + $0x70] sm:$0xff] %v177
  %194 = vst [vmem:[%s6 + $0x78] sm:$0xff] %v178
  // Predicated region
  $region26: #{resblk_forward.5} parent=0 // pred_check
    _
  $region27: #{resblk_forward.5} parent=0 // pred_check_branch
    %196 = sbr.rel (0) target = $region29
  $region28: #{resblk_forward.5} parent=0 // pred_region
    _
  $region29: #{resblk_forward.5} parent=0 // pred_fallthru
    _
  // Predicated region
  $region30: #{resblk_forward.5} parent=0 // pred_check
    _
  $region31: #{resblk_forward.5} parent=0 // pred_check_branch
    %198 = sbr.rel (0) target = $region33
  $region32: #{resblk_forward.5} parent=0 // pred_region
    _
  $region33: #{resblk_forward.5} parent=0 // pred_fallthru
    _

// kernel: resblk_forward.3
$region0: #{resblk_forward.3}
  #allocation0 [shape = 'u32[]', space=smem, size = 0x4, offset = 0x4, fixed_abs, tag = 'smem constant byte address 0x4 - core index']
  #allocation1 [shape = 'u32[144,128]{1,0:T(1,128)}', space=vmem, size = 0x12000, scoped, tag = 'internal scratch']
  %s0 = inlined_call_operand.vmem [shape: f32[128,1152], index: 0, kind: input, shape index: {}]
  %s1 = inlined_call_operand.vmem [shape: f32[1152,128], index: 1, kind: input, shape index: {}]
  %s2 = inlined_call_operand.vmem [shape: f32[128,128], index: 2, kind: output, shape index: {0}]
  %s3 = inlined_call_operand.vmem [shape: f32[1,8,128], index: 3, kind: output, shape index: {1}]
  %s4 = inlined_call_operand.vmem [shape: f32[1,8,128], index: 4, kind: output, shape index: {2}]
  %5 = xla_tuple %s2, %s3, %s4
  %s6 = sld [smem:[#allocation0]]
  $region34: #{resblk_forward.3} parent=0
    _
  %s8 = ssub.s32 1, %s6
  %s9 = scalar_select 0, %s8, %s6
  // Predicated region
  $region2: #{resblk_forward.3} parent=0 // pred_check
    _
  $region3: #{resblk_forward.3} parent=0 // pred_check_branch
    %11 = sbr.rel (0) target = $region5
  $region4: #{resblk_forward.3} parent=0 // pred_region
    _
  $region5: #{resblk_forward.3} parent=0 // pred_fallthru
    _
  // Predicated region
  $region6: #{resblk_forward.3} parent=0 // pred_check
    _
  $region7: #{resblk_forward.3} parent=0 // pred_check_branch
    %13 = sbr.rel (0) target = $region9
  $region8: #{resblk_forward.3} parent=0 // pred_region
    _
  $region9: #{resblk_forward.3} parent=0 // pred_fallthru
    _
  %v14 = vld [vmem:[%s0] sm:$0xff]
  %v15 = vld [vmem:[%s0 + $0x8] sm:$0xff]
  %v16 = vld [vmem:[%s0 + $0x10] sm:$0xff]
  %v17 = vld [vmem:[%s0 + $0x18] sm:$0xff]
  %v18 = vld [vmem:[%s0 + $0x20] sm:$0xff]
  %v19 = vld [vmem:[%s0 + $0x28] sm:$0xff]
  %v20 = vld [vmem:[%s0 + $0x30] sm:$0xff]
  %v21 = vld [vmem:[%s0 + $0x38] sm:$0xff]
  %v22 = vld [vmem:[%s0 + $0x40] sm:$0xff]
  %v23 = vld [vmem:[%s0 + $0x48] sm:$0xff]
  %v24 = vld [vmem:[%s0 + $0x50] sm:$0xff]
  %v25 = vld [vmem:[%s0 + $0x58] sm:$0xff]
  %v26 = vld [vmem:[%s0 + $0x60] sm:$0xff]
  %v27 = vld [vmem:[%s0 + $0x68] sm:$0xff]
  %v28 = vld [vmem:[%s0 + $0x70] sm:$0xff]
  %v29 = vld [vmem:[%s0 + $0x78] sm:$0xff]
  %v30 = vld [vmem:[%s0 + $0x80] sm:$0xff]
  %v31 = vld [vmem:[%s0 + $0x88] sm:$0xff]
  %v32 = vld [vmem:[%s0 + $0x90] sm:$0xff]
  %v33 = vld [vmem:[%s0 + $0x98] sm:$0xff]
  %v34 = vld [vmem:[%s0 + $0xa0] sm:$0xff]
  %v35 = vld [vmem:[%s0 + $0xa8] sm:$0xff]
  %v36 = vld [vmem:[%s0 + $0xb0] sm:$0xff]
  %v37 = vld [vmem:[%s0 + $0xb8] sm:$0xff]
  %v38 = vld [vmem:[%s0 + $0xc0] sm:$0xff]
  %v39 = vld [vmem:[%s0 + $0xc8] sm:$0xff]
  %v40 = vld [vmem:[%s0 + $0xd0] sm:$0xff]
  %v41 = vld [vmem:[%s0 + $0xd8] sm:$0xff]
  %v42 = vld [vmem:[%s0 + $0xe0] sm:$0xff]
  %v43 = vld [vmem:[%s0 + $0xe8] sm:$0xff]
  %v44 = vld [vmem:[%s0 + $0xf0] sm:$0xff]
  %v45 = vld [vmem:[%s0 + $0xf8] sm:$0xff]
  %v46 = vld [vmem:[%s0 + $0x100] sm:$0xff]
  %v47 = vld [vmem:[%s0 + $0x108] sm:$0xff]
  %v48 = vld [vmem:[%s0 + $0x110] sm:$0xff]
  %v49 = vld [vmem:[%s0 + $0x118] sm:$0xff]
  %v50 = vld [vmem:[%s0 + $0x120] sm:$0xff]
  %v51 = vld [vmem:[%s0 + $0x128] sm:$0xff]
  %v52 = vld [vmem:[%s0 + $0x130] sm:$0xff]
  %v53 = vld [vmem:[%s0 + $0x138] sm:$0xff]
  %v54 = vld [vmem:[%s0 + $0x140] sm:$0xff]
  %v55 = vld [vmem:[%s0 + $0x148] sm:$0xff]
  %v56 = vld [vmem:[%s0 + $0x150] sm:$0xff]
  %v57 = vld [vmem:[%s0 + $0x158] sm:$0xff]
  %v58 = vld [vmem:[%s0 + $0x160] sm:$0xff]
  %v59 = vld [vmem:[%s0 + $0x168] sm:$0xff]
  %v60 = vld [vmem:[%s0 + $0x170] sm:$0xff]
  %v61 = vld [vmem:[%s0 + $0x178] sm:$0xff]
  %v62 = vld [vmem:[%s0 + $0x180] sm:$0xff]
  %v63 = vld [vmem:[%s0 + $0x188] sm:$0xff]
  %v64 = vld [vmem:[%s0 + $0x190] sm:$0xff]
  %v65 = vld [vmem:[%s0 + $0x198] sm:$0xff]
  %v66 = vld [vmem:[%s0 + $0x1a0] sm:$0xff]
  %v67 = vld [vmem:[%s0 + $0x1a8] sm:$0xff]
  %v68 = vld [vmem:[%s0 + $0x1b0] sm:$0xff]
  %v69 = vld [vmem:[%s0 + $0x1b8] sm:$0xff]
  %v70 = vld [vmem:[%s0 + $0x1c0] sm:$0xff]
  %v71 = vld [vmem:[%s0 + $0x1c8] sm:$0xff]
  %v72 = vld [vmem:[%s0 + $0x1d0] sm:$0xff]
  %v73 = vld [vmem:[%s0 + $0x1d8] sm:$0xff]
  %v74 = vld [vmem:[%s0 + $0x1e0] sm:$0xff]
  %v75 = vld [vmem:[%s0 + $0x1e8] sm:$0xff]
  %v76 = vld [vmem:[%s0 + $0x1f0] sm:$0xff]
  %v77 = vld [vmem:[%s0 + $0x1f8] sm:$0xff]
  %v78 = vld [vmem:[%s0 + $0x200] sm:$0xff]
  %v79 = vld [vmem:[%s0 + $0x208] sm:$0xff]
  %v80 = vld [vmem:[%s0 + $0x210] sm:$0xff]
  %v81 = vld [vmem:[%s0 + $0x218] sm:$0xff]
  %v82 = vld [vmem:[%s0 + $0x220] sm:$0xff]
  %v83 = vld [vmem:[%s0 + $0x228] sm:$0xff]
  %v84 = vld [vmem:[%s0 + $0x230] sm:$0xff]
  %v85 = vld [vmem:[%s0 + $0x238] sm:$0xff]
  %v86 = vld [vmem:[%s0 + $0x240] sm:$0xff]
  %v87 = vld [vmem:[%s0 + $0x248] sm:$0xff]
  %v88 = vld [vmem:[%s0 + $0x250] sm:$0xff]
  %v89 = vld [vmem:[%s0 + $0x258] sm:$0xff]
  %v90 = vld [vmem:[%s0 + $0x260] sm:$0xff]
  %v91 = vld [vmem:[%s0 + $0x268] sm:$0xff]
  %v92 = vld [vmem:[%s0 + $0x270] sm:$0xff]
  %v93 = vld [vmem:[%s0 + $0x278] sm:$0xff]
  %v94 = vld [vmem:[%s0 + $0x280] sm:$0xff]
  %v95 = vld [vmem:[%s0 + $0x288] sm:$0xff]
  %v96 = vld [vmem:[%s0 + $0x290] sm:$0xff]
  %v97 = vld [vmem:[%s0 + $0x298] sm:$0xff]
  %v98 = vld [vmem:[%s0 + $0x2a0] sm:$0xff]
  %v99 = vld [vmem:[%s0 + $0x2a8] sm:$0xff]
  %v100 = vld [vmem:[%s0 + $0x2b0] sm:$0xff]
  %v101 = vld [vmem:[%s0 + $0x2b8] sm:$0xff]
  %v102 = vld [vmem:[%s0 + $0x2c0] sm:$0xff]
  %v103 = vld [vmem:[%s0 + $0x2c8] sm:$0xff]
  %v104 = vld [vmem:[%s0 + $0x2d0] sm:$0xff]
  %v105 = vld [vmem:[%s0 + $0x2d8] sm:$0xff]
  %v106 = vld [vmem:[%s0 + $0x2e0] sm:$0xff]
  %v107 = vld [vmem:[%s0 + $0x2e8] sm:$0xff]
  %v108 = vld [vmem:[%s0 + $0x2f0] sm:$0xff]
  %v109 = vld [vmem:[%s0 + $0x2f8] sm:$0xff]
  %v110 = vld [vmem:[%s0 + $0x300] sm:$0xff]
  %v111 = vld [vmem:[%s0 + $0x308] sm:$0xff]
  %v112 = vld [vmem:[%s0 + $0x310] sm:$0xff]
  %v113 = vld [vmem:[%s0 + $0x318] sm:$0xff]
  %v114 = vld [vmem:[%s0 + $0x320] sm:$0xff]
  %v115 = vld [vmem:[%s0 + $0x328] sm:$0xff]
  %v116 = vld [vmem:[%s0 + $0x330] sm:$0xff]
  %v117 = vld [vmem:[%s0 + $0x338] sm:$0xff]
  %v118 = vld [vmem:[%s0 + $0x340] sm:$0xff]
  %v119 = vld [vmem:[%s0 + $0x348] sm:$0xff]
  %v120 = vld [vmem:[%s0 + $0x350] sm:$0xff]
  %v121 = vld [vmem:[%s0 + $0x358] sm:$0xff]
  %v122 = vld [vmem:[%s0 + $0x360] sm:$0xff]
  %v123 = vld [vmem:[%s0 + $0x368] sm:$0xff]
  %v124 = vld [vmem:[%s0 + $0x370] sm:$0xff]
  %v125 = vld [vmem:[%s0 + $0x378] sm:$0xff]
  %v126 = vld [vmem:[%s0 + $0x380] sm:$0xff]
  %v127 = vld [vmem:[%s0 + $0x388] sm:$0xff]
  %v128 = vld [vmem:[%s0 + $0x390] sm:$0xff]
  %v129 = vld [vmem:[%s0 + $0x398] sm:$0xff]
  %v130 = vld [vmem:[%s0 + $0x3a0] sm:$0xff]
  %v131 = vld [vmem:[%s0 + $0x3a8] sm:$0xff]
  %v132 = vld [vmem:[%s0 + $0x3b0] sm:$0xff]
  %v133 = vld [vmem:[%s0 + $0x3b8] sm:$0xff]
  %v134 = vld [vmem:[%s0 + $0x3c0] sm:$0xff]
  %v135 = vld [vmem:[%s0 + $0x3c8] sm:$0xff]
  %v136 = vld [vmem:[%s0 + $0x3d0] sm:$0xff]
  %v137 = vld [vmem:[%s0 + $0x3d8] sm:$0xff]
  %v138 = vld [vmem:[%s0 + $0x3e0] sm:$0xff]
  %v139 = vld [vmem:[%s0 + $0x3e8] sm:$0xff]
  %v140 = vld [vmem:[%s0 + $0x3f0] sm:$0xff]
  %v141 = vld [vmem:[%s0 + $0x3f8] sm:$0xff]
  %v142 = vld [vmem:[%s0 + $0x400] sm:$0xff]
  %v143 = vld [vmem:[%s0 + $0x408] sm:$0xff]
  %v144 = vld [vmem:[%s0 + $0x410] sm:$0xff]
  %v145 = vld [vmem:[%s0 + $0x418] sm:$0xff]
  %v146 = vld [vmem:[%s0 + $0x420] sm:$0xff]
  %v147 = vld [vmem:[%s0 + $0x428] sm:$0xff]
  %v148 = vld [vmem:[%s0 + $0x430] sm:$0xff]
  %v149 = vld [vmem:[%s0 + $0x438] sm:$0xff]
  %v150 = vld [vmem:[%s0 + $0x440] sm:$0xff]
  %v151 = vld [vmem:[%s0 + $0x448] sm:$0xff]
  %v152 = vld [vmem:[%s0 + $0x450] sm:$0xff]
  %v153 = vld [vmem:[%s0 + $0x458] sm:$0xff]
  %v154 = vld [vmem:[%s0 + $0x460] sm:$0xff]
  %v155 = vld [vmem:[%s0 + $0x468] sm:$0xff]
  %v156 = vld [vmem:[%s0 + $0x470] sm:$0xff]
  %v157 = vld [vmem:[%s0 + $0x478] sm:$0xff]
  %v158 = vld [vmem:[%s1] sm:$0xff]
  %v159 = vld [vmem:[%s1 + $0x8] sm:$0xff]
  %v160 = vld [vmem:[%s1 + $0x10] sm:$0xff]
  %v161 = vld [vmem:[%s1 + $0x18] sm:$0xff]
  %v162 = vld [vmem:[%s1 + $0x20] sm:$0xff]
  %v163 = vld [vmem:[%s1 + $0x28] sm:$0xff]
  %v164 = vld [vmem:[%s1 + $0x30] sm:$0xff]
  %v165 = vld [vmem:[%s1 + $0x38] sm:$0xff]
  %v166 = vld [vmem:[%s1 + $0x40] sm:$0xff]
  %v167 = vld [vmem:[%s1 + $0x48] sm:$0xff]
  %v168 = vld [vmem:[%s1 + $0x50] sm:$0xff]
  %v169 = vld [vmem:[%s1 + $0x58] sm:$0xff]
  %v170 = vld [vmem:[%s1 + $0x60] sm:$0xff]
  %v171 = vld [vmem:[%s1 + $0x68] sm:$0xff]
  %v172 = vld [vmem:[%s1 + $0x70] sm:$0xff]
  %v173 = vld [vmem:[%s1 + $0x78] sm:$0xff]
  %v174 = vld [vmem:[%s1 + $0x80] sm:$0xff]
  %v175 = vld [vmem:[%s1 + $0x88] sm:$0xff]
  %v176 = vld [vmem:[%s1 + $0x90] sm:$0xff]
  %v177 = vld [vmem:[%s1 + $0x98] sm:$0xff]
  %v178 = vld [vmem:[%s1 + $0xa0] sm:$0xff]
  %v179 = vld [vmem:[%s1 + $0xa8] sm:$0xff]
  %v180 = vld [vmem:[%s1 + $0xb0] sm:$0xff]
  %v181 = vld [vmem:[%s1 + $0xb8] sm:$0xff]
  %v182 = vld [vmem:[%s1 + $0xc0] sm:$0xff]
  %v183 = vld [vmem:[%s1 + $0xc8] sm:$0xff]
  %v184 = vld [vmem:[%s1 + $0xd0] sm:$0xff]
  %v185 = vld [vmem:[%s1 + $0xd8] sm:$0xff]
  %v186 = vld [vmem:[%s1 + $0xe0] sm:$0xff]
  %v187 = vld [vmem:[%s1 + $0xe8] sm:$0xff]
  %v188 = vld [vmem:[%s1 + $0xf0] sm:$0xff]
  %v189 = vld [vmem:[%s1 + $0xf8] sm:$0xff]
  %v190 = vld [vmem:[%s1 + $0x100] sm:$0xff]
  %v191 = vld [vmem:[%s1 + $0x108] sm:$0xff]
  %v192 = vld [vmem:[%s1 + $0x110] sm:$0xff]
  %v193 = vld [vmem:[%s1 + $0x118] sm:$0xff]
  %v194 = vld [vmem:[%s1 + $0x120] sm:$0xff]
  %v195 = vld [vmem:[%s1 + $0x128] sm:$0xff]
  %v196 = vld [vmem:[%s1 + $0x130] sm:$0xff]
  %v197 = vld [vmem:[%s1 + $0x138] sm:$0xff]
  %v198 = vld [vmem:[%s1 + $0x140] sm:$0xff]
  %v199 = vld [vmem:[%s1 + $0x148] sm:$0xff]
  %v200 = vld [vmem:[%s1 + $0x150] sm:$0xff]
  %v201 = vld [vmem:[%s1 + $0x158] sm:$0xff]
  %v202 = vld [vmem:[%s1 + $0x160] sm:$0xff]
  %v203 = vld [vmem:[%s1 + $0x168] sm:$0xff]
  %v204 = vld [vmem:[%s1 + $0x170] sm:$0xff]
  %v205 = vld [vmem:[%s1 + $0x178] sm:$0xff]
  %v206 = vld [vmem:[%s1 + $0x180] sm:$0xff]
  %v207 = vld [vmem:[%s1 + $0x188] sm:$0xff]
  %v208 = vld [vmem:[%s1 + $0x190] sm:$0xff]
  %v209 = vld [vmem:[%s1 + $0x198] sm:$0xff]
  %v210 = vld [vmem:[%s1 + $0x1a0] sm:$0xff]
  %v211 = vld [vmem:[%s1 + $0x1a8] sm:$0xff]
  %v212 = vld [vmem:[%s1 + $0x1b0] sm:$0xff]
  %v213 = vld [vmem:[%s1 + $0x1b8] sm:$0xff]
  %v214 = vld [vmem:[%s1 + $0x1c0] sm:$0xff]
  %v215 = vld [vmem:[%s1 + $0x1c8] sm:$0xff]
  %v216 = vld [vmem:[%s1 + $0x1d0] sm:$0xff]
  %v217 = vld [vmem:[%s1 + $0x1d8] sm:$0xff]
  %v218 = vld [vmem:[%s1 + $0x1e0] sm:$0xff]
  %v219 = vld [vmem:[%s1 + $0x1e8] sm:$0xff]
  %v220 = vld [vmem:[%s1 + $0x1f0] sm:$0xff]
  %v221 = vld [vmem:[%s1 + $0x1f8] sm:$0xff]
  %v222 = vld [vmem:[%s1 + $0x200] sm:$0xff]
  %v223 = vld [vmem:[%s1 + $0x208] sm:$0xff]
  %v224 = vld [vmem:[%s1 + $0x210] sm:$0xff]
  %v225 = vld [vmem:[%s1 + $0x218] sm:$0xff]
  %v226 = vld [vmem:[%s1 + $0x220] sm:$0xff]
  %v227 = vld [vmem:[%s1 + $0x228] sm:$0xff]
  %v228 = vld [vmem:[%s1 + $0x230] sm:$0xff]
  %v229 = vld [vmem:[%s1 + $0x238] sm:$0xff]
  %v230 = vld [vmem:[%s1 + $0x240] sm:$0xff]
  %v231 = vld [vmem:[%s1 + $0x248] sm:$0xff]
  %v232 = vld [vmem:[%s1 + $0x250] sm:$0xff]
  %v233 = vld [vmem:[%s1 + $0x258] sm:$0xff]
  %v234 = vld [vmem:[%s1 + $0x260] sm:$0xff]
  %v235 = vld [vmem:[%s1 + $0x268] sm:$0xff]
  %v236 = vld [vmem:[%s1 + $0x270] sm:$0xff]
  %v237 = vld [vmem:[%s1 + $0x278] sm:$0xff]
  %v238 = vld [vmem:[%s1 + $0x280] sm:$0xff]
  %v239 = vld [vmem:[%s1 + $0x288] sm:$0xff]
  %v240 = vld [vmem:[%s1 + $0x290] sm:$0xff]
  %v241 = vld [vmem:[%s1 + $0x298] sm:$0xff]
  %v242 = vld [vmem:[%s1 + $0x2a0] sm:$0xff]
  %v243 = vld [vmem:[%s1 + $0x2a8] sm:$0xff]
  %v244 = vld [vmem:[%s1 + $0x2b0] sm:$0xff]
  %v245 = vld [vmem:[%s1 + $0x2b8] sm:$0xff]
  %v246 = vld [vmem:[%s1 + $0x2c0] sm:$0xff]
  %v247 = vld [vmem:[%s1 + $0x2c8] sm:$0xff]
  %v248 = vld [vmem:[%s1 + $0x2d0] sm:$0xff]
  %v249 = vld [vmem:[%s1 + $0x2d8] sm:$0xff]
  %v250 = vld [vmem:[%s1 + $0x2e0] sm:$0xff]
  %v251 = vld [vmem:[%s1 + $0x2e8] sm:$0xff]
  %v252 = vld [vmem:[%s1 + $0x2f0] sm:$0xff]
  %v253 = vld [vmem:[%s1 + $0x2f8] sm:$0xff]
  %v254 = vld [vmem:[%s1 + $0x300] sm:$0xff]
  %v255 = vld [vmem:[%s1 + $0x308] sm:$0xff]
  %v256 = vld [vmem:[%s1 + $0x310] sm:$0xff]
  %v257 = vld [vmem:[%s1 + $0x318] sm:$0xff]
  %v258 = vld [vmem:[%s1 + $0x320] sm:$0xff]
  %v259 = vld [vmem:[%s1 + $0x328] sm:$0xff]
  %v260 = vld [vmem:[%s1 + $0x330] sm:$0xff]
  %v261 = vld [vmem:[%s1 + $0x338] sm:$0xff]
  %v262 = vld [vmem:[%s1 + $0x340] sm:$0xff]
  %v263 = vld [vmem:[%s1 + $0x348] sm:$0xff]
  %v264 = vld [vmem:[%s1 + $0x350] sm:$0xff]
  %v265 = vld [vmem:[%s1 + $0x358] sm:$0xff]
  %v266 = vld [vmem:[%s1 + $0x360] sm:$0xff]
  %v267 = vld [vmem:[%s1 + $0x368] sm:$0xff]
  %v268 = vld [vmem:[%s1 + $0x370] sm:$0xff]
  %v269 = vld [vmem:[%s1 + $0x378] sm:$0xff]
  %v270 = vld [vmem:[%s1 + $0x380] sm:$0xff]
  %v271 = vld [vmem:[%s1 + $0x388] sm:$0xff]
  %v272 = vld [vmem:[%s1 + $0x390] sm:$0xff]
  %v273 = vld [vmem:[%s1 + $0x398] sm:$0xff]
  %v274 = vld [vmem:[%s1 + $0x3a0] sm:$0xff]
  %v275 = vld [vmem:[%s1 + $0x3a8] sm:$0xff]
  %v276 = vld [vmem:[%s1 + $0x3b0] sm:$0xff]
  %v277 = vld [vmem:[%s1 + $0x3b8] sm:$0xff]
  %v278 = vld [vmem:[%s1 + $0x3c0] sm:$0xff]
  %v279 = vld [vmem:[%s1 + $0x3c8] sm:$0xff]
  %v280 = vld [vmem:[%s1 + $0x3d0] sm:$0xff]
  %v281 = vld [vmem:[%s1 + $0x3d8] sm:$0xff]
  %v282 = vld [vmem:[%s1 + $0x3e0] sm:$0xff]
  %v283 = vld [vmem:[%s1 + $0x3e8] sm:$0xff]
  %v284 = vld [vmem:[%s1 + $0x3f0] sm:$0xff]
  %v285 = vld [vmem:[%s1 + $0x3f8] sm:$0xff]
  %v286 = vld [vmem:[%s1 + $0x400] sm:$0xff]
  %v287 = vld [vmem:[%s1 + $0x408] sm:$0xff]
  %v288 = vld [vmem:[%s1 + $0x410] sm:$0xff]
  %v289 = vld [vmem:[%s1 + $0x418] sm:$0xff]
  %v290 = vld [vmem:[%s1 + $0x420] sm:$0xff]
  %v291 = vld [vmem:[%s1 + $0x428] sm:$0xff]
  %v292 = vld [vmem:[%s1 + $0x430] sm:$0xff]
  %v293 = vld [vmem:[%s1 + $0x438] sm:$0xff]
  %v294 = vld [vmem:[%s1 + $0x440] sm:$0xff]
  %v295 = vld [vmem:[%s1 + $0x448] sm:$0xff]
  %v296 = vld [vmem:[%s1 + $0x450] sm:$0xff]
  %v297 = vld [vmem:[%s1 + $0x458] sm:$0xff]
  %v298 = vld [vmem:[%s1 + $0x460] sm:$0xff]
  %v299 = vld [vmem:[%s1 + $0x468] sm:$0xff]
  %v300 = vld [vmem:[%s1 + $0x470] sm:$0xff]
  %v301 = vld [vmem:[%s1 + $0x478] sm:$0xff]
  %302 = vmatprep.subr.mxu0 0.0
  %303 = vmatpush1.msra.mxu0 %v173
  %304 = vmatprep.subr.mxu0 0.0
  %305 = vmatpush1.msra.mxu0 %v172
  %306 = vmatprep.subr.mxu0 0.0
  %307 = vmatpush1.msra.mxu0 %v171
  %308 = vmatprep.subr.mxu0 0.0
  %309 = vmatpush1.msra.mxu0 %v170
  %310 = vmatprep.subr.mxu0 0.0
  %311 = vmatpush1.msra.mxu0 %v169
  %312 = vmatprep.subr.mxu0 0.0
  %313 = vmatpush1.msra.mxu0 %v168
  %314 = vmatprep.subr.mxu0 0.0
  %315 = vmatpush1.msra.mxu0 %v167
  %316 = vmatprep.subr.mxu0 0.0
  %317 = vmatpush1.msra.mxu0 %v166
  %318 = vmatprep.subr.mxu0 0.0
  %319 = vmatpush1.msra.mxu0 %v165
  %320 = vmatprep.subr.mxu0 0.0
  %321 = vmatpush1.msra.mxu0 %v164
  %322 = vmatprep.subr.mxu0 0.0
  %323 = vmatpush1.msra.mxu0 %v163
  %324 = vmatprep.subr.mxu0 0.0
  %325 = vmatpush1.msra.mxu0 %v162
  %326 = vmatprep.subr.mxu0 0.0
  %327 = vmatpush1.msra.mxu0 %v161
  %328 = vmatprep.subr.mxu0 0.0
  %329 = vmatpush1.msra.mxu0 %v160
  %330 = vmatprep.subr.mxu0 0.0
  %331 = vmatpush1.msra.mxu0 %v159
  %332 = vmatprep.subr.mxu0 0.0
  %333 = vmatpush1.msra.mxu0 %v158
  %334 = vmatprep.subr.mxu0 0.0
  %335 = vmatpush2.msra.mxu0 %v189
  %336 = vmatprep.subr.mxu0 0.0
  %337 = vmatpush2.msra.mxu0 %v188
  %338 = vmatprep.subr.mxu0 0.0
  %339 = vmatpush2.msra.mxu0 %v187
  %340 = vmatprep.subr.mxu0 0.0
  %341 = vmatpush2.msra.mxu0 %v186
  %342 = vmatprep.subr.mxu0 0.0
  %343 = vmatpush2.msra.mxu0 %v185
  %344 = vmatprep.subr.mxu0 0.0
  %345 = vmatpush2.msra.mxu0 %v184
  %346 = vmatprep.subr.mxu0 0.0
  %347 = vmatpush2.msra.mxu0 %v183
  %348 = vmatprep.subr.mxu0 0.0
  %349 = vmatpush2.msra.mxu0 %v182
  %350 = vmatprep.subr.mxu0 0.0
  %351 = vmatpush2.msra.mxu0 %v181
  %352 = vmatprep.subr.mxu0 0.0
  %353 = vmatpush2.msra.mxu0 %v180
  %354 = vmatprep.subr.mxu0 0.0
  %355 = vmatpush2.msra.mxu0 %v179
  %356 = vmatprep.subr.mxu0 0.0
  %357 = vmatpush2.msra.mxu0 %v178
  %358 = vmatprep.subr.mxu0 0.0
  %359 = vmatpush2.msra.mxu0 %v177
  %360 = vmatprep.subr.mxu0 0.0
  %361 = vmatpush2.msra.mxu0 %v176
  %362 = vmatprep.subr.mxu0 0.0
  %363 = vmatpush2.msra.mxu0 %v175
  %364 = vmatprep.subr.mxu0 0.0
  %365 = vmatpush2.msra.mxu0 %v174
  %366 = vmatprep.mubr.f32.mxu0 %v15
  %367 = vmatmul.mubr.f32.gmra.mxu0 %v14
  %v368 = vpop.f32.mrf.mxu0
  %v369 = vadd.f32 0.0, %v368
  %v370 = vpop.f32.mrf.mxu0
  %371 = vmatprep.mubr.f32.mxu0 %v24
  %372 = vmatmul.mubr.f32.gmra.mxu0 %v23
  %v373 = vpop.f32.mrf.mxu0
  %v374 = vadd.f32 0.0, %v373
  %v375 = vpop.f32.mrf.mxu0
  %376 = vmatprep.mubr.f32.mxu0 %v33
  %377 = vmatmul.mubr.f32.gmra.mxu0 %v32
  %v378 = vpop.f32.mrf.mxu0
  %v379 = vadd.f32 0.0, %v378
  %v380 = vpop.f32.mrf.mxu0
  %381 = vmatprep.mubr.f32.mxu0 %v42
  %382 = vmatmul.mubr.f32.gmra.mxu0 %v41
  %v383 = vpop.f32.mrf.mxu0
  %v384 = vadd.f32 0.0, %v383
  %v385 = vpop.f32.mrf.mxu0
  %386 = vmatprep.mubr.f32.mxu0 %v51
  %387 = vmatmul.mubr.f32.gmra.mxu0 %v50
  %v388 = vpop.f32.mrf.mxu0
  %v389 = vadd.f32 0.0, %v388
  %v390 = vpop.f32.mrf.mxu0
  %391 = vmatprep.mubr.f32.mxu0 %v60
  %392 = vmatmul.mubr.f32.gmra.mxu0 %v59
  %v393 = vpop.f32.mrf.mxu0
  %v394 = vadd.f32 0.0, %v393
  %v395 = vpop.f32.mrf.mxu0
  %396 = vmatprep.mubr.f32.mxu0 %v69
  %397 = vmatmul.mubr.f32.gmra.mxu0 %v68
  %v398 = vpop.f32.mrf.mxu0
  %v399 = vadd.f32 0.0, %v398
  %v400 = vpop.f32.mrf.mxu0
  %401 = vmatprep.mubr.f32.mxu0 %v78
  %402 = vmatmul.mubr.f32.gmra.mxu0 %v77
  %v403 = vpop.f32.mrf.mxu0
  %v404 = vadd.f32 0.0, %v403
  %v405 = vpop.f32.mrf.mxu0
  %406 = vmatprep.mubr.f32.mxu0 %v87
  %407 = vmatmul.mubr.f32.gmra.mxu0 %v86
  %v408 = vpop.f32.mrf.mxu0
  %v409 = vadd.f32 0.0, %v408
  %v410 = vpop.f32.mrf.mxu0
  %411 = vmatprep.mubr.f32.mxu0 %v96
  %412 = vmatmul.mubr.f32.gmra.mxu0 %v95
  %v413 = vpop.f32.mrf.mxu0
  %v414 = vadd.f32 0.0, %v413
  %v415 = vpop.f32.mrf.mxu0
  %416 = vmatprep.mubr.f32.mxu0 %v105
  %417 = vmatmul.mubr.f32.gmra.mxu0 %v104
  %v418 = vpop.f32.mrf.mxu0
  %v419 = vadd.f32 0.0, %v418
  %v420 = vpop.f32.mrf.mxu0
  %421 = vmatprep.mubr.f32.mxu0 %v114
  %422 = vmatmul.mubr.f32.gmra.mxu0 %v113
  %v423 = vpop.f32.mrf.mxu0
  %v424 = vadd.f32 0.0, %v423
  %v425 = vpop.f32.mrf.mxu0
  %426 = vmatprep.mubr.f32.mxu0 %v123
  %427 = vmatmul.mubr.f32.gmra.mxu0 %v122
  %v428 = vpop.f32.mrf.mxu0
  %v429 = vadd.f32 0.0, %v428
  %v430 = vpop.f32.mrf.mxu0
  %431 = vmatprep.mubr.f32.mxu0 %v132
  %432 = vmatmul.mubr.f32.gmra.mxu0 %v131
  %v433 = vpop.f32.mrf.mxu0
  %v434 = vadd.f32 0.0, %v433
  %v435 = vpop.f32.mrf.mxu0
  %436 = vmatprep.mubr.f32.mxu0 %v141
  %437 = vmatmul.mubr.f32.gmra.mxu0 %v140
  %v438 = vpop.f32.mrf.mxu0
  %v439 = vadd.f32 0.0, %v438
  %v440 = vpop.f32.mrf.mxu0
  %441 = vmatprep.mubr.f32.mxu0 %v150
  %442 = vmatmul.mubr.f32.gmra.mxu0 %v149
  %v443 = vpop.f32.mrf.mxu0
  %v444 = vadd.f32 0.0, %v443
  %v445 = vpop.f32.mrf.mxu0
  %446 = vdwg.mxu0
  %447 = vmatprep.subr.mxu0 0.0
  %448 = vmatpush1.msra.mxu0 %v205
  %449 = vmatprep.subr.mxu0 0.0
  %450 = vmatpush1.msra.mxu0 %v204
  %451 = vmatprep.subr.mxu0 0.0
  %452 = vmatpush1.msra.mxu0 %v203
  %453 = vmatprep.subr.mxu0 0.0
  %454 = vmatpush1.msra.mxu0 %v202
  %455 = vmatprep.subr.mxu0 0.0
  %456 = vmatpush1.msra.mxu0 %v201
  %457 = vmatprep.subr.mxu0 0.0
  %458 = vmatpush1.msra.mxu0 %v200
  %459 = vmatprep.subr.mxu0 0.0
  %460 = vmatpush1.msra.mxu0 %v199
  %461 = vmatprep.subr.mxu0 0.0
  %462 = vmatpush1.msra.mxu0 %v198
  %463 = vmatprep.subr.mxu0 0.0
  %464 = vmatpush1.msra.mxu0 %v197
  %465 = vmatprep.subr.mxu0 0.0
  %466 = vmatpush1.msra.mxu0 %v196
  %467 = vmatprep.subr.mxu0 0.0
  %468 = vmatpush1.msra.mxu0 %v195
  %469 = vmatprep.subr.mxu0 0.0
  %470 = vmatpush1.msra.mxu0 %v194
  %471 = vmatprep.subr.mxu0 0.0
  %472 = vmatpush1.msra.mxu0 %v193
  %473 = vmatprep.subr.mxu0 0.0
  %474 = vmatpush1.msra.mxu0 %v192
  %475 = vmatprep.subr.mxu0 0.0
  %476 = vmatpush1.msra.mxu0 %v191
  %477 = vmatprep.subr.mxu0 0.0
  %478 = vmatpush1.msra.mxu0 %v190
  %479 = vmatprep.subr.mxu0 0.0
  %480 = vmatpush2.msra.mxu0 %v221
  %481 = vmatprep.subr.mxu0 0.0
  %482 = vmatpush2.msra.mxu0 %v220
  %483 = vmatprep.subr.mxu0 0.0
  %484 = vmatpush2.msra.mxu0 %v219
  %485 = vmatprep.subr.mxu0 0.0
  %486 = vmatpush2.msra.mxu0 %v218
  %487 = vmatprep.subr.mxu0 0.0
  %488 = vmatpush2.msra.mxu0 %v217
  %489 = vmatprep.subr.mxu0 0.0
  %490 = vmatpush2.msra.mxu0 %v216
  %491 = vmatprep.subr.mxu0 0.0
  %492 = vmatpush2.msra.mxu0 %v215
  %493 = vmatprep.subr.mxu0 0.0
  %494 = vmatpush2.msra.mxu0 %v214
  %495 = vmatprep.subr.mxu0 0.0
  %496 = vmatpush2.msra.mxu0 %v213
  %497 = vmatprep.subr.mxu0 0.0
  %498 = vmatpush2.msra.mxu0 %v212
  %499 = vmatprep.subr.mxu0 0.0
  %500 = vmatpush2.msra.mxu0 %v211
  %501 = vmatprep.subr.mxu0 0.0
  %502 = vmatpush2.msra.mxu0 %v210
  %503 = vmatprep.subr.mxu0 0.0
  %504 = vmatpush2.msra.mxu0 %v209
  %505 = vmatprep.subr.mxu0 0.0
  %506 = vmatpush2.msra.mxu0 %v208
  %507 = vmatprep.subr.mxu0 0.0
  %508 = vmatpush2.msra.mxu0 %v207
  %509 = vmatprep.subr.mxu0 0.0
  %510 = vmatpush2.msra.mxu0 %v206
  %511 = vmatprep.mubr.f32.mxu0 %v17
  %512 = vmatmul.mubr.f32.gmra.mxu0 %v16
  %v513 = vpop.f32.mrf.mxu0
  %v514 = vadd.f32 %v369, %v513
  %v515 = vpop.f32.mrf.mxu0
  %516 = vmatprep.mubr.f32.mxu0 %v26
  %517 = vmatmul.mubr.f32.gmra.mxu0 %v25
  %v518 = vpop.f32.mrf.mxu0
  %v519 = vadd.f32 %v374, %v518
  %v520 = vpop.f32.mrf.mxu0
  %521 = vmatprep.mubr.f32.mxu0 %v35
  %522 = vmatmul.mubr.f32.gmra.mxu0 %v34
  %v523 = vpop.f32.mrf.mxu0
  %v524 = vadd.f32 %v379, %v523
  %v525 = vpop.f32.mrf.mxu0
  %526 = vmatprep.mubr.f32.mxu0 %v44
  %527 = vmatmul.mubr.f32.gmra.mxu0 %v43
  %v528 = vpop.f32.mrf.mxu0
  %v529 = vadd.f32 %v384, %v528
  %v530 = vpop.f32.mrf.mxu0
  %531 = vmatprep.mubr.f32.mxu0 %v53
  %532 = vmatmul.mubr.f32.gmra.mxu0 %v52
  %v533 = vpop.f32.mrf.mxu0
  %v534 = vadd.f32 %v389, %v533
  %v535 = vpop.f32.mrf.mxu0
  %536 = vmatprep.mubr.f32.mxu0 %v62
  %537 = vmatmul.mubr.f32.gmra.mxu0 %v61
  %v538 = vpop.f32.mrf.mxu0
  %v539 = vadd.f32 %v394, %v538
  %v540 = vpop.f32.mrf.mxu0
  %541 = vmatprep.mubr.f32.mxu0 %v71
  %542 = vmatmul.mubr.f32.gmra.mxu0 %v70
  %v543 = vpop.f32.mrf.mxu0
  %v544 = vadd.f32 %v399, %v543
  %v545 = vpop.f32.mrf.mxu0
  %546 = vmatprep.mubr.f32.mxu0 %v80
  %547 = vmatmul.mubr.f32.gmra.mxu0 %v79
  %v548 = vpop.f32.mrf.mxu0
  %v549 = vadd.f32 %v404, %v548
  %v550 = vpop.f32.mrf.mxu0
  %551 = vmatprep.mubr.f32.mxu0 %v89
  %552 = vmatmul.mubr.f32.gmra.mxu0 %v88
  %v553 = vpop.f32.mrf.mxu0
  %v554 = vadd.f32 %v409, %v553
  %v555 = vpop.f32.mrf.mxu0
  %556 = vmatprep.mubr.f32.mxu0 %v98
  %557 = vmatmul.mubr.f32.gmra.mxu0 %v97
  %v558 = vpop.f32.mrf.mxu0
  %v559 = vadd.f32 %v414, %v558
  %v560 = vpop.f32.mrf.mxu0
  %561 = vmatprep.mubr.f32.mxu0 %v107
  %562 = vmatmul.mubr.f32.gmra.mxu0 %v106
  %v563 = vpop.f32.mrf.mxu0
  %v564 = vadd.f32 %v419, %v563
  %v565 = vpop.f32.mrf.mxu0
  %566 = vmatprep.mubr.f32.mxu0 %v116
  %567 = vmatmul.mubr.f32.gmra.mxu0 %v115
  %v568 = vpop.f32.mrf.mxu0
  %v569 = vadd.f32 %v424, %v568
  %v570 = vpop.f32.mrf.mxu0
  %571 = vmatprep.mubr.f32.mxu0 %v125
  %572 = vmatmul.mubr.f32.gmra.mxu0 %v124
  %v573 = vpop.f32.mrf.mxu0
  %v574 = vadd.f32 %v429, %v573
  %v575 = vpop.f32.mrf.mxu0
  %576 = vmatprep.mubr.f32.mxu0 %v134
  %577 = vmatmul.mubr.f32.gmra.mxu0 %v133
  %v578 = vpop.f32.mrf.mxu0
  %v579 = vadd.f32 %v434, %v578
  %v580 = vpop.f32.mrf.mxu0
  %581 = vmatprep.mubr.f32.mxu0 %v143
  %582 = vmatmul.mubr.f32.gmra.mxu0 %v142
  %v583 = vpop.f32.mrf.mxu0
  %v584 = vadd.f32 %v439, %v583
  %v585 = vpop.f32.mrf.mxu0
  %586 = vmatprep.mubr.f32.mxu0 %v152
  %587 = vmatmul.mubr.f32.gmra.mxu0 %v151
  %v588 = vpop.f32.mrf.mxu0
  %v589 = vadd.f32 %v444, %v588
  %v590 = vpop.f32.mrf.mxu0
  %591 = vdwg.mxu0
  %592 = vmatprep.subr.mxu0 0.0
  %593 = vmatpush1.msra.mxu0 %v237
  %594 = vmatprep.subr.mxu0 0.0
  %595 = vmatpush1.msra.mxu0 %v236
  %596 = vmatprep.subr.mxu0 0.0
  %597 = vmatpush1.msra.mxu0 %v235
  %598 = vmatprep.subr.mxu0 0.0
  %599 = vmatpush1.msra.mxu0 %v234
  %600 = vmatprep.subr.mxu0 0.0
  %601 = vmatpush1.msra.mxu0 %v233
  %602 = vmatprep.subr.mxu0 0.0
  %603 = vmatpush1.msra.mxu0 %v232
  %604 = vmatprep.subr.mxu0 0.0
  %605 = vmatpush1.msra.mxu0 %v231
  %606 = vmatprep.subr.mxu0 0.0
  %607 = vmatpush1.msra.mxu0 %v230
  %608 = vmatprep.subr.mxu0 0.0
  %609 = vmatpush1.msra.mxu0 %v229
  %610 = vmatprep.subr.mxu0 0.0
  %611 = vmatpush1.msra.mxu0 %v228
  %612 = vmatprep.subr.mxu0 0.0
  %613 = vmatpush1.msra.mxu0 %v227
  %614 = vmatprep.subr.mxu0 0.0
  %615 = vmatpush1.msra.mxu0 %v226
  %616 = vmatprep.subr.mxu0 0.0
  %617 = vmatpush1.msra.mxu0 %v225
  %618 = vmatprep.subr.mxu0 0.0
  %619 = vmatpush1.msra.mxu0 %v224
  %620 = vmatprep.subr.mxu0 0.0
  %621 = vmatpush1.msra.mxu0 %v223
  %622 = vmatprep.subr.mxu0 0.0
  %623 = vmatpush1.msra.mxu0 %v222
  %624 = vmatprep.subr.mxu0 0.0
  %625 = vmatpush2.msra.mxu0 %v253
  %626 = vmatprep.subr.mxu0 0.0
  %627 = vmatpush2.msra.mxu0 %v252
  %628 = vmatprep.subr.mxu0 0.0
  %629 = vmatpush2.msra.mxu0 %v251
  %630 = vmatprep.subr.mxu0 0.0
  %631 = vmatpush2.msra.mxu0 %v250
  %632 = vmatprep.subr.mxu0 0.0
  %633 = vmatpush2.msra.mxu0 %v249
  %634 = vmatprep.subr.mxu0 0.0
  %635 = vmatpush2.msra.mxu0 %v248
  %636 = vmatprep.subr.mxu0 0.0
  %637 = vmatpush2.msra.mxu0 %v247
  %638 = vmatprep.subr.mxu0 0.0
  %639 = vmatpush2.msra.mxu0 %v246
  %640 = vmatprep.subr.mxu0 0.0
  %641 = vmatpush2.msra.mxu0 %v245
  %642 = vmatprep.subr.mxu0 0.0
  %643 = vmatpush2.msra.mxu0 %v244
  %644 = vmatprep.subr.mxu0 0.0
  %645 = vmatpush2.msra.mxu0 %v243
  %646 = vmatprep.subr.mxu0 0.0
  %647 = vmatpush2.msra.mxu0 %v242
  %648 = vmatprep.subr.mxu0 0.0
  %649 = vmatpush2.msra.mxu0 %v241
  %650 = vmatprep.subr.mxu0 0.0
  %651 = vmatpush2.msra.mxu0 %v240
  %652 = vmatprep.subr.mxu0 0.0
  %653 = vmatpush2.msra.mxu0 %v239
  %654 = vmatprep.subr.mxu0 0.0
  %655 = vmatpush2.msra.mxu0 %v238
  %656 = vmatprep.mubr.f32.mxu0 %v19
  %657 = vmatmul.mubr.f32.gmra.mxu0 %v18
  %v658 = vpop.f32.mrf.mxu0
  %v659 = vadd.f32 %v514, %v658
  %v660 = vpop.f32.mrf.mxu0
  %661 = vmatprep.mubr.f32.mxu0 %v28
  %662 = vmatmul.mubr.f32.gmra.mxu0 %v27
  %v663 = vpop.f32.mrf.mxu0
  %v664 = vadd.f32 %v519, %v663
  %v665 = vpop.f32.mrf.mxu0
  %666 = vmatprep.mubr.f32.mxu0 %v37
  %667 = vmatmul.mubr.f32.gmra.mxu0 %v36
  %v668 = vpop.f32.mrf.mxu0
  %v669 = vadd.f32 %v524, %v668
  %v670 = vpop.f32.mrf.mxu0
  %671 = vmatprep.mubr.f32.mxu0 %v46
  %672 = vmatmul.mubr.f32.gmra.mxu0 %v45
  %v673 = vpop.f32.mrf.mxu0
  %v674 = vadd.f32 %v529, %v673
  %v675 = vpop.f32.mrf.mxu0
  %676 = vmatprep.mubr.f32.mxu0 %v55
  %677 = vmatmul.mubr.f32.gmra.mxu0 %v54
  %v678 = vpop.f32.mrf.mxu0
  %v679 = vadd.f32 %v534, %v678
  %v680 = vpop.f32.mrf.mxu0
  %681 = vmatprep.mubr.f32.mxu0 %v64
  %682 = vmatmul.mubr.f32.gmra.mxu0 %v63
  %v683 = vpop.f32.mrf.mxu0
  %v684 = vadd.f32 %v539, %v683
  %v685 = vpop.f32.mrf.mxu0
  %686 = vmatprep.mubr.f32.mxu0 %v73
  %687 = vmatmul.mubr.f32.gmra.mxu0 %v72
  %v688 = vpop.f32.mrf.mxu0
  %v689 = vadd.f32 %v544, %v688
  %v690 = vpop.f32.mrf.mxu0
  %691 = vmatprep.mubr.f32.mxu0 %v82
  %692 = vmatmul.mubr.f32.gmra.mxu0 %v81
  %v693 = vpop.f32.mrf.mxu0
  %v694 = vadd.f32 %v549, %v693
  %v695 = vpop.f32.mrf.mxu0
  %696 = vmatprep.mubr.f32.mxu0 %v91
  %697 = vmatmul.mubr.f32.gmra.mxu0 %v90
  %v698 = vpop.f32.mrf.mxu0
  %v699 = vadd.f32 %v554, %v698
  %v700 = vpop.f32.mrf.mxu0
  %701 = vmatprep.mubr.f32.mxu0 %v100
  %702 = vmatmul.mubr.f32.gmra.mxu0 %v99
  %v703 = vpop.f32.mrf.mxu0
  %v704 = vadd.f32 %v559, %v703
  %v705 = vpop.f32.mrf.mxu0
  %706 = vmatprep.mubr.f32.mxu0 %v109
  %707 = vmatmul.mubr.f32.gmra.mxu0 %v108
  %v708 = vpop.f32.mrf.mxu0
  %v709 = vadd.f32 %v564, %v708
  %v710 = vpop.f32.mrf.mxu0
  %711 = vmatprep.mubr.f32.mxu0 %v118
  %712 = vmatmul.mubr.f32.gmra.mxu0 %v117
  %v713 = vpop.f32.mrf.mxu0
  %v714 = vadd.f32 %v569, %v713
  %v715 = vpop.f32.mrf.mxu0
  %716 = vmatprep.mubr.f32.mxu0 %v127
  %717 = vmatmul.mubr.f32.gmra.mxu0 %v126
  %v718 = vpop.f32.mrf.mxu0
  %v719 = vadd.f32 %v574, %v718
  %v720 = vpop.f32.mrf.mxu0
  %721 = vmatprep.mubr.f32.mxu0 %v136
  %722 = vmatmul.mubr.f32.gmra.mxu0 %v135
  %v723 = vpop.f32.mrf.mxu0
  %v724 = vadd.f32 %v579, %v723
  %v725 = vpop.f32.mrf.mxu0
  %726 = vmatprep.mubr.f32.mxu0 %v145
  %727 = vmatmul.mubr.f32.gmra.mxu0 %v144
  %v728 = vpop.f32.mrf.mxu0
  %v729 = vadd.f32 %v584, %v728
  %v730 = vpop.f32.mrf.mxu0
  %731 = vmatprep.mubr.f32.mxu0 %v154
  %732 = vmatmul.mubr.f32.gmra.mxu0 %v153
  %v733 = vpop.f32.mrf.mxu0
  %v734 = vadd.f32 %v589, %v733
  %v735 = vpop.f32.mrf.mxu0
  %736 = vdwg.mxu0
  %737 = vmatprep.subr.mxu0 0.0
  %738 = vmatpush1.msra.mxu0 %v269
  %739 = vmatprep.subr.mxu0 0.0
  %740 = vmatpush1.msra.mxu0 %v268
  %741 = vmatprep.subr.mxu0 0.0
  %742 = vmatpush1.msra.mxu0 %v267
  %743 = vmatprep.subr.mxu0 0.0
  %744 = vmatpush1.msra.mxu0 %v266
  %745 = vmatprep.subr.mxu0 0.0
  %746 = vmatpush1.msra.mxu0 %v265
  %747 = vmatprep.subr.mxu0 0.0
  %748 = vmatpush1.msra.mxu0 %v264
  %749 = vmatprep.subr.mxu0 0.0
  %750 = vmatpush1.msra.mxu0 %v263
  %751 = vmatprep.subr.mxu0 0.0
  %752 = vmatpush1.msra.mxu0 %v262
  %753 = vmatprep.subr.mxu0 0.0
  %754 = vmatpush1.msra.mxu0 %v261
  %755 = vmatprep.subr.mxu0 0.0
  %756 = vmatpush1.msra.mxu0 %v260
  %757 = vmatprep.subr.mxu0 0.0
  %758 = vmatpush1.msra.mxu0 %v259
  %759 = vmatprep.subr.mxu0 0.0
  %760 = vmatpush1.msra.mxu0 %v258
  %761 = vmatprep.subr.mxu0 0.0
  %762 = vmatpush1.msra.mxu0 %v257
  %763 = vmatprep.subr.mxu0 0.0
  %764 = vmatpush1.msra.mxu0 %v256
  %765 = vmatprep.subr.mxu0 0.0
  %766 = vmatpush1.msra.mxu0 %v255
  %767 = vmatprep.subr.mxu0 0.0
  %768 = vmatpush1.msra.mxu0 %v254
  %769 = vmatprep.subr.mxu0 0.0
  %770 = vmatpush2.msra.mxu0 %v285
  %771 = vmatprep.subr.mxu0 0.0
  %772 = vmatpush2.msra.mxu0 %v284
  %773 = vmatprep.subr.mxu0 0.0
  %774 = vmatpush2.msra.mxu0 %v283
  %775 = vmatprep.subr.mxu0 0.0
  %776 = vmatpush2.msra.mxu0 %v282
  %777 = vmatprep.subr.mxu0 0.0
  %778 = vmatpush2.msra.mxu0 %v281
  %779 = vmatprep.subr.mxu0 0.0
  %780 = vmatpush2.msra.mxu0 %v280
  %781 = vmatprep.subr.mxu0 0.0
  %782 = vmatpush2.msra.mxu0 %v279
  %783 = vmatprep.subr.mxu0 0.0
  %784 = vmatpush2.msra.mxu0 %v278
  %785 = vmatprep.subr.mxu0 0.0
  %786 = vmatpush2.msra.mxu0 %v277
  %787 = vmatprep.subr.mxu0 0.0
  %788 = vmatpush2.msra.mxu0 %v276
  %789 = vmatprep.subr.mxu0 0.0
  %790 = vmatpush2.msra.mxu0 %v275
  %791 = vmatprep.subr.mxu0 0.0
  %792 = vmatpush2.msra.mxu0 %v274
  %793 = vmatprep.subr.mxu0 0.0
  %794 = vmatpush2.msra.mxu0 %v273
  %795 = vmatprep.subr.mxu0 0.0
  %796 = vmatpush2.msra.mxu0 %v272
  %797 = vmatprep.subr.mxu0 0.0
  %798 = vmatpush2.msra.mxu0 %v271
  %799 = vmatprep.subr.mxu0 0.0
  %800 = vmatpush2.msra.mxu0 %v270
  %801 = vmatprep.mubr.f32.mxu0 %v21
  %802 = vmatmul.mubr.f32.gmra.mxu0 %v20
  %v803 = vpop.f32.mrf.mxu0
  %v804 = vadd.f32 %v659, %v803
  %v805 = vpop.f32.mrf.mxu0
  %806 = vmatprep.mubr.f32.mxu0 %v30
  %807 = vmatmul.mubr.f32.gmra.mxu0 %v29
  %v808 = vpop.f32.mrf.mxu0
  %v809 = vadd.f32 %v664, %v808
  %v810 = vpop.f32.mrf.mxu0
  %811 = vmatprep.mubr.f32.mxu0 %v39
  %812 = vmatmul.mubr.f32.gmra.mxu0 %v38
  %v813 = vpop.f32.mrf.mxu0
  %v814 = vadd.f32 %v669, %v813
  %v815 = vpop.f32.mrf.mxu0
  %816 = vmatprep.mubr.f32.mxu0 %v48
  %817 = vmatmul.mubr.f32.gmra.mxu0 %v47
  %v818 = vpop.f32.mrf.mxu0
  %v819 = vadd.f32 %v674, %v818
  %v820 = vpop.f32.mrf.mxu0
  %821 = vmatprep.mubr.f32.mxu0 %v57
  %822 = vmatmul.mubr.f32.gmra.mxu0 %v56
  %v823 = vpop.f32.mrf.mxu0
  %v824 = vadd.f32 %v679, %v823
  %v825 = vpop.f32.mrf.mxu0
  %826 = vmatprep.mubr.f32.mxu0 %v66
  %827 = vmatmul.mubr.f32.gmra.mxu0 %v65
  %v828 = vpop.f32.mrf.mxu0
  %v829 = vadd.f32 %v684, %v828
  %v830 = vpop.f32.mrf.mxu0
  %831 = vmatprep.mubr.f32.mxu0 %v75
  %832 = vmatmul.mubr.f32.gmra.mxu0 %v74
  %v833 = vpop.f32.mrf.mxu0
  %v834 = vadd.f32 %v689, %v833
  %v835 = vpop.f32.mrf.mxu0
  %836 = vmatprep.mubr.f32.mxu0 %v84
  %837 = vmatmul.mubr.f32.gmra.mxu0 %v83
  %v838 = vpop.f32.mrf.mxu0
  %v839 = vadd.f32 %v694, %v838
  %v840 = vpop.f32.mrf.mxu0
  %841 = vmatprep.mubr.f32.mxu0 %v93
  %842 = vmatmul.mubr.f32.gmra.mxu0 %v92
  %v843 = vpop.f32.mrf.mxu0
  %v844 = vadd.f32 %v699, %v843
  %v845 = vpop.f32.mrf.mxu0
  %846 = vmatprep.mubr.f32.mxu0 %v102
  %847 = vmatmul.mubr.f32.gmra.mxu0 %v101
  %v848 = vpop.f32.mrf.mxu0
  %v849 = vadd.f32 %v704, %v848
  %v850 = vpop.f32.mrf.mxu0
  %851 = vmatprep.mubr.f32.mxu0 %v111
  %852 = vmatmul.mubr.f32.gmra.mxu0 %v110
  %v853 = vpop.f32.mrf.mxu0
  %v854 = vadd.f32 %v709, %v853
  %v855 = vpop.f32.mrf.mxu0
  %856 = vmatprep.mubr.f32.mxu0 %v120
  %857 = vmatmul.mubr.f32.gmra.mxu0 %v119
  %v858 = vpop.f32.mrf.mxu0
  %v859 = vadd.f32 %v714, %v858
  %v860 = vpop.f32.mrf.mxu0
  %861 = vmatprep.mubr.f32.mxu0 %v129
  %862 = vmatmul.mubr.f32.gmra.mxu0 %v128
  %v863 = vpop.f32.mrf.mxu0
  %v864 = vadd.f32 %v719, %v863
  %v865 = vpop.f32.mrf.mxu0
  %866 = vmatprep.mubr.f32.mxu0 %v138
  %867 = vmatmul.mubr.f32.gmra.mxu0 %v137
  %v868 = vpop.f32.mrf.mxu0
  %v869 = vadd.f32 %v724, %v868
  %v870 = vpop.f32.mrf.mxu0
  %871 = vmatprep.mubr.f32.mxu0 %v147
  %872 = vmatmul.mubr.f32.gmra.mxu0 %v146
  %v873 = vpop.f32.mrf.mxu0
  %v874 = vadd.f32 %v729, %v873
  %v875 = vpop.f32.mrf.mxu0
  %876 = vmatprep.mubr.f32.mxu0 %v156
  %877 = vmatmul.mubr.f32.gmra.mxu0 %v155
  %v878 = vpop.f32.mrf.mxu0
  %v879 = vadd.f32 %v734, %v878
  %v880 = vpop.f32.mrf.mxu0
  %881 = vdwg.mxu0
  %882 = vmatprep.subr.mxu0 0.0
  %883 = vmatpush1.msra.mxu0 %v301
  %884 = vmatprep.subr.mxu0 0.0
  %885 = vmatpush1.msra.mxu0 %v300
  %886 = vmatprep.subr.mxu0 0.0
  %887 = vmatpush1.msra.mxu0 %v299
  %888 = vmatprep.subr.mxu0 0.0
  %889 = vmatpush1.msra.mxu0 %v298
  %890 = vmatprep.subr.mxu0 0.0
  %891 = vmatpush1.msra.mxu0 %v297
  %892 = vmatprep.subr.mxu0 0.0
  %893 = vmatpush1.msra.mxu0 %v296
  %894 = vmatprep.subr.mxu0 0.0
  %895 = vmatpush1.msra.mxu0 %v295
  %896 = vmatprep.subr.mxu0 0.0
  %897 = vmatpush1.msra.mxu0 %v294
  %898 = vmatprep.subr.mxu0 0.0
  %899 = vmatpush1.msra.mxu0 %v293
  %900 = vmatprep.subr.mxu0 0.0
  %901 = vmatpush1.msra.mxu0 %v292
  %902 = vmatprep.subr.mxu0 0.0
  %903 = vmatpush1.msra.mxu0 %v291
  %904 = vmatprep.subr.mxu0 0.0
  %905 = vmatpush1.msra.mxu0 %v290
  %906 = vmatprep.subr.mxu0 0.0
  %907 = vmatpush1.msra.mxu0 %v289
  %908 = vmatprep.subr.mxu0 0.0
  %909 = vmatpush1.msra.mxu0 %v288
  %910 = vmatprep.subr.mxu0 0.0
  %911 = vmatpush1.msra.mxu0 %v287
  %912 = vmatprep.subr.mxu0 0.0
  %913 = vmatpush1.msra.mxu0 %v286
  %914 = vmatprep.subr.mxu0 0.0
  %915 = vmatpush2.msra.mxu0 0.0
  %916 = vmatprep.subr.mxu0 0.0
  %917 = vmatpush2.msra.mxu0 0.0
  %918 = vmatprep.subr.mxu0 0.0
  %919 = vmatpush2.msra.mxu0 0.0
  %920 = vmatprep.subr.mxu0 0.0
  %921 = vmatpush2.msra.mxu0 0.0
  %922 = vmatprep.subr.mxu0 0.0
  %923 = vmatpush2.msra.mxu0 0.0
  %924 = vmatprep.subr.mxu0 0.0
  %925 = vmatpush2.msra.mxu0 0.0
  %926 = vmatprep.subr.mxu0 0.0
  %927 = vmatpush2.msra.mxu0 0.0
  %928 = vmatprep.subr.mxu0 0.0
  %929 = vmatpush2.msra.mxu0 0.0
  %930 = vmatprep.subr.mxu0 0.0
  %931 = vmatpush2.msra.mxu0 0.0
  %932 = vmatprep.subr.mxu0 0.0
  %933 = vmatpush2.msra.mxu0 0.0
  %934 = vmatprep.subr.mxu0 0.0
  %935 = vmatpush2.msra.mxu0 0.0
  %936 = vmatprep.subr.mxu0 0.0
  %937 = vmatpush2.msra.mxu0 0.0
  %938 = vmatprep.subr.mxu0 0.0
  %939 = vmatpush2.msra.mxu0 0.0
  %940 = vmatprep.subr.mxu0 0.0
  %941 = vmatpush2.msra.mxu0 0.0
  %942 = vmatprep.subr.mxu0 0.0
  %943 = vmatpush2.msra.mxu0 0.0
  %944 = vmatprep.subr.mxu0 0.0
  %945 = vmatpush2.msra.mxu0 0.0
  %946 = vmatprep.mubr.f32.mxu0 0.0
  %947 = vmatmul.mubr.f32.gmra.mxu0 %v22
  %v948 = vpop.f32.mrf.mxu0
  %v949 = vadd.f32 %v804, %v948
  %v950 = vpop.f32.mrf.mxu0
  %951 = vmatprep.mubr.f32.mxu0 0.0
  %952 = vmatmul.mubr.f32.gmra.mxu0 %v31
  %v953 = vpop.f32.mrf.mxu0
  %v954 = vadd.f32 %v809, %v953
  %v955 = vpop.f32.mrf.mxu0
  %956 = vmatprep.mubr.f32.mxu0 0.0
  %957 = vmatmul.mubr.f32.gmra.mxu0 %v40
  %v958 = vpop.f32.mrf.mxu0
  %v959 = vadd.f32 %v814, %v958
  %v960 = vpop.f32.mrf.mxu0
  %961 = vmatprep.mubr.f32.mxu0 0.0
  %962 = vmatmul.mubr.f32.gmra.mxu0 %v49
  %v963 = vpop.f32.mrf.mxu0
  %v964 = vadd.f32 %v819, %v963
  %v965 = vpop.f32.mrf.mxu0
  %966 = vmatprep.mubr.f32.mxu0 0.0
  %967 = vmatmul.mubr.f32.gmra.mxu0 %v58
  %v968 = vpop.f32.mrf.mxu0
  %v969 = vadd.f32 %v824, %v968
  %v970 = vpop.f32.mrf.mxu0
  %971 = vmatprep.mubr.f32.mxu0 0.0
  %972 = vmatmul.mubr.f32.gmra.mxu0 %v67
  %v973 = vpop.f32.mrf.mxu0
  %v974 = vadd.f32 %v829, %v973
  %v975 = vpop.f32.mrf.mxu0
  %976 = vmatprep.mubr.f32.mxu0 0.0
  %977 = vmatmul.mubr.f32.gmra.mxu0 %v76
  %v978 = vpop.f32.mrf.mxu0
  %v979 = vadd.f32 %v834, %v978
  %v980 = vpop.f32.mrf.mxu0
  %981 = vmatprep.mubr.f32.mxu0 0.0
  %982 = vmatmul.mubr.f32.gmra.mxu0 %v85
  %v983 = vpop.f32.mrf.mxu0
  %v984 = vadd.f32 %v839, %v983
  %v985 = vpop.f32.mrf.mxu0
  %986 = vmatprep.mubr.f32.mxu0 0.0
  %987 = vmatmul.mubr.f32.gmra.mxu0 %v94
  %v988 = vpop.f32.mrf.mxu0
  %v989 = vadd.f32 %v844, %v988
  %v990 = vpop.f32.mrf.mxu0
  %991 = vmatprep.mubr.f32.mxu0 0.0
  %992 = vmatmul.mubr.f32.gmra.mxu0 %v103
  %v993 = vpop.f32.mrf.mxu0
  %v994 = vadd.f32 %v849, %v993
  %v995 = vpop.f32.mrf.mxu0
  %996 = vmatprep.mubr.f32.mxu0 0.0
  %997 = vmatmul.mubr.f32.gmra.mxu0 %v112
  %v998 = vpop.f32.mrf.mxu0
  %v999 = vadd.f32 %v854, %v998
  %v1000 = vpop.f32.mrf.mxu0
  %1001 = vmatprep.mubr.f32.mxu0 0.0
  %1002 = vmatmul.mubr.f32.gmra.mxu0 %v121
  %v1003 = vpop.f32.mrf.mxu0
  %v1004 = vadd.f32 %v859, %v1003
  %v1005 = vpop.f32.mrf.mxu0
  %1006 = vmatprep.mubr.f32.mxu0 0.0
  %1007 = vmatmul.mubr.f32.gmra.mxu0 %v130
  %v1008 = vpop.f32.mrf.mxu0
  %v1009 = vadd.f32 %v864, %v1008
  %v1010 = vpop.f32.mrf.mxu0
  %1011 = vmatprep.mubr.f32.mxu0 0.0
  %1012 = vmatmul.mubr.f32.gmra.mxu0 %v139
  %v1013 = vpop.f32.mrf.mxu0
  %v1014 = vadd.f32 %v869, %v1013
  %v1015 = vpop.f32.mrf.mxu0
  %1016 = vmatprep.mubr.f32.mxu0 0.0
  %1017 = vmatmul.mubr.f32.gmra.mxu0 %v148
  %v1018 = vpop.f32.mrf.mxu0
  %v1019 = vadd.f32 %v874, %v1018
  %v1020 = vpop.f32.mrf.mxu0
  %1021 = vmatprep.mubr.f32.mxu0 0.0
  %1022 = vmatmul.mubr.f32.gmra.mxu0 %v157
  %v1023 = vpop.f32.mrf.mxu0
  %v1024 = vadd.f32 %v879, %v1023
  %v1025 = vpop.f32.mrf.mxu0
  %1026 = vdwg.mxu0
  %1027 = vst [vmem:[%s2] sm:$0xff] %v949
  %1028 = vst [vmem:[%s2 + $0x8] sm:$0xff] %v954
  %1029 = vst [vmem:[%s2 + $0x10] sm:$0xff] %v959
  %1030 = vst [vmem:[%s2 + $0x18] sm:$0xff] %v964
  %1031 = vst [vmem:[%s2 + $0x20] sm:$0xff] %v969
  %1032 = vst [vmem:[%s2 + $0x28] sm:$0xff] %v974
  %1033 = vst [vmem:[%s2 + $0x30] sm:$0xff] %v979
  %1034 = vst [vmem:[%s2 + $0x38] sm:$0xff] %v984
  %1035 = vst [vmem:[%s2 + $0x40] sm:$0xff] %v989
  %1036 = vst [vmem:[%s2 + $0x48] sm:$0xff] %v994
  %1037 = vst [vmem:[%s2 + $0x50] sm:$0xff] %v999
  %1038 = vst [vmem:[%s2 + $0x58] sm:$0xff] %v1004
  %1039 = vst [vmem:[%s2 + $0x60] sm:$0xff] %v1009
  %1040 = vst [vmem:[%s2 + $0x68] sm:$0xff] %v1014
  %1041 = vst [vmem:[%s2 + $0x70] sm:$0xff] %v1019
  %1042 = vst [vmem:[%s2 + $0x78] sm:$0xff] %v1024
  %s1043 = smul.u32 0, 128
  %v1044 = vlaneseq
  %v1045 = vshrl.u32 %v1044, 7
  %v1046 = vadd.s32 %v1045, 8
  %v1047 = vadd.s32 %v1045, 16
  %v1048 = vadd.s32 %v1045, 24
  %v1049 = vadd.s32 %v1045, 32
  %v1050 = vadd.s32 %v1045, 40
  %v1051 = vadd.s32 %v1045, 48
  %v1052 = vadd.s32 %v1045, 56
  %v1053 = vadd.s32 %v1045, 64
  %v1054 = vadd.s32 %v1045, 72
  %v1055 = vadd.s32 %v1045, 80
  %v1056 = vadd.s32 %v1045, 88
  %v1057 = vadd.s32 %v1045, 96
  %v1058 = vadd.s32 %v1045, 104
  %v1059 = vadd.s32 %v1045, 112
  %v1060 = vadd.s32 %v1045, 120
  %v1061 = vstv %s1043
  %v1062 = vadd.s32 %v1061, %v1045
  %v1063 = vadd.s32 %v1061, %v1046
  %v1064 = vadd.s32 %v1061, %v1047
  %v1065 = vadd.s32 %v1061, %v1048
  %v1066 = vadd.s32 %v1061, %v1049
  %v1067 = vadd.s32 %v1061, %v1050
  %v1068 = vadd.s32 %v1061, %v1051
  %v1069 = vadd.s32 %v1061, %v1052
  %v1070 = vadd.s32 %v1061, %v1053
  %v1071 = vadd.s32 %v1061, %v1054
  %v1072 = vadd.s32 %v1061, %v1055
  %v1073 = vadd.s32 %v1061, %v1056
  %v1074 = vadd.s32 %v1061, %v1057
  %v1075 = vadd.s32 %v1061, %v1058
  %v1076 = vadd.s32 %v1061, %v1059
  %v1077 = vadd.s32 %v1061, %v1060
  %vm1078 = vcmp.lt.s32.totalorder %v1062, 128
  %vm1079 = vcmp.lt.s32.totalorder %v1063, 128
  %vm1080 = vcmp.lt.s32.totalorder %v1064, 128
  %vm1081 = vcmp.lt.s32.totalorder %v1065, 128
  %vm1082 = vcmp.lt.s32.totalorder %v1066, 128
  %vm1083 = vcmp.lt.s32.totalorder %v1067, 128
  %vm1084 = vcmp.lt.s32.totalorder %v1068, 128
  %vm1085 = vcmp.lt.s32.totalorder %v1069, 128
  %vm1086 = vcmp.lt.s32.totalorder %v1070, 128
  %vm1087 = vcmp.lt.s32.totalorder %v1071, 128
  %vm1088 = vcmp.lt.s32.totalorder %v1072, 128
  %vm1089 = vcmp.lt.s32.totalorder %v1073, 128
  %vm1090 = vcmp.lt.s32.totalorder %v1074, 128
  %vm1091 = vcmp.lt.s32.totalorder %v1075, 128
  %vm1092 = vcmp.lt.s32.totalorder %v1076, 128
  %vm1093 = vcmp.lt.s32.totalorder %v1077, 128
  %v1094 = vsel %vm1078, 1, 0
  %v1095 = vsel %vm1079, 1, 0
  %v1096 = vsel %vm1080, 1, 0
  %v1097 = vsel %vm1081, 1, 0
  %v1098 = vsel %vm1082, 1, 0
  %v1099 = vsel %vm1083, 1, 0
  %v1100 = vsel %vm1084, 1, 0
  %v1101 = vsel %vm1085, 1, 0
  %v1102 = vsel %vm1086, 1, 0
  %v1103 = vsel %vm1087, 1, 0
  %v1104 = vsel %vm1088, 1, 0
  %v1105 = vsel %vm1089, 1, 0
  %v1106 = vsel %vm1090, 1, 0
  %v1107 = vsel %vm1091, 1, 0
  %v1108 = vsel %vm1092, 1, 0
  %v1109 = vsel %vm1093, 1, 0
  %vm1110 = vcmp.eq.s32.totalorder %v1094, 1
  %vm1111 = vcmp.eq.s32.totalorder %v1095, 1
  %vm1112 = vcmp.eq.s32.totalorder %v1096, 1
  %vm1113 = vcmp.eq.s32.totalorder %v1097, 1
  %vm1114 = vcmp.eq.s32.totalorder %v1098, 1
  %vm1115 = vcmp.eq.s32.totalorder %v1099, 1
  %vm1116 = vcmp.eq.s32.totalorder %v1100, 1
  %vm1117 = vcmp.eq.s32.totalorder %v1101, 1
  %vm1118 = vcmp.eq.s32.totalorder %v1102, 1
  %vm1119 = vcmp.eq.s32.totalorder %v1103, 1
  %vm1120 = vcmp.eq.s32.totalorder %v1104, 1
  %vm1121 = vcmp.eq.s32.totalorder %v1105, 1
  %vm1122 = vcmp.eq.s32.totalorder %v1106, 1
  %vm1123 = vcmp.eq.s32.totalorder %v1107, 1
  %vm1124 = vcmp.eq.s32.totalorder %v1108, 1
  %vm1125 = vcmp.eq.s32.totalorder %v1109, 1
  %v1126 = vsel %vm1110, %v949, 0.0
  %v1127 = vsel %vm1111, %v954, 0.0
  %v1128 = vsel %vm1112, %v959, 0.0
  %v1129 = vsel %vm1113, %v964, 0.0
  %v1130 = vsel %vm1114, %v969, 0.0
  %v1131 = vsel %vm1115, %v974, 0.0
  %v1132 = vsel %vm1116, %v979, 0.0
  %v1133 = vsel %vm1117, %v984, 0.0
  %v1134 = vsel %vm1118, %v989, 0.0
  %v1135 = vsel %vm1119, %v994, 0.0
  %v1136 = vsel %vm1120, %v999, 0.0
  %v1137 = vsel %vm1121, %v1004, 0.0
  %v1138 = vsel %vm1122, %v1009, 0.0
  %v1139 = vsel %vm1123, %v1014, 0.0
  %v1140 = vsel %vm1124, %v1019, 0.0
  %v1141 = vsel %vm1125, %v1024, 0.0
  %v1142 = vadd.f32 %v1126, %v1127
  %v1143 = vadd.f32 %v1142, %v1128
  %v1144 = vadd.f32 %v1143, %v1129
  %v1145 = vadd.f32 %v1144, %v1130
  %v1146 = vadd.f32 %v1145, %v1131
  %v1147 = vadd.f32 %v1146, %v1132
  %v1148 = vadd.f32 %v1147, %v1133
  %v1149 = vadd.f32 %v1148, %v1134
  %v1150 = vadd.f32 %v1149, %v1135
  %v1151 = vadd.f32 %v1150, %v1136
  %v1152 = vadd.f32 %v1151, %v1137
  %v1153 = vadd.f32 %v1152, %v1138
  %v1154 = vadd.f32 %v1153, %v1139
  %v1155 = vadd.f32 %v1154, %v1140
  %v1156 = vadd.f32 %v1155, %v1141
  %v1157 = vrot.slane %v1156, 4
  %v1158 = vadd.f32 %v1156, %v1157
  %v1159 = vrot.slane %v1158, 2
  %v1160 = vadd.f32 %v1158, %v1159
  %v1161 = vrot.slane %v1160, 1
  %v1162 = vadd.f32 %v1160, %v1161
  %1163 = vst [vmem:[%s3] sm:$0xff] %v1162
  %v1164 = vmul.f32 %v1126, %v1126
  %v1165 = vmul.f32 %v1127, %v1127
  %v1166 = vmul.f32 %v1128, %v1128
  %v1167 = vmul.f32 %v1129, %v1129
  %v1168 = vmul.f32 %v1130, %v1130
  %v1169 = vmul.f32 %v1131, %v1131
  %v1170 = vmul.f32 %v1132, %v1132
  %v1171 = vmul.f32 %v1133, %v1133
  %v1172 = vmul.f32 %v1134, %v1134
  %v1173 = vmul.f32 %v1135, %v1135
  %v1174 = vmul.f32 %v1136, %v1136
  %v1175 = vmul.f32 %v1137, %v1137
  %v1176 = vmul.f32 %v1138, %v1138
  %v1177 = vmul.f32 %v1139, %v1139
  %v1178 = vmul.f32 %v1140, %v1140
  %v1179 = vmul.f32 %v1141, %v1141
  %v1180 = vadd.f32 %v1164, %v1165
  %v1181 = vadd.f32 %v1180, %v1166
  %v1182 = vadd.f32 %v1181, %v1167
  %v1183 = vadd.f32 %v1182, %v1168
  %v1184 = vadd.f32 %v1183, %v1169
  %v1185 = vadd.f32 %v1184, %v1170
  %v1186 = vadd.f32 %v1185, %v1171
  %v1187 = vadd.f32 %v1186, %v1172
  %v1188 = vadd.f32 %v1187, %v1173
  %v1189 = vadd.f32 %v1188, %v1174
  %v1190 = vadd.f32 %v1189, %v1175
  %v1191 = vadd.f32 %v1190, %v1176
  %v1192 = vadd.f32 %v1191, %v1177
  %v1193 = vadd.f32 %v1192, %v1178
  %v1194 = vadd.f32 %v1193, %v1179
  %v1195 = vrot.slane %v1194, 4
  %v1196 = vadd.f32 %v1194, %v1195
  %v1197 = vrot.slane %v1196, 2
  %v1198 = vadd.f32 %v1196, %v1197
  %v1199 = vrot.slane %v1198, 1
  %v1200 = vadd.f32 %v1198, %v1199
  %1201 = vst [vmem:[%s4] sm:$0xff] %v1200
  // Predicated region
  $region10: #{resblk_forward.3} parent=0 // pred_check
    _
  $region11: #{resblk_forward.3} parent=0 // pred_check_branch
    %1203 = sbr.rel (0) target = $region13
  $region12: #{resblk_forward.3} parent=0 // pred_region
    _
  $region13: #{resblk_forward.3} parent=0 // pred_fallthru
    _
  // Predicated region
  $region14: #{resblk_forward.3} parent=0 // pred_check
    _
  $region15: #{resblk_forward.3} parent=0 // pred_check_branch
    %1205 = sbr.rel (0) target = $region17
  $region16: #{resblk_forward.3} parent=0 // pred_region
    _
  $region17: #{resblk_forward.3} parent=0 // pred_fallthru
    _
  // Predicated region
  $region18: #{resblk_forward.3} parent=0 // pred_check
    _
  $region19: #{resblk_forward.3} parent=0 // pred_check_branch
    %1207 = sbr.rel (0) target = $region21
  $region20: #{resblk_forward.3} parent=0 // pred_region
    _
  $region21: #{resblk_forward.3} parent=0 // pred_fallthru
    _
  // Predicated region
  $region22: #{resblk_forward.3} parent=0 // pred_check
    _
  $region23: #{resblk_forward.3} parent=0 // pred_check_branch
    %1209 = sbr.rel (0) target = $region25
  $region24: #{resblk_forward.3} parent=0 // pred_region
    _
  $region25: #{resblk_forward.3} parent=0 // pred_fallthru
    _
  // Predicated region
  $region26: #{resblk_forward.3} parent=0 // pred_check
    _
  $region27: #{resblk_forward.3} parent=0 // pred_check_branch
    %1211 = sbr.rel (0) target = $region29
  $region28: #{resblk_forward.3} parent=0 // pred_region
    _
  $region29: #{resblk_forward.3} parent=0 // pred_fallthru
    _
  // Predicated region
  $region30: #{resblk_forward.3} parent=0 // pred_check
    _
  $region31: #{resblk_forward.3} parent=0 // pred_check_branch
    %1213 = sbr.rel (0) target = $region33
  $region32: #{resblk_forward.3} parent=0 // pred_region
    _
  $region33: #{resblk_forward.3} parent=0 // pred_fallthru
    _

// kernel: resblk_forward.4
$region0: #{resblk_forward.4}
  #allocation0 [shape = 'u32[]', space=smem, size = 0x4, offset = 0x4, fixed_abs, tag = 'smem constant byte address 0x4 - core index']
  #allocation1 [shape = 'u32[144,128]{1,0:T(1,128)}', space=vmem, size = 0x12000, scoped, tag = 'internal scratch']
  %s0 = inlined_call_operand.vmem [shape: f32[128,1152], index: 0, kind: input, shape index: {}]
  %s1 = inlined_call_operand.vmem [shape: f32[1,1152], index: 1, kind: input, shape index: {}]
  %s2 = inlined_call_operand.vmem [shape: f32[1,1152], index: 2, kind: input, shape index: {}]
  %s3 = inlined_call_operand.vmem [shape: f32[1152,128], index: 3, kind: input, shape index: {}]
  %s4 = inlined_call_operand.vmem [shape: f32[128,128], index: 4, kind: input, shape index: {}]
  %s5 = inlined_call_operand.vmem [shape: f32[128,128], index: 5, kind: input, shape index: {}]
  %s6 = inlined_call_operand.vmem [shape: f32[128,128], index: 6, kind: output, shape index: {0}]
  %s7 = inlined_call_operand.vmem [shape: f32[128,128], index: 7, kind: output, shape index: {1}]
  %s8 = inlined_call_operand.vmem [shape: f32[1,8,128], index: 8, kind: output, shape index: {2}]
  %s9 = inlined_call_operand.vmem [shape: f32[1,8,128], index: 9, kind: output, shape index: {3}]
  %s10 = inlined_call_operand.vmem [shape: f32[1,8,128], index: 10, kind: output, shape index: {4}]
  %s11 = inlined_call_operand.vmem [shape: f32[1,8,128], index: 11, kind: output, shape index: {5}]
  %12 = xla_tuple %s6, %s7, %s8, %s9, %s10, %s11
  %s13 = sld [smem:[#allocation0]]
  $region74: #{resblk_forward.4} parent=0
    _
  %s15 = ssub.s32 1, %s13
  %s16 = scalar_select 0, %s15, %s13
  // Predicated region
  $region2: #{resblk_forward.4} parent=0 // pred_check
    _
  $region3: #{resblk_forward.4} parent=0 // pred_check_branch
    %18 = sbr.rel (0) target = $region5
  $region4: #{resblk_forward.4} parent=0 // pred_region
    _
  $region5: #{resblk_forward.4} parent=0 // pred_fallthru
    _
  // Predicated region
  $region6: #{resblk_forward.4} parent=0 // pred_check
    _
  $region7: #{resblk_forward.4} parent=0 // pred_check_branch
    %20 = sbr.rel (0) target = $region9
  $region8: #{resblk_forward.4} parent=0 // pred_region
    _
  $region9: #{resblk_forward.4} parent=0 // pred_fallthru
    _
  // Predicated region
  $region10: #{resblk_forward.4} parent=0 // pred_check
    _
  $region11: #{resblk_forward.4} parent=0 // pred_check_branch
    %22 = sbr.rel (0) target = $region13
  $region12: #{resblk_forward.4} parent=0 // pred_region
    _
  $region13: #{resblk_forward.4} parent=0 // pred_fallthru
    _
  // Predicated region
  $region14: #{resblk_forward.4} parent=0 // pred_check
    _
  $region15: #{resblk_forward.4} parent=0 // pred_check_branch
    %24 = sbr.rel (0) target = $region17
  $region16: #{resblk_forward.4} parent=0 // pred_region
    _
  $region17: #{resblk_forward.4} parent=0 // pred_fallthru
    _
  // Predicated region
  $region18: #{resblk_forward.4} parent=0 // pred_check
    _
  $region19: #{resblk_forward.4} parent=0 // pred_check_branch
    %26 = sbr.rel (0) target = $region21
  $region20: #{resblk_forward.4} parent=0 // pred_region
    _
  $region21: #{resblk_forward.4} parent=0 // pred_fallthru
    _
  // Predicated region
  $region22: #{resblk_forward.4} parent=0 // pred_check
    _
  $region23: #{resblk_forward.4} parent=0 // pred_check_branch
    %28 = sbr.rel (0) target = $region25
  $region24: #{resblk_forward.4} parent=0 // pred_region
    _
  $region25: #{resblk_forward.4} parent=0 // pred_fallthru
    _
  %v29 = vld [vmem:[%s0] sm:$0xff]
  %v30 = vld [vmem:[%s0 + $0x8] sm:$0xff]
  %v31 = vld [vmem:[%s0 + $0x10] sm:$0xff]
  %v32 = vld [vmem:[%s0 + $0x18] sm:$0xff]
  %v33 = vld [vmem:[%s0 + $0x20] sm:$0xff]
  %v34 = vld [vmem:[%s0 + $0x28] sm:$0xff]
  %v35 = vld [vmem:[%s0 + $0x30] sm:$0xff]
  %v36 = vld [vmem:[%s0 + $0x38] sm:$0xff]
  %v37 = vld [vmem:[%s0 + $0x40] sm:$0xff]
  %v38 = vld [vmem:[%s0 + $0x48] sm:$0xff]
  %v39 = vld [vmem:[%s0 + $0x50] sm:$0xff]
  %v40 = vld [vmem:[%s0 + $0x58] sm:$0xff]
  %v41 = vld [vmem:[%s0 + $0x60] sm:$0xff]
  %v42 = vld [vmem:[%s0 + $0x68] sm:$0xff]
  %v43 = vld [vmem:[%s0 + $0x70] sm:$0xff]
  %v44 = vld [vmem:[%s0 + $0x78] sm:$0xff]
  %v45 = vld [vmem:[%s0 + $0x80] sm:$0xff]
  %v46 = vld [vmem:[%s0 + $0x88] sm:$0xff]
  %v47 = vld [vmem:[%s0 + $0x90] sm:$0xff]
  %v48 = vld [vmem:[%s0 + $0x98] sm:$0xff]
  %v49 = vld [vmem:[%s0 + $0xa0] sm:$0xff]
  %v50 = vld [vmem:[%s0 + $0xa8] sm:$0xff]
  %v51 = vld [vmem:[%s0 + $0xb0] sm:$0xff]
  %v52 = vld [vmem:[%s0 + $0xb8] sm:$0xff]
  %v53 = vld [vmem:[%s0 + $0xc0] sm:$0xff]
  %v54 = vld [vmem:[%s0 + $0xc8] sm:$0xff]
  %v55 = vld [vmem:[%s0 + $0xd0] sm:$0xff]
  %v56 = vld [vmem:[%s0 + $0xd8] sm:$0xff]
  %v57 = vld [vmem:[%s0 + $0xe0] sm:$0xff]
  %v58 = vld [vmem:[%s0 + $0xe8] sm:$0xff]
  %v59 = vld [vmem:[%s0 + $0xf0] sm:$0xff]
  %v60 = vld [vmem:[%s0 + $0xf8] sm:$0xff]
  %v61 = vld [vmem:[%s0 + $0x100] sm:$0xff]
  %v62 = vld [vmem:[%s0 + $0x108] sm:$0xff]
  %v63 = vld [vmem:[%s0 + $0x110] sm:$0xff]
  %v64 = vld [vmem:[%s0 + $0x118] sm:$0xff]
  %v65 = vld [vmem:[%s0 + $0x120] sm:$0xff]
  %v66 = vld [vmem:[%s0 + $0x128] sm:$0xff]
  %v67 = vld [vmem:[%s0 + $0x130] sm:$0xff]
  %v68 = vld [vmem:[%s0 + $0x138] sm:$0xff]
  %v69 = vld [vmem:[%s0 + $0x140] sm:$0xff]
  %v70 = vld [vmem:[%s0 + $0x148] sm:$0xff]
  %v71 = vld [vmem:[%s0 + $0x150] sm:$0xff]
  %v72 = vld [vmem:[%s0 + $0x158] sm:$0xff]
  %v73 = vld [vmem:[%s0 + $0x160] sm:$0xff]
  %v74 = vld [vmem:[%s0 + $0x168] sm:$0xff]
  %v75 = vld [vmem:[%s0 + $0x170] sm:$0xff]
  %v76 = vld [vmem:[%s0 + $0x178] sm:$0xff]
  %v77 = vld [vmem:[%s0 + $0x180] sm:$0xff]
  %v78 = vld [vmem:[%s0 + $0x188] sm:$0xff]
  %v79 = vld [vmem:[%s0 + $0x190] sm:$0xff]
  %v80 = vld [vmem:[%s0 + $0x198] sm:$0xff]
  %v81 = vld [vmem:[%s0 + $0x1a0] sm:$0xff]
  %v82 = vld [vmem:[%s0 + $0x1a8] sm:$0xff]
  %v83 = vld [vmem:[%s0 + $0x1b0] sm:$0xff]
  %v84 = vld [vmem:[%s0 + $0x1b8] sm:$0xff]
  %v85 = vld [vmem:[%s0 + $0x1c0] sm:$0xff]
  %v86 = vld [vmem:[%s0 + $0x1c8] sm:$0xff]
  %v87 = vld [vmem:[%s0 + $0x1d0] sm:$0xff]
  %v88 = vld [vmem:[%s0 + $0x1d8] sm:$0xff]
  %v89 = vld [vmem:[%s0 + $0x1e0] sm:$0xff]
  %v90 = vld [vmem:[%s0 + $0x1e8] sm:$0xff]
  %v91 = vld [vmem:[%s0 + $0x1f0] sm:$0xff]
  %v92 = vld [vmem:[%s0 + $0x1f8] sm:$0xff]
  %v93 = vld [vmem:[%s0 + $0x200] sm:$0xff]
  %v94 = vld [vmem:[%s0 + $0x208] sm:$0xff]
  %v95 = vld [vmem:[%s0 + $0x210] sm:$0xff]
  %v96 = vld [vmem:[%s0 + $0x218] sm:$0xff]
  %v97 = vld [vmem:[%s0 + $0x220] sm:$0xff]
  %v98 = vld [vmem:[%s0 + $0x228] sm:$0xff]
  %v99 = vld [vmem:[%s0 + $0x230] sm:$0xff]
  %v100 = vld [vmem:[%s0 + $0x238] sm:$0xff]
  %v101 = vld [vmem:[%s0 + $0x240] sm:$0xff]
  %v102 = vld [vmem:[%s0 + $0x248] sm:$0xff]
  %v103 = vld [vmem:[%s0 + $0x250] sm:$0xff]
  %v104 = vld [vmem:[%s0 + $0x258] sm:$0xff]
  %v105 = vld [vmem:[%s0 + $0x260] sm:$0xff]
  %v106 = vld [vmem:[%s0 + $0x268] sm:$0xff]
  %v107 = vld [vmem:[%s0 + $0x270] sm:$0xff]
  %v108 = vld [vmem:[%s0 + $0x278] sm:$0xff]
  %v109 = vld [vmem:[%s0 + $0x280] sm:$0xff]
  %v110 = vld [vmem:[%s0 + $0x288] sm:$0xff]
  %v111 = vld [vmem:[%s0 + $0x290] sm:$0xff]
  %v112 = vld [vmem:[%s0 + $0x298] sm:$0xff]
  %v113 = vld [vmem:[%s0 + $0x2a0] sm:$0xff]
  %v114 = vld [vmem:[%s0 + $0x2a8] sm:$0xff]
  %v115 = vld [vmem:[%s0 + $0x2b0] sm:$0xff]
  %v116 = vld [vmem:[%s0 + $0x2b8] sm:$0xff]
  %v117 = vld [vmem:[%s0 + $0x2c0] sm:$0xff]
  %v118 = vld [vmem:[%s0 + $0x2c8] sm:$0xff]
  %v119 = vld [vmem:[%s0 + $0x2d0] sm:$0xff]
  %v120 = vld [vmem:[%s0 + $0x2d8] sm:$0xff]
  %v121 = vld [vmem:[%s0 + $0x2e0] sm:$0xff]
  %v122 = vld [vmem:[%s0 + $0x2e8] sm:$0xff]
  %v123 = vld [vmem:[%s0 + $0x2f0] sm:$0xff]
  %v124 = vld [vmem:[%s0 + $0x2f8] sm:$0xff]
  %v125 = vld [vmem:[%s0 + $0x300] sm:$0xff]
  %v126 = vld [vmem:[%s0 + $0x308] sm:$0xff]
  %v127 = vld [vmem:[%s0 + $0x310] sm:$0xff]
  %v128 = vld [vmem:[%s0 + $0x318] sm:$0xff]
  %v129 = vld [vmem:[%s0 + $0x320] sm:$0xff]
  %v130 = vld [vmem:[%s0 + $0x328] sm:$0xff]
  %v131 = vld [vmem:[%s0 + $0x330] sm:$0xff]
  %v132 = vld [vmem:[%s0 + $0x338] sm:$0xff]
  %v133 = vld [vmem:[%s0 + $0x340] sm:$0xff]
  %v134 = vld [vmem:[%s0 + $0x348] sm:$0xff]
  %v135 = vld [vmem:[%s0 + $0x350] sm:$0xff]
  %v136 = vld [vmem:[%s0 + $0x358] sm:$0xff]
  %v137 = vld [vmem:[%s0 + $0x360] sm:$0xff]
  %v138 = vld [vmem:[%s0 + $0x368] sm:$0xff]
  %v139 = vld [vmem:[%s0 + $0x370] sm:$0xff]
  %v140 = vld [vmem:[%s0 + $0x378] sm:$0xff]
  %v141 = vld [vmem:[%s0 + $0x380] sm:$0xff]
  %v142 = vld [vmem:[%s0 + $0x388] sm:$0xff]
  %v143 = vld [vmem:[%s0 + $0x390] sm:$0xff]
  %v144 = vld [vmem:[%s0 + $0x398] sm:$0xff]
  %v145 = vld [vmem:[%s0 + $0x3a0] sm:$0xff]
  %v146 = vld [vmem:[%s0 + $0x3a8] sm:$0xff]
  %v147 = vld [vmem:[%s0 + $0x3b0] sm:$0xff]
  %v148 = vld [vmem:[%s0 + $0x3b8] sm:$0xff]
  %v149 = vld [vmem:[%s0 + $0x3c0] sm:$0xff]
  %v150 = vld [vmem:[%s0 + $0x3c8] sm:$0xff]
  %v151 = vld [vmem:[%s0 + $0x3d0] sm:$0xff]
  %v152 = vld [vmem:[%s0 + $0x3d8] sm:$0xff]
  %v153 = vld [vmem:[%s0 + $0x3e0] sm:$0xff]
  %v154 = vld [vmem:[%s0 + $0x3e8] sm:$0xff]
  %v155 = vld [vmem:[%s0 + $0x3f0] sm:$0xff]
  %v156 = vld [vmem:[%s0 + $0x3f8] sm:$0xff]
  %v157 = vld [vmem:[%s0 + $0x400] sm:$0xff]
  %v158 = vld [vmem:[%s0 + $0x408] sm:$0xff]
  %v159 = vld [vmem:[%s0 + $0x410] sm:$0xff]
  %v160 = vld [vmem:[%s0 + $0x418] sm:$0xff]
  %v161 = vld [vmem:[%s0 + $0x420] sm:$0xff]
  %v162 = vld [vmem:[%s0 + $0x428] sm:$0xff]
  %v163 = vld [vmem:[%s0 + $0x430] sm:$0xff]
  %v164 = vld [vmem:[%s0 + $0x438] sm:$0xff]
  %v165 = vld [vmem:[%s0 + $0x440] sm:$0xff]
  %v166 = vld [vmem:[%s0 + $0x448] sm:$0xff]
  %v167 = vld [vmem:[%s0 + $0x450] sm:$0xff]
  %v168 = vld [vmem:[%s0 + $0x458] sm:$0xff]
  %v169 = vld [vmem:[%s0 + $0x460] sm:$0xff]
  %v170 = vld [vmem:[%s0 + $0x468] sm:$0xff]
  %v171 = vld [vmem:[%s0 + $0x470] sm:$0xff]
  %v172 = vld [vmem:[%s0 + $0x478] sm:$0xff]
  %v173 = vld [vmem:[%s1] sm:$0xff]
  %v174 = vld [vmem:[%s1 + $0x8] sm:$0x1]
  %v177 = vlaneseq
  %v178 = vshrl.u32 %v177, 7
  %v179 = vsub.s32 0, %v178
  %v180 = vrot.slane %v173, %v179
  %v181 = vlaneseq
  %v182 = vshrl.u32 %v181, 7
  %v183 = vsub.s32 1, %v182
  %v184 = vrot.slane %v173, %v183
  %v185 = vlaneseq
  %v186 = vshrl.u32 %v185, 7
  %v187 = vsub.s32 2, %v186
  %v188 = vrot.slane %v173, %v187
  %v189 = vlaneseq
  %v190 = vshrl.u32 %v189, 7
  %v191 = vsub.s32 3, %v190
  %v192 = vrot.slane %v173, %v191
  %v193 = vlaneseq
  %v194 = vshrl.u32 %v193, 7
  %v195 = vsub.s32 4, %v194
  %v196 = vrot.slane %v173, %v195
  %v197 = vlaneseq
  %v198 = vshrl.u32 %v197, 7
  %v199 = vsub.s32 5, %v198
  %v200 = vrot.slane %v173, %v199
  %v201 = vlaneseq
  %v202 = vshrl.u32 %v201, 7
  %v203 = vsub.s32 6, %v202
  %v204 = vrot.slane %v173, %v203
  %v205 = vlaneseq
  %v206 = vshrl.u32 %v205, 7
  %v207 = vsub.s32 7, %v206
  %v208 = vrot.slane %v173, %v207
  %v209 = vlaneseq
  %v210 = vshrl.u32 %v209, 7
  %v211 = vsub.s32 0, %v210
  %v212 = vrot.slane %v174, %v211
  %v222 = vmul.f32 %v29, %v180
  %v223 = vmul.f32 %v30, %v184
  %v224 = vmul.f32 %v31, %v188
  %v225 = vmul.f32 %v32, %v192
  %v226 = vmul.f32 %v33, %v196
  %v227 = vmul.f32 %v34, %v200
  %v228 = vmul.f32 %v35, %v204
  %v229 = vmul.f32 %v36, %v208
  %v230 = vmul.f32 %v37, %v212
  %v231 = vmul.f32 %v38, %v180
  %v232 = vmul.f32 %v39, %v184
  %v233 = vmul.f32 %v40, %v188
  %v234 = vmul.f32 %v41, %v192
  %v235 = vmul.f32 %v42, %v196
  %v236 = vmul.f32 %v43, %v200
  %v237 = vmul.f32 %v44, %v204
  %v238 = vmul.f32 %v45, %v208
  %v239 = vmul.f32 %v46, %v212
  %v240 = vmul.f32 %v47, %v180
  %v241 = vmul.f32 %v48, %v184
  %v242 = vmul.f32 %v49, %v188
  %v243 = vmul.f32 %v50, %v192
  %v244 = vmul.f32 %v51, %v196
  %v245 = vmul.f32 %v52, %v200
  %v246 = vmul.f32 %v53, %v204
  %v247 = vmul.f32 %v54, %v208
  %v248 = vmul.f32 %v55, %v212
  %v249 = vmul.f32 %v56, %v180
  %v250 = vmul.f32 %v57, %v184
  %v251 = vmul.f32 %v58, %v188
  %v252 = vmul.f32 %v59, %v192
  %v253 = vmul.f32 %v60, %v196
  %v254 = vmul.f32 %v61, %v200
  %v255 = vmul.f32 %v62, %v204
  %v256 = vmul.f32 %v63, %v208
  %v257 = vmul.f32 %v64, %v212
  %v258 = vmul.f32 %v65, %v180
  %v259 = vmul.f32 %v66, %v184
  %v260 = vmul.f32 %v67, %v188
  %v261 = vmul.f32 %v68, %v192
  %v262 = vmul.f32 %v69, %v196
  %v263 = vmul.f32 %v70, %v200
  %v264 = vmul.f32 %v71, %v204
  %v265 = vmul.f32 %v72, %v208
  %v266 = vmul.f32 %v73, %v212
  %v267 = vmul.f32 %v74, %v180
  %v268 = vmul.f32 %v75, %v184
  %v269 = vmul.f32 %v76, %v188
  %v270 = vmul.f32 %v77, %v192
  %v271 = vmul.f32 %v78, %v196
  %v272 = vmul.f32 %v79, %v200
  %v273 = vmul.f32 %v80, %v204
  %v274 = vmul.f32 %v81, %v208
  %v275 = vmul.f32 %v82, %v212
  %v276 = vmul.f32 %v83, %v180
  %v277 = vmul.f32 %v84, %v184
  %v278 = vmul.f32 %v85, %v188
  %v279 = vmul.f32 %v86, %v192
  %v280 = vmul.f32 %v87, %v196
  %v281 = vmul.f32 %v88, %v200
  %v282 = vmul.f32 %v89, %v204
  %v283 = vmul.f32 %v90, %v208
  %v284 = vmul.f32 %v91, %v212
  %v285 = vmul.f32 %v92, %v180
  %v286 = vmul.f32 %v93, %v184
  %v287 = vmul.f32 %v94, %v188
  %v288 = vmul.f32 %v95, %v192
  %v289 = vmul.f32 %v96, %v196
  %v290 = vmul.f32 %v97, %v200
  %v291 = vmul.f32 %v98, %v204
  %v292 = vmul.f32 %v99, %v208
  %v293 = vmul.f32 %v100, %v212
  %v294 = vmul.f32 %v101, %v180
  %v295 = vmul.f32 %v102, %v184
  %v296 = vmul.f32 %v103, %v188
  %v297 = vmul.f32 %v104, %v192
  %v298 = vmul.f32 %v105, %v196
  %v299 = vmul.f32 %v106, %v200
  %v300 = vmul.f32 %v107, %v204
  %v301 = vmul.f32 %v108, %v208
  %v302 = vmul.f32 %v109, %v212
  %v303 = vmul.f32 %v110, %v180
  %v304 = vmul.f32 %v111, %v184
  %v305 = vmul.f32 %v112, %v188
  %v306 = vmul.f32 %v113, %v192
  %v307 = vmul.f32 %v114, %v196
  %v308 = vmul.f32 %v115, %v200
  %v309 = vmul.f32 %v116, %v204
  %v310 = vmul.f32 %v117, %v208
  %v311 = vmul.f32 %v118, %v212
  %v312 = vmul.f32 %v119, %v180
  %v313 = vmul.f32 %v120, %v184
  %v314 = vmul.f32 %v121, %v188
  %v315 = vmul.f32 %v122, %v192
  %v316 = vmul.f32 %v123, %v196
  %v317 = vmul.f32 %v124, %v200
  %v318 = vmul.f32 %v125, %v204
  %v319 = vmul.f32 %v126, %v208
  %v320 = vmul.f32 %v127, %v212
  %v321 = vmul.f32 %v128, %v180
  %v322 = vmul.f32 %v129, %v184
  %v323 = vmul.f32 %v130, %v188
  %v324 = vmul.f32 %v131, %v192
  %v325 = vmul.f32 %v132, %v196
  %v326 = vmul.f32 %v133, %v200
  %v327 = vmul.f32 %v134, %v204
  %v328 = vmul.f32 %v135, %v208
  %v329 = vmul.f32 %v136, %v212
  %v330 = vmul.f32 %v137, %v180
  %v331 = vmul.f32 %v138, %v184
  %v332 = vmul.f32 %v139, %v188
  %v333 = vmul.f32 %v140, %v192
  %v334 = vmul.f32 %v141, %v196
  %v335 = vmul.f32 %v142, %v200
  %v336 = vmul.f32 %v143, %v204
  %v337 = vmul.f32 %v144, %v208
  %v338 = vmul.f32 %v145, %v212
  %v339 = vmul.f32 %v146, %v180
  %v340 = vmul.f32 %v147, %v184
  %v341 = vmul.f32 %v148, %v188
  %v342 = vmul.f32 %v149, %v192
  %v343 = vmul.f32 %v150, %v196
  %v344 = vmul.f32 %v151, %v200
  %v345 = vmul.f32 %v152, %v204
  %v346 = vmul.f32 %v153, %v208
  %v347 = vmul.f32 %v154, %v212
  %v348 = vmul.f32 %v155, %v180
  %v349 = vmul.f32 %v156, %v184
  %v350 = vmul.f32 %v157, %v188
  %v351 = vmul.f32 %v158, %v192
  %v352 = vmul.f32 %v159, %v196
  %v353 = vmul.f32 %v160, %v200
  %v354 = vmul.f32 %v161, %v204
  %v355 = vmul.f32 %v162, %v208
  %v356 = vmul.f32 %v163, %v212
  %v357 = vmul.f32 %v164, %v180
  %v358 = vmul.f32 %v165, %v184
  %v359 = vmul.f32 %v166, %v188
  %v360 = vmul.f32 %v167, %v192
  %v361 = vmul.f32 %v168, %v196
  %v362 = vmul.f32 %v169, %v200
  %v363 = vmul.f32 %v170, %v204
  %v364 = vmul.f32 %v171, %v208
  %v365 = vmul.f32 %v172, %v212
  %v366 = vld [vmem:[%s2] sm:$0xff]
  %v367 = vld [vmem:[%s2 + $0x8] sm:$0x1]
  %v370 = vlaneseq
  %v371 = vshrl.u32 %v370, 7
  %v372 = vsub.s32 0, %v371
  %v373 = vrot.slane %v366, %v372
  %v374 = vlaneseq
  %v375 = vshrl.u32 %v374, 7
  %v376 = vsub.s32 1, %v375
  %v377 = vrot.slane %v366, %v376
  %v378 = vlaneseq
  %v379 = vshrl.u32 %v378, 7
  %v380 = vsub.s32 2, %v379
  %v381 = vrot.slane %v366, %v380
  %v382 = vlaneseq
  %v383 = vshrl.u32 %v382, 7
  %v384 = vsub.s32 3, %v383
  %v385 = vrot.slane %v366, %v384
  %v386 = vlaneseq
  %v387 = vshrl.u32 %v386, 7
  %v388 = vsub.s32 4, %v387
  %v389 = vrot.slane %v366, %v388
  %v390 = vlaneseq
  %v391 = vshrl.u32 %v390, 7
  %v392 = vsub.s32 5, %v391
  %v393 = vrot.slane %v366, %v392
  %v394 = vlaneseq
  %v395 = vshrl.u32 %v394, 7
  %v396 = vsub.s32 6, %v395
  %v397 = vrot.slane %v366, %v396
  %v398 = vlaneseq
  %v399 = vshrl.u32 %v398, 7
  %v400 = vsub.s32 7, %v399
  %v401 = vrot.slane %v366, %v400
  %v402 = vlaneseq
  %v403 = vshrl.u32 %v402, 7
  %v404 = vsub.s32 0, %v403
  %v405 = vrot.slane %v367, %v404
  %v415 = vadd.f32 %v222, %v373
  %v416 = vadd.f32 %v223, %v377
  %v417 = vadd.f32 %v224, %v381
  %v418 = vadd.f32 %v225, %v385
  %v419 = vadd.f32 %v226, %v389
  %v420 = vadd.f32 %v227, %v393
  %v421 = vadd.f32 %v228, %v397
  %v422 = vadd.f32 %v229, %v401
  %v423 = vadd.f32 %v230, %v405
  %v424 = vadd.f32 %v231, %v373
  %v425 = vadd.f32 %v232, %v377
  %v426 = vadd.f32 %v233, %v381
  %v427 = vadd.f32 %v234, %v385
  %v428 = vadd.f32 %v235, %v389
  %v429 = vadd.f32 %v236, %v393
  %v430 = vadd.f32 %v237, %v397
  %v431 = vadd.f32 %v238, %v401
  %v432 = vadd.f32 %v239, %v405
  %v433 = vadd.f32 %v240, %v373
  %v434 = vadd.f32 %v241, %v377
  %v435 = vadd.f32 %v242, %v381
  %v436 = vadd.f32 %v243, %v385
  %v437 = vadd.f32 %v244, %v389
  %v438 = vadd.f32 %v245, %v393
  %v439 = vadd.f32 %v246, %v397
  %v440 = vadd.f32 %v247, %v401
  %v441 = vadd.f32 %v248, %v405
  %v442 = vadd.f32 %v249, %v373
  %v443 = vadd.f32 %v250, %v377
  %v444 = vadd.f32 %v251, %v381
  %v445 = vadd.f32 %v252, %v385
  %v446 = vadd.f32 %v253, %v389
  %v447 = vadd.f32 %v254, %v393
  %v448 = vadd.f32 %v255, %v397
  %v449 = vadd.f32 %v256, %v401
  %v450 = vadd.f32 %v257, %v405
  %v451 = vadd.f32 %v258, %v373
  %v452 = vadd.f32 %v259, %v377
  %v453 = vadd.f32 %v260, %v381
  %v454 = vadd.f32 %v261, %v385
  %v455 = vadd.f32 %v262, %v389
  %v456 = vadd.f32 %v263, %v393
  %v457 = vadd.f32 %v264, %v397
  %v458 = vadd.f32 %v265, %v401
  %v459 = vadd.f32 %v266, %v405
  %v460 = vadd.f32 %v267, %v373
  %v461 = vadd.f32 %v268, %v377
  %v462 = vadd.f32 %v269, %v381
  %v463 = vadd.f32 %v270, %v385
  %v464 = vadd.f32 %v271, %v389
  %v465 = vadd.f32 %v272, %v393
  %v466 = vadd.f32 %v273, %v397
  %v467 = vadd.f32 %v274, %v401
  %v468 = vadd.f32 %v275, %v405
  %v469 = vadd.f32 %v276, %v373
  %v470 = vadd.f32 %v277, %v377
  %v471 = vadd.f32 %v278, %v381
  %v472 = vadd.f32 %v279, %v385
  %v473 = vadd.f32 %v280, %v389
  %v474 = vadd.f32 %v281, %v393
  %v475 = vadd.f32 %v282, %v397
  %v476 = vadd.f32 %v283, %v401
  %v477 = vadd.f32 %v284, %v405
  %v478 = vadd.f32 %v285, %v373
  %v479 = vadd.f32 %v286, %v377
  %v480 = vadd.f32 %v287, %v381
  %v481 = vadd.f32 %v288, %v385
  %v482 = vadd.f32 %v289, %v389
  %v483 = vadd.f32 %v290, %v393
  %v484 = vadd.f32 %v291, %v397
  %v485 = vadd.f32 %v292, %v401
  %v486 = vadd.f32 %v293, %v405
  %v487 = vadd.f32 %v294, %v373
  %v488 = vadd.f32 %v295, %v377
  %v489 = vadd.f32 %v296, %v381
  %v490 = vadd.f32 %v297, %v385
  %v491 = vadd.f32 %v298, %v389
  %v492 = vadd.f32 %v299, %v393
  %v493 = vadd.f32 %v300, %v397
  %v494 = vadd.f32 %v301, %v401
  %v495 = vadd.f32 %v302, %v405
  %v496 = vadd.f32 %v303, %v373
  %v497 = vadd.f32 %v304, %v377
  %v498 = vadd.f32 %v305, %v381
  %v499 = vadd.f32 %v306, %v385
  %v500 = vadd.f32 %v307, %v389
  %v501 = vadd.f32 %v308, %v393
  %v502 = vadd.f32 %v309, %v397
  %v503 = vadd.f32 %v310, %v401
  %v504 = vadd.f32 %v311, %v405
  %v505 = vadd.f32 %v312, %v373
  %v506 = vadd.f32 %v313, %v377
  %v507 = vadd.f32 %v314, %v381
  %v508 = vadd.f32 %v315, %v385
  %v509 = vadd.f32 %v316, %v389
  %v510 = vadd.f32 %v317, %v393
  %v511 = vadd.f32 %v318, %v397
  %v512 = vadd.f32 %v319, %v401
  %v513 = vadd.f32 %v320, %v405
  %v514 = vadd.f32 %v321, %v373
  %v515 = vadd.f32 %v322, %v377
  %v516 = vadd.f32 %v323, %v381
  %v517 = vadd.f32 %v324, %v385
  %v518 = vadd.f32 %v325, %v389
  %v519 = vadd.f32 %v326, %v393
  %v520 = vadd.f32 %v327, %v397
  %v521 = vadd.f32 %v328, %v401
  %v522 = vadd.f32 %v329, %v405
  %v523 = vadd.f32 %v330, %v373
  %v524 = vadd.f32 %v331, %v377
  %v525 = vadd.f32 %v332, %v381
  %v526 = vadd.f32 %v333, %v385
  %v527 = vadd.f32 %v334, %v389
  %v528 = vadd.f32 %v335, %v393
  %v529 = vadd.f32 %v336, %v397
  %v530 = vadd.f32 %v337, %v401
  %v531 = vadd.f32 %v338, %v405
  %v532 = vadd.f32 %v339, %v373
  %v533 = vadd.f32 %v340, %v377
  %v534 = vadd.f32 %v341, %v381
  %v535 = vadd.f32 %v342, %v385
  %v536 = vadd.f32 %v343, %v389
  %v537 = vadd.f32 %v344, %v393
  %v538 = vadd.f32 %v345, %v397
  %v539 = vadd.f32 %v346, %v401
  %v540 = vadd.f32 %v347, %v405
  %v541 = vadd.f32 %v348, %v373
  %v542 = vadd.f32 %v349, %v377
  %v543 = vadd.f32 %v350, %v381
  %v544 = vadd.f32 %v351, %v385
  %v545 = vadd.f32 %v352, %v389
  %v546 = vadd.f32 %v353, %v393
  %v547 = vadd.f32 %v354, %v397
  %v548 = vadd.f32 %v355, %v401
  %v549 = vadd.f32 %v356, %v405
  %v550 = vadd.f32 %v357, %v373
  %v551 = vadd.f32 %v358, %v377
  %v552 = vadd.f32 %v359, %v381
  %v553 = vadd.f32 %v360, %v385
  %v554 = vadd.f32 %v361, %v389
  %v555 = vadd.f32 %v362, %v393
  %v556 = vadd.f32 %v363, %v397
  %v557 = vadd.f32 %v364, %v401
  %v558 = vadd.f32 %v365, %v405
  %v559 = vmax.f32 %v415, 0.0
  %v560 = vmax.f32 %v416, 0.0
  %v561 = vmax.f32 %v417, 0.0
  %v562 = vmax.f32 %v418, 0.0
  %v563 = vmax.f32 %v419, 0.0
  %v564 = vmax.f32 %v420, 0.0
  %v565 = vmax.f32 %v421, 0.0
  %v566 = vmax.f32 %v422, 0.0
  %v567 = vmax.f32 %v423, 0.0
  %v568 = vmax.f32 %v424, 0.0
  %v569 = vmax.f32 %v425, 0.0
  %v570 = vmax.f32 %v426, 0.0
  %v571 = vmax.f32 %v427, 0.0
  %v572 = vmax.f32 %v428, 0.0
  %v573 = vmax.f32 %v429, 0.0
  %v574 = vmax.f32 %v430, 0.0
  %v575 = vmax.f32 %v431, 0.0
  %v576 = vmax.f32 %v432, 0.0
  %v577 = vmax.f32 %v433, 0.0
  %v578 = vmax.f32 %v434, 0.0
  %v579 = vmax.f32 %v435, 0.0
  %v580 = vmax.f32 %v436, 0.0
  %v581 = vmax.f32 %v437, 0.0
  %v582 = vmax.f32 %v438, 0.0
  %v583 = vmax.f32 %v439, 0.0
  %v584 = vmax.f32 %v440, 0.0
  %v585 = vmax.f32 %v441, 0.0
  %v586 = vmax.f32 %v442, 0.0
  %v587 = vmax.f32 %v443, 0.0
  %v588 = vmax.f32 %v444, 0.0
  %v589 = vmax.f32 %v445, 0.0
  %v590 = vmax.f32 %v446, 0.0
  %v591 = vmax.f32 %v447, 0.0
  %v592 = vmax.f32 %v448, 0.0
  %v593 = vmax.f32 %v449, 0.0
  %v594 = vmax.f32 %v450, 0.0
  %v595 = vmax.f32 %v451, 0.0
  %v596 = vmax.f32 %v452, 0.0
  %v597 = vmax.f32 %v453, 0.0
  %v598 = vmax.f32 %v454, 0.0
  %v599 = vmax.f32 %v455, 0.0
  %v600 = vmax.f32 %v456, 0.0
  %v601 = vmax.f32 %v457, 0.0
  %v602 = vmax.f32 %v458, 0.0
  %v603 = vmax.f32 %v459, 0.0
  %v604 = vmax.f32 %v460, 0.0
  %v605 = vmax.f32 %v461, 0.0
  %v606 = vmax.f32 %v462, 0.0
  %v607 = vmax.f32 %v463, 0.0
  %v608 = vmax.f32 %v464, 0.0
  %v609 = vmax.f32 %v465, 0.0
  %v610 = vmax.f32 %v466, 0.0
  %v611 = vmax.f32 %v467, 0.0
  %v612 = vmax.f32 %v468, 0.0
  %v613 = vmax.f32 %v469, 0.0
  %v614 = vmax.f32 %v470, 0.0
  %v615 = vmax.f32 %v471, 0.0
  %v616 = vmax.f32 %v472, 0.0
  %v617 = vmax.f32 %v473, 0.0
  %v618 = vmax.f32 %v474, 0.0
  %v619 = vmax.f32 %v475, 0.0
  %v620 = vmax.f32 %v476, 0.0
  %v621 = vmax.f32 %v477, 0.0
  %v622 = vmax.f32 %v478, 0.0
  %v623 = vmax.f32 %v479, 0.0
  %v624 = vmax.f32 %v480, 0.0
  %v625 = vmax.f32 %v481, 0.0
  %v626 = vmax.f32 %v482, 0.0
  %v627 = vmax.f32 %v483, 0.0
  %v628 = vmax.f32 %v484, 0.0
  %v629 = vmax.f32 %v485, 0.0
  %v630 = vmax.f32 %v486, 0.0
  %v631 = vmax.f32 %v487, 0.0
  %v632 = vmax.f32 %v488, 0.0
  %v633 = vmax.f32 %v489, 0.0
  %v634 = vmax.f32 %v490, 0.0
  %v635 = vmax.f32 %v491, 0.0
  %v636 = vmax.f32 %v492, 0.0
  %v637 = vmax.f32 %v493, 0.0
  %v638 = vmax.f32 %v494, 0.0
  %v639 = vmax.f32 %v495, 0.0
  %v640 = vmax.f32 %v496, 0.0
  %v641 = vmax.f32 %v497, 0.0
  %v642 = vmax.f32 %v498, 0.0
  %v643 = vmax.f32 %v499, 0.0
  %v644 = vmax.f32 %v500, 0.0
  %v645 = vmax.f32 %v501, 0.0
  %v646 = vmax.f32 %v502, 0.0
  %v647 = vmax.f32 %v503, 0.0
  %v648 = vmax.f32 %v504, 0.0
  %v649 = vmax.f32 %v505, 0.0
  %v650 = vmax.f32 %v506, 0.0
  %v651 = vmax.f32 %v507, 0.0
  %v652 = vmax.f32 %v508, 0.0
  %v653 = vmax.f32 %v509, 0.0
  %v654 = vmax.f32 %v510, 0.0
  %v655 = vmax.f32 %v511, 0.0
  %v656 = vmax.f32 %v512, 0.0
  %v657 = vmax.f32 %v513, 0.0
  %v658 = vmax.f32 %v514, 0.0
  %v659 = vmax.f32 %v515, 0.0
  %v660 = vmax.f32 %v516, 0.0
  %v661 = vmax.f32 %v517, 0.0
  %v662 = vmax.f32 %v518, 0.0
  %v663 = vmax.f32 %v519, 0.0
  %v664 = vmax.f32 %v520, 0.0
  %v665 = vmax.f32 %v521, 0.0
  %v666 = vmax.f32 %v522, 0.0
  %v667 = vmax.f32 %v523, 0.0
  %v668 = vmax.f32 %v524, 0.0
  %v669 = vmax.f32 %v525, 0.0
  %v670 = vmax.f32 %v526, 0.0
  %v671 = vmax.f32 %v527, 0.0
  %v672 = vmax.f32 %v528, 0.0
  %v673 = vmax.f32 %v529, 0.0
  %v674 = vmax.f32 %v530, 0.0
  %v675 = vmax.f32 %v531, 0.0
  %v676 = vmax.f32 %v532, 0.0
  %v677 = vmax.f32 %v533, 0.0
  %v678 = vmax.f32 %v534, 0.0
  %v679 = vmax.f32 %v535, 0.0
  %v680 = vmax.f32 %v536, 0.0
  %v681 = vmax.f32 %v537, 0.0
  %v682 = vmax.f32 %v538, 0.0
  %v683 = vmax.f32 %v539, 0.0
  %v684 = vmax.f32 %v540, 0.0
  %v685 = vmax.f32 %v541, 0.0
  %v686 = vmax.f32 %v542, 0.0
  %v687 = vmax.f32 %v543, 0.0
  %v688 = vmax.f32 %v544, 0.0
  %v689 = vmax.f32 %v545, 0.0
  %v690 = vmax.f32 %v546, 0.0
  %v691 = vmax.f32 %v547, 0.0
  %v692 = vmax.f32 %v548, 0.0
  %v693 = vmax.f32 %v549, 0.0
  %v694 = vmax.f32 %v550, 0.0
  %v695 = vmax.f32 %v551, 0.0
  %v696 = vmax.f32 %v552, 0.0
  %v697 = vmax.f32 %v553, 0.0
  %v698 = vmax.f32 %v554, 0.0
  %v699 = vmax.f32 %v555, 0.0
  %v700 = vmax.f32 %v556, 0.0
  %v701 = vmax.f32 %v557, 0.0
  %v702 = vmax.f32 %v558, 0.0
  %v703 = vld [vmem:[%s3] sm:$0xff]
  %v704 = vld [vmem:[%s3 + $0x8] sm:$0xff]
  %v705 = vld [vmem:[%s3 + $0x10] sm:$0xff]
  %v706 = vld [vmem:[%s3 + $0x18] sm:$0xff]
  %v707 = vld [vmem:[%s3 + $0x20] sm:$0xff]
  %v708 = vld [vmem:[%s3 + $0x28] sm:$0xff]
  %v709 = vld [vmem:[%s3 + $0x30] sm:$0xff]
  %v710 = vld [vmem:[%s3 + $0x38] sm:$0xff]
  %v711 = vld [vmem:[%s3 + $0x40] sm:$0xff]
  %v712 = vld [vmem:[%s3 + $0x48] sm:$0xff]
  %v713 = vld [vmem:[%s3 + $0x50] sm:$0xff]
  %v714 = vld [vmem:[%s3 + $0x58] sm:$0xff]
  %v715 = vld [vmem:[%s3 + $0x60] sm:$0xff]
  %v716 = vld [vmem:[%s3 + $0x68] sm:$0xff]
  %v717 = vld [vmem:[%s3 + $0x70] sm:$0xff]
  %v718 = vld [vmem:[%s3 + $0x78] sm:$0xff]
  %v719 = vld [vmem:[%s3 + $0x80] sm:$0xff]
  %v720 = vld [vmem:[%s3 + $0x88] sm:$0xff]
  %v721 = vld [vmem:[%s3 + $0x90] sm:$0xff]
  %v722 = vld [vmem:[%s3 + $0x98] sm:$0xff]
  %v723 = vld [vmem:[%s3 + $0xa0] sm:$0xff]
  %v724 = vld [vmem:[%s3 + $0xa8] sm:$0xff]
  %v725 = vld [vmem:[%s3 + $0xb0] sm:$0xff]
  %v726 = vld [vmem:[%s3 + $0xb8] sm:$0xff]
  %v727 = vld [vmem:[%s3 + $0xc0] sm:$0xff]
  %v728 = vld [vmem:[%s3 + $0xc8] sm:$0xff]
  %v729 = vld [vmem:[%s3 + $0xd0] sm:$0xff]
  %v730 = vld [vmem:[%s3 + $0xd8] sm:$0xff]
  %v731 = vld [vmem:[%s3 + $0xe0] sm:$0xff]
  %v732 = vld [vmem:[%s3 + $0xe8] sm:$0xff]
  %v733 = vld [vmem:[%s3 + $0xf0] sm:$0xff]
  %v734 = vld [vmem:[%s3 + $0xf8] sm:$0xff]
  %v735 = vld [vmem:[%s3 + $0x100] sm:$0xff]
  %v736 = vld [vmem:[%s3 + $0x108] sm:$0xff]
  %v737 = vld [vmem:[%s3 + $0x110] sm:$0xff]
  %v738 = vld [vmem:[%s3 + $0x118] sm:$0xff]
  %v739 = vld [vmem:[%s3 + $0x120] sm:$0xff]
  %v740 = vld [vmem:[%s3 + $0x128] sm:$0xff]
  %v741 = vld [vmem:[%s3 + $0x130] sm:$0xff]
  %v742 = vld [vmem:[%s3 + $0x138] sm:$0xff]
  %v743 = vld [vmem:[%s3 + $0x140] sm:$0xff]
  %v744 = vld [vmem:[%s3 + $0x148] sm:$0xff]
  %v745 = vld [vmem:[%s3 + $0x150] sm:$0xff]
  %v746 = vld [vmem:[%s3 + $0x158] sm:$0xff]
  %v747 = vld [vmem:[%s3 + $0x160] sm:$0xff]
  %v748 = vld [vmem:[%s3 + $0x168] sm:$0xff]
  %v749 = vld [vmem:[%s3 + $0x170] sm:$0xff]
  %v750 = vld [vmem:[%s3 + $0x178] sm:$0xff]
  %v751 = vld [vmem:[%s3 + $0x180] sm:$0xff]
  %v752 = vld [vmem:[%s3 + $0x188] sm:$0xff]
  %v753 = vld [vmem:[%s3 + $0x190] sm:$0xff]
  %v754 = vld [vmem:[%s3 + $0x198] sm:$0xff]
  %v755 = vld [vmem:[%s3 + $0x1a0] sm:$0xff]
  %v756 = vld [vmem:[%s3 + $0x1a8] sm:$0xff]
  %v757 = vld [vmem:[%s3 + $0x1b0] sm:$0xff]
  %v758 = vld [vmem:[%s3 + $0x1b8] sm:$0xff]
  %v759 = vld [vmem:[%s3 + $0x1c0] sm:$0xff]
  %v760 = vld [vmem:[%s3 + $0x1c8] sm:$0xff]
  %v761 = vld [vmem:[%s3 + $0x1d0] sm:$0xff]
  %v762 = vld [vmem:[%s3 + $0x1d8] sm:$0xff]
  %v763 = vld [vmem:[%s3 + $0x1e0] sm:$0xff]
  %v764 = vld [vmem:[%s3 + $0x1e8] sm:$0xff]
  %v765 = vld [vmem:[%s3 + $0x1f0] sm:$0xff]
  %v766 = vld [vmem:[%s3 + $0x1f8] sm:$0xff]
  %v767 = vld [vmem:[%s3 + $0x200] sm:$0xff]
  %v768 = vld [vmem:[%s3 + $0x208] sm:$0xff]
  %v769 = vld [vmem:[%s3 + $0x210] sm:$0xff]
  %v770 = vld [vmem:[%s3 + $0x218] sm:$0xff]
  %v771 = vld [vmem:[%s3 + $0x220] sm:$0xff]
  %v772 = vld [vmem:[%s3 + $0x228] sm:$0xff]
  %v773 = vld [vmem:[%s3 + $0x230] sm:$0xff]
  %v774 = vld [vmem:[%s3 + $0x238] sm:$0xff]
  %v775 = vld [vmem:[%s3 + $0x240] sm:$0xff]
  %v776 = vld [vmem:[%s3 + $0x248] sm:$0xff]
  %v777 = vld [vmem:[%s3 + $0x250] sm:$0xff]
  %v778 = vld [vmem:[%s3 + $0x258] sm:$0xff]
  %v779 = vld [vmem:[%s3 + $0x260] sm:$0xff]
  %v780 = vld [vmem:[%s3 + $0x268] sm:$0xff]
  %v781 = vld [vmem:[%s3 + $0x270] sm:$0xff]
  %v782 = vld [vmem:[%s3 + $0x278] sm:$0xff]
  %v783 = vld [vmem:[%s3 + $0x280] sm:$0xff]
  %v784 = vld [vmem:[%s3 + $0x288] sm:$0xff]
  %v785 = vld [vmem:[%s3 + $0x290] sm:$0xff]
  %v786 = vld [vmem:[%s3 + $0x298] sm:$0xff]
  %v787 = vld [vmem:[%s3 + $0x2a0] sm:$0xff]
  %v788 = vld [vmem:[%s3 + $0x2a8] sm:$0xff]
  %v789 = vld [vmem:[%s3 + $0x2b0] sm:$0xff]
  %v790 = vld [vmem:[%s3 + $0x2b8] sm:$0xff]
  %v791 = vld [vmem:[%s3 + $0x2c0] sm:$0xff]
  %v792 = vld [vmem:[%s3 + $0x2c8] sm:$0xff]
  %v793 = vld [vmem:[%s3 + $0x2d0] sm:$0xff]
  %v794 = vld [vmem:[%s3 + $0x2d8] sm:$0xff]
  %v795 = vld [vmem:[%s3 + $0x2e0] sm:$0xff]
  %v796 = vld [vmem:[%s3 + $0x2e8] sm:$0xff]
  %v797 = vld [vmem:[%s3 + $0x2f0] sm:$0xff]
  %v798 = vld [vmem:[%s3 + $0x2f8] sm:$0xff]
  %v799 = vld [vmem:[%s3 + $0x300] sm:$0xff]
  %v800 = vld [vmem:[%s3 + $0x308] sm:$0xff]
  %v801 = vld [vmem:[%s3 + $0x310] sm:$0xff]
  %v802 = vld [vmem:[%s3 + $0x318] sm:$0xff]
  %v803 = vld [vmem:[%s3 + $0x320] sm:$0xff]
  %v804 = vld [vmem:[%s3 + $0x328] sm:$0xff]
  %v805 = vld [vmem:[%s3 + $0x330] sm:$0xff]
  %v806 = vld [vmem:[%s3 + $0x338] sm:$0xff]
  %v807 = vld [vmem:[%s3 + $0x340] sm:$0xff]
  %v808 = vld [vmem:[%s3 + $0x348] sm:$0xff]
  %v809 = vld [vmem:[%s3 + $0x350] sm:$0xff]
  %v810 = vld [vmem:[%s3 + $0x358] sm:$0xff]
  %v811 = vld [vmem:[%s3 + $0x360] sm:$0xff]
  %v812 = vld [vmem:[%s3 + $0x368] sm:$0xff]
  %v813 = vld [vmem:[%s3 + $0x370] sm:$0xff]
  %v814 = vld [vmem:[%s3 + $0x378] sm:$0xff]
  %v815 = vld [vmem:[%s3 + $0x380] sm:$0xff]
  %v816 = vld [vmem:[%s3 + $0x388] sm:$0xff]
  %v817 = vld [vmem:[%s3 + $0x390] sm:$0xff]
  %v818 = vld [vmem:[%s3 + $0x398] sm:$0xff]
  %v819 = vld [vmem:[%s3 + $0x3a0] sm:$0xff]
  %v820 = vld [vmem:[%s3 + $0x3a8] sm:$0xff]
  %v821 = vld [vmem:[%s3 + $0x3b0] sm:$0xff]
  %v822 = vld [vmem:[%s3 + $0x3b8] sm:$0xff]
  %v823 = vld [vmem:[%s3 + $0x3c0] sm:$0xff]
  %v824 = vld [vmem:[%s3 + $0x3c8] sm:$0xff]
  %v825 = vld [vmem:[%s3 + $0x3d0] sm:$0xff]
  %v826 = vld [vmem:[%s3 + $0x3d8] sm:$0xff]
  %v827 = vld [vmem:[%s3 + $0x3e0] sm:$0xff]
  %v828 = vld [vmem:[%s3 + $0x3e8] sm:$0xff]
  %v829 = vld [vmem:[%s3 + $0x3f0] sm:$0xff]
  %v830 = vld [vmem:[%s3 + $0x3f8] sm:$0xff]
  %v831 = vld [vmem:[%s3 + $0x400] sm:$0xff]
  %v832 = vld [vmem:[%s3 + $0x408] sm:$0xff]
  %v833 = vld [vmem:[%s3 + $0x410] sm:$0xff]
  %v834 = vld [vmem:[%s3 + $0x418] sm:$0xff]
  %v835 = vld [vmem:[%s3 + $0x420] sm:$0xff]
  %v836 = vld [vmem:[%s3 + $0x428] sm:$0xff]
  %v837 = vld [vmem:[%s3 + $0x430] sm:$0xff]
  %v838 = vld [vmem:[%s3 + $0x438] sm:$0xff]
  %v839 = vld [vmem:[%s3 + $0x440] sm:$0xff]
  %v840 = vld [vmem:[%s3 + $0x448] sm:$0xff]
  %v841 = vld [vmem:[%s3 + $0x450] sm:$0xff]
  %v842 = vld [vmem:[%s3 + $0x458] sm:$0xff]
  %v843 = vld [vmem:[%s3 + $0x460] sm:$0xff]
  %v844 = vld [vmem:[%s3 + $0x468] sm:$0xff]
  %v845 = vld [vmem:[%s3 + $0x470] sm:$0xff]
  %v846 = vld [vmem:[%s3 + $0x478] sm:$0xff]
  %847 = vmatprep.subr.mxu0 0.0
  %848 = vmatpush1.msra.mxu0 %v718
  %849 = vmatprep.subr.mxu0 0.0
  %850 = vmatpush1.msra.mxu0 %v717
  %851 = vmatprep.subr.mxu0 0.0
  %852 = vmatpush1.msra.mxu0 %v716
  %853 = vmatprep.subr.mxu0 0.0
  %854 = vmatpush1.msra.mxu0 %v715
  %855 = vmatprep.subr.mxu0 0.0
  %856 = vmatpush1.msra.mxu0 %v714
  %857 = vmatprep.subr.mxu0 0.0
  %858 = vmatpush1.msra.mxu0 %v713
  %859 = vmatprep.subr.mxu0 0.0
  %860 = vmatpush1.msra.mxu0 %v712
  %861 = vmatprep.subr.mxu0 0.0
  %862 = vmatpush1.msra.mxu0 %v711
  %863 = vmatprep.subr.mxu0 0.0
  %864 = vmatpush1.msra.mxu0 %v710
  %865 = vmatprep.subr.mxu0 0.0
  %866 = vmatpush1.msra.mxu0 %v709
  %867 = vmatprep.subr.mxu0 0.0
  %868 = vmatpush1.msra.mxu0 %v708
  %869 = vmatprep.subr.mxu0 0.0
  %870 = vmatpush1.msra.mxu0 %v707
  %871 = vmatprep.subr.mxu0 0.0
  %872 = vmatpush1.msra.mxu0 %v706
  %873 = vmatprep.subr.mxu0 0.0
  %874 = vmatpush1.msra.mxu0 %v705
  %875 = vmatprep.subr.mxu0 0.0
  %876 = vmatpush1.msra.mxu0 %v704
  %877 = vmatprep.subr.mxu0 0.0
  %878 = vmatpush1.msra.mxu0 %v703
  %879 = vmatprep.subr.mxu0 0.0
  %880 = vmatpush2.msra.mxu0 %v734
  %881 = vmatprep.subr.mxu0 0.0
  %882 = vmatpush2.msra.mxu0 %v733
  %883 = vmatprep.subr.mxu0 0.0
  %884 = vmatpush2.msra.mxu0 %v732
  %885 = vmatprep.subr.mxu0 0.0
  %886 = vmatpush2.msra.mxu0 %v731
  %887 = vmatprep.subr.mxu0 0.0
  %888 = vmatpush2.msra.mxu0 %v730
  %889 = vmatprep.subr.mxu0 0.0
  %890 = vmatpush2.msra.mxu0 %v729
  %891 = vmatprep.subr.mxu0 0.0
  %892 = vmatpush2.msra.mxu0 %v728
  %893 = vmatprep.subr.mxu0 0.0
  %894 = vmatpush2.msra.mxu0 %v727
  %895 = vmatprep.subr.mxu0 0.0
  %896 = vmatpush2.msra.mxu0 %v726
  %897 = vmatprep.subr.mxu0 0.0
  %898 = vmatpush2.msra.mxu0 %v725
  %899 = vmatprep.subr.mxu0 0.0
  %900 = vmatpush2.msra.mxu0 %v724
  %901 = vmatprep.subr.mxu0 0.0
  %902 = vmatpush2.msra.mxu0 %v723
  %903 = vmatprep.subr.mxu0 0.0
  %904 = vmatpush2.msra.mxu0 %v722
  %905 = vmatprep.subr.mxu0 0.0
  %906 = vmatpush2.msra.mxu0 %v721
  %907 = vmatprep.subr.mxu0 0.0
  %908 = vmatpush2.msra.mxu0 %v720
  %909 = vmatprep.subr.mxu0 0.0
  %910 = vmatpush2.msra.mxu0 %v719
  %911 = vmatprep.mubr.f32.mxu0 %v560
  %912 = vmatmul.mubr.f32.gmra.mxu0 %v559
  %v913 = vpop.f32.mrf.mxu0
  %v914 = vadd.f32 0.0, %v913
  %v915 = vpop.f32.mrf.mxu0
  %916 = vmatprep.mubr.f32.mxu0 %v569
  %917 = vmatmul.mubr.f32.gmra.mxu0 %v568
  %v918 = vpop.f32.mrf.mxu0
  %v919 = vadd.f32 0.0, %v918
  %v920 = vpop.f32.mrf.mxu0
  %921 = vmatprep.mubr.f32.mxu0 %v578
  %922 = vmatmul.mubr.f32.gmra.mxu0 %v577
  %v923 = vpop.f32.mrf.mxu0
  %v924 = vadd.f32 0.0, %v923
  %v925 = vpop.f32.mrf.mxu0
  %926 = vmatprep.mubr.f32.mxu0 %v587
  %927 = vmatmul.mubr.f32.gmra.mxu0 %v586
  %v928 = vpop.f32.mrf.mxu0
  %v929 = vadd.f32 0.0, %v928
  %v930 = vpop.f32.mrf.mxu0
  %931 = vmatprep.mubr.f32.mxu0 %v596
  %932 = vmatmul.mubr.f32.gmra.mxu0 %v595
  %v933 = vpop.f32.mrf.mxu0
  %v934 = vadd.f32 0.0, %v933
  %v935 = vpop.f32.mrf.mxu0
  %936 = vmatprep.mubr.f32.mxu0 %v605
  %937 = vmatmul.mubr.f32.gmra.mxu0 %v604
  %v938 = vpop.f32.mrf.mxu0
  %v939 = vadd.f32 0.0, %v938
  %v940 = vpop.f32.mrf.mxu0
  %941 = vmatprep.mubr.f32.mxu0 %v614
  %942 = vmatmul.mubr.f32.gmra.mxu0 %v613
  %v943 = vpop.f32.mrf.mxu0
  %v944 = vadd.f32 0.0, %v943
  %v945 = vpop.f32.mrf.mxu0
  %946 = vmatprep.mubr.f32.mxu0 %v623
  %947 = vmatmul.mubr.f32.gmra.mxu0 %v622
  %v948 = vpop.f32.mrf.mxu0
  %v949 = vadd.f32 0.0, %v948
  %v950 = vpop.f32.mrf.mxu0
  %951 = vmatprep.mubr.f32.mxu0 %v632
  %952 = vmatmul.mubr.f32.gmra.mxu0 %v631
  %v953 = vpop.f32.mrf.mxu0
  %v954 = vadd.f32 0.0, %v953
  %v955 = vpop.f32.mrf.mxu0
  %956 = vmatprep.mubr.f32.mxu0 %v641
  %957 = vmatmul.mubr.f32.gmra.mxu0 %v640
  %v958 = vpop.f32.mrf.mxu0
  %v959 = vadd.f32 0.0, %v958
  %v960 = vpop.f32.mrf.mxu0
  %961 = vmatprep.mubr.f32.mxu0 %v650
  %962 = vmatmul.mubr.f32.gmra.mxu0 %v649
  %v963 = vpop.f32.mrf.mxu0
  %v964 = vadd.f32 0.0, %v963
  %v965 = vpop.f32.mrf.mxu0
  %966 = vmatprep.mubr.f32.mxu0 %v659
  %967 = vmatmul.mubr.f32.gmra.mxu0 %v658
  %v968 = vpop.f32.mrf.mxu0
  %v969 = vadd.f32 0.0, %v968
  %v970 = vpop.f32.mrf.mxu0
  %971 = vmatprep.mubr.f32.mxu0 %v668
  %972 = vmatmul.mubr.f32.gmra.mxu0 %v667
  %v973 = vpop.f32.mrf.mxu0
  %v974 = vadd.f32 0.0, %v973
  %v975 = vpop.f32.mrf.mxu0
  %976 = vmatprep.mubr.f32.mxu0 %v677
  %977 = vmatmul.mubr.f32.gmra.mxu0 %v676
  %v978 = vpop.f32.mrf.mxu0
  %v979 = vadd.f32 0.0, %v978
  %v980 = vpop.f32.mrf.mxu0
  %981 = vmatprep.mubr.f32.mxu0 %v686
  %982 = vmatmul.mubr.f32.gmra.mxu0 %v685
  %v983 = vpop.f32.mrf.mxu0
  %v984 = vadd.f32 0.0, %v983
  %v985 = vpop.f32.mrf.mxu0
  %986 = vmatprep.mubr.f32.mxu0 %v695
  %987 = vmatmul.mubr.f32.gmra.mxu0 %v694
  %v988 = vpop.f32.mrf.mxu0
  %v989 = vadd.f32 0.0, %v988
  %v990 = vpop.f32.mrf.mxu0
  %991 = vdwg.mxu0
  %992 = vmatprep.subr.mxu0 0.0
  %993 = vmatpush1.msra.mxu0 %v750
  %994 = vmatprep.subr.mxu0 0.0
  %995 = vmatpush1.msra.mxu0 %v749
  %996 = vmatprep.subr.mxu0 0.0
  %997 = vmatpush1.msra.mxu0 %v748
  %998 = vmatprep.subr.mxu0 0.0
  %999 = vmatpush1.msra.mxu0 %v747
  %1000 = vmatprep.subr.mxu0 0.0
  %1001 = vmatpush1.msra.mxu0 %v746
  %1002 = vmatprep.subr.mxu0 0.0
  %1003 = vmatpush1.msra.mxu0 %v745
  %1004 = vmatprep.subr.mxu0 0.0
  %1005 = vmatpush1.msra.mxu0 %v744
  %1006 = vmatprep.subr.mxu0 0.0
  %1007 = vmatpush1.msra.mxu0 %v743
  %1008 = vmatprep.subr.mxu0 0.0
  %1009 = vmatpush1.msra.mxu0 %v742
  %1010 = vmatprep.subr.mxu0 0.0
  %1011 = vmatpush1.msra.mxu0 %v741
  %1012 = vmatprep.subr.mxu0 0.0
  %1013 = vmatpush1.msra.mxu0 %v740
  %1014 = vmatprep.subr.mxu0 0.0
  %1015 = vmatpush1.msra.mxu0 %v739
  %1016 = vmatprep.subr.mxu0 0.0
  %1017 = vmatpush1.msra.mxu0 %v738
  %1018 = vmatprep.subr.mxu0 0.0
  %1019 = vmatpush1.msra.mxu0 %v737
  %1020 = vmatprep.subr.mxu0 0.0
  %1021 = vmatpush1.msra.mxu0 %v736
  %1022 = vmatprep.subr.mxu0 0.0
  %1023 = vmatpush1.msra.mxu0 %v735
  %1024 = vmatprep.subr.mxu0 0.0
  %1025 = vmatpush2.msra.mxu0 %v766
  %1026 = vmatprep.subr.mxu0 0.0
  %1027 = vmatpush2.msra.mxu0 %v765
  %1028 = vmatprep.subr.mxu0 0.0
  %1029 = vmatpush2.msra.mxu0 %v764
  %1030 = vmatprep.subr.mxu0 0.0
  %1031 = vmatpush2.msra.mxu0 %v763
  %1032 = vmatprep.subr.mxu0 0.0
  %1033 = vmatpush2.msra.mxu0 %v762
  %1034 = vmatprep.subr.mxu0 0.0
  %1035 = vmatpush2.msra.mxu0 %v761
  %1036 = vmatprep.subr.mxu0 0.0
  %1037 = vmatpush2.msra.mxu0 %v760
  %1038 = vmatprep.subr.mxu0 0.0
  %1039 = vmatpush2.msra.mxu0 %v759
  %1040 = vmatprep.subr.mxu0 0.0
  %1041 = vmatpush2.msra.mxu0 %v758
  %1042 = vmatprep.subr.mxu0 0.0
  %1043 = vmatpush2.msra.mxu0 %v757
  %1044 = vmatprep.subr.mxu0 0.0
  %1045 = vmatpush2.msra.mxu0 %v756
  %1046 = vmatprep.subr.mxu0 0.0
  %1047 = vmatpush2.msra.mxu0 %v755
  %1048 = vmatprep.subr.mxu0 0.0
  %1049 = vmatpush2.msra.mxu0 %v754
  %1050 = vmatprep.subr.mxu0 0.0
  %1051 = vmatpush2.msra.mxu0 %v753
  %1052 = vmatprep.subr.mxu0 0.0
  %1053 = vmatpush2.msra.mxu0 %v752
  %1054 = vmatprep.subr.mxu0 0.0
  %1055 = vmatpush2.msra.mxu0 %v751
  %1056 = vmatprep.mubr.f32.mxu0 %v562
  %1057 = vmatmul.mubr.f32.gmra.mxu0 %v561
  %v1058 = vpop.f32.mrf.mxu0
  %v1059 = vadd.f32 %v914, %v1058
  %v1060 = vpop.f32.mrf.mxu0
  %1061 = vmatprep.mubr.f32.mxu0 %v571
  %1062 = vmatmul.mubr.f32.gmra.mxu0 %v570
  %v1063 = vpop.f32.mrf.mxu0
  %v1064 = vadd.f32 %v919, %v1063
  %v1065 = vpop.f32.mrf.mxu0
  %1066 = vmatprep.mubr.f32.mxu0 %v580
  %1067 = vmatmul.mubr.f32.gmra.mxu0 %v579
  %v1068 = vpop.f32.mrf.mxu0
  %v1069 = vadd.f32 %v924, %v1068
  %v1070 = vpop.f32.mrf.mxu0
  %1071 = vmatprep.mubr.f32.mxu0 %v589
  %1072 = vmatmul.mubr.f32.gmra.mxu0 %v588
  %v1073 = vpop.f32.mrf.mxu0
  %v1074 = vadd.f32 %v929, %v1073
  %v1075 = vpop.f32.mrf.mxu0
  %1076 = vmatprep.mubr.f32.mxu0 %v598
  %1077 = vmatmul.mubr.f32.gmra.mxu0 %v597
  %v1078 = vpop.f32.mrf.mxu0
  %v1079 = vadd.f32 %v934, %v1078
  %v1080 = vpop.f32.mrf.mxu0
  %1081 = vmatprep.mubr.f32.mxu0 %v607
  %1082 = vmatmul.mubr.f32.gmra.mxu0 %v606
  %v1083 = vpop.f32.mrf.mxu0
  %v1084 = vadd.f32 %v939, %v1083
  %v1085 = vpop.f32.mrf.mxu0
  %1086 = vmatprep.mubr.f32.mxu0 %v616
  %1087 = vmatmul.mubr.f32.gmra.mxu0 %v615
  %v1088 = vpop.f32.mrf.mxu0
  %v1089 = vadd.f32 %v944, %v1088
  %v1090 = vpop.f32.mrf.mxu0
  %1091 = vmatprep.mubr.f32.mxu0 %v625
  %1092 = vmatmul.mubr.f32.gmra.mxu0 %v624
  %v1093 = vpop.f32.mrf.mxu0
  %v1094 = vadd.f32 %v949, %v1093
  %v1095 = vpop.f32.mrf.mxu0
  %1096 = vmatprep.mubr.f32.mxu0 %v634
  %1097 = vmatmul.mubr.f32.gmra.mxu0 %v633
  %v1098 = vpop.f32.mrf.mxu0
  %v1099 = vadd.f32 %v954, %v1098
  %v1100 = vpop.f32.mrf.mxu0
  %1101 = vmatprep.mubr.f32.mxu0 %v643
  %1102 = vmatmul.mubr.f32.gmra.mxu0 %v642
  %v1103 = vpop.f32.mrf.mxu0
  %v1104 = vadd.f32 %v959, %v1103
  %v1105 = vpop.f32.mrf.mxu0
  %1106 = vmatprep.mubr.f32.mxu0 %v652
  %1107 = vmatmul.mubr.f32.gmra.mxu0 %v651
  %v1108 = vpop.f32.mrf.mxu0
  %v1109 = vadd.f32 %v964, %v1108
  %v1110 = vpop.f32.mrf.mxu0
  %1111 = vmatprep.mubr.f32.mxu0 %v661
  %1112 = vmatmul.mubr.f32.gmra.mxu0 %v660
  %v1113 = vpop.f32.mrf.mxu0
  %v1114 = vadd.f32 %v969, %v1113
  %v1115 = vpop.f32.mrf.mxu0
  %1116 = vmatprep.mubr.f32.mxu0 %v670
  %1117 = vmatmul.mubr.f32.gmra.mxu0 %v669
  %v1118 = vpop.f32.mrf.mxu0
  %v1119 = vadd.f32 %v974, %v1118
  %v1120 = vpop.f32.mrf.mxu0
  %1121 = vmatprep.mubr.f32.mxu0 %v679
  %1122 = vmatmul.mubr.f32.gmra.mxu0 %v678
  %v1123 = vpop.f32.mrf.mxu0
  %v1124 = vadd.f32 %v979, %v1123
  %v1125 = vpop.f32.mrf.mxu0
  %1126 = vmatprep.mubr.f32.mxu0 %v688
  %1127 = vmatmul.mubr.f32.gmra.mxu0 %v687
  %v1128 = vpop.f32.mrf.mxu0
  %v1129 = vadd.f32 %v984, %v1128
  %v1130 = vpop.f32.mrf.mxu0
  %1131 = vmatprep.mubr.f32.mxu0 %v697
  %1132 = vmatmul.mubr.f32.gmra.mxu0 %v696
  %v1133 = vpop.f32.mrf.mxu0
  %v1134 = vadd.f32 %v989, %v1133
  %v1135 = vpop.f32.mrf.mxu0
  %1136 = vdwg.mxu0
  %1137 = vmatprep.subr.mxu0 0.0
  %1138 = vmatpush1.msra.mxu0 %v782
  %1139 = vmatprep.subr.mxu0 0.0
  %1140 = vmatpush1.msra.mxu0 %v781
  %1141 = vmatprep.subr.mxu0 0.0
  %1142 = vmatpush1.msra.mxu0 %v780
  %1143 = vmatprep.subr.mxu0 0.0
  %1144 = vmatpush1.msra.mxu0 %v779
  %1145 = vmatprep.subr.mxu0 0.0
  %1146 = vmatpush1.msra.mxu0 %v778
  %1147 = vmatprep.subr.mxu0 0.0
  %1148 = vmatpush1.msra.mxu0 %v777
  %1149 = vmatprep.subr.mxu0 0.0
  %1150 = vmatpush1.msra.mxu0 %v776
  %1151 = vmatprep.subr.mxu0 0.0
  %1152 = vmatpush1.msra.mxu0 %v775
  %1153 = vmatprep.subr.mxu0 0.0
  %1154 = vmatpush1.msra.mxu0 %v774
  %1155 = vmatprep.subr.mxu0 0.0
  %1156 = vmatpush1.msra.mxu0 %v773
  %1157 = vmatprep.subr.mxu0 0.0
  %1158 = vmatpush1.msra.mxu0 %v772
  %1159 = vmatprep.subr.mxu0 0.0
  %1160 = vmatpush1.msra.mxu0 %v771
  %1161 = vmatprep.subr.mxu0 0.0
  %1162 = vmatpush1.msra.mxu0 %v770
  %1163 = vmatprep.subr.mxu0 0.0
  %1164 = vmatpush1.msra.mxu0 %v769
  %1165 = vmatprep.subr.mxu0 0.0
  %1166 = vmatpush1.msra.mxu0 %v768
  %1167 = vmatprep.subr.mxu0 0.0
  %1168 = vmatpush1.msra.mxu0 %v767
  %1169 = vmatprep.subr.mxu0 0.0
  %1170 = vmatpush2.msra.mxu0 %v798
  %1171 = vmatprep.subr.mxu0 0.0
  %1172 = vmatpush2.msra.mxu0 %v797
  %1173 = vmatprep.subr.mxu0 0.0
  %1174 = vmatpush2.msra.mxu0 %v796
  %1175 = vmatprep.subr.mxu0 0.0
  %1176 = vmatpush2.msra.mxu0 %v795
  %1177 = vmatprep.subr.mxu0 0.0
  %1178 = vmatpush2.msra.mxu0 %v794
  %1179 = vmatprep.subr.mxu0 0.0
  %1180 = vmatpush2.msra.mxu0 %v793
  %1181 = vmatprep.subr.mxu0 0.0
  %1182 = vmatpush2.msra.mxu0 %v792
  %1183 = vmatprep.subr.mxu0 0.0
  %1184 = vmatpush2.msra.mxu0 %v791
  %1185 = vmatprep.subr.mxu0 0.0
  %1186 = vmatpush2.msra.mxu0 %v790
  %1187 = vmatprep.subr.mxu0 0.0
  %1188 = vmatpush2.msra.mxu0 %v789
  %1189 = vmatprep.subr.mxu0 0.0
  %1190 = vmatpush2.msra.mxu0 %v788
  %1191 = vmatprep.subr.mxu0 0.0
  %1192 = vmatpush2.msra.mxu0 %v787
  %1193 = vmatprep.subr.mxu0 0.0
  %1194 = vmatpush2.msra.mxu0 %v786
  %1195 = vmatprep.subr.mxu0 0.0
  %1196 = vmatpush2.msra.mxu0 %v785
  %1197 = vmatprep.subr.mxu0 0.0
  %1198 = vmatpush2.msra.mxu0 %v784
  %1199 = vmatprep.subr.mxu0 0.0
  %1200 = vmatpush2.msra.mxu0 %v783
  %1201 = vmatprep.mubr.f32.mxu0 %v564
  %1202 = vmatmul.mubr.f32.gmra.mxu0 %v563
  %v1203 = vpop.f32.mrf.mxu0
  %v1204 = vadd.f32 %v1059, %v1203
  %v1205 = vpop.f32.mrf.mxu0
  %1206 = vmatprep.mubr.f32.mxu0 %v573
  %1207 = vmatmul.mubr.f32.gmra.mxu0 %v572
  %v1208 = vpop.f32.mrf.mxu0
  %v1209 = vadd.f32 %v1064, %v1208
  %v1210 = vpop.f32.mrf.mxu0
  %1211 = vmatprep.mubr.f32.mxu0 %v582
  %1212 = vmatmul.mubr.f32.gmra.mxu0 %v581
  %v1213 = vpop.f32.mrf.mxu0
  %v1214 = vadd.f32 %v1069, %v1213
  %v1215 = vpop.f32.mrf.mxu0
  %1216 = vmatprep.mubr.f32.mxu0 %v591
  %1217 = vmatmul.mubr.f32.gmra.mxu0 %v590
  %v1218 = vpop.f32.mrf.mxu0
  %v1219 = vadd.f32 %v1074, %v1218
  %v1220 = vpop.f32.mrf.mxu0
  %1221 = vmatprep.mubr.f32.mxu0 %v600
  %1222 = vmatmul.mubr.f32.gmra.mxu0 %v599
  %v1223 = vpop.f32.mrf.mxu0
  %v1224 = vadd.f32 %v1079, %v1223
  %v1225 = vpop.f32.mrf.mxu0
  %1226 = vmatprep.mubr.f32.mxu0 %v609
  %1227 = vmatmul.mubr.f32.gmra.mxu0 %v608
  %v1228 = vpop.f32.mrf.mxu0
  %v1229 = vadd.f32 %v1084, %v1228
  %v1230 = vpop.f32.mrf.mxu0
  %1231 = vmatprep.mubr.f32.mxu0 %v618
  %1232 = vmatmul.mubr.f32.gmra.mxu0 %v617
  %v1233 = vpop.f32.mrf.mxu0
  %v1234 = vadd.f32 %v1089, %v1233
  %v1235 = vpop.f32.mrf.mxu0
  %1236 = vmatprep.mubr.f32.mxu0 %v627
  %1237 = vmatmul.mubr.f32.gmra.mxu0 %v626
  %v1238 = vpop.f32.mrf.mxu0
  %v1239 = vadd.f32 %v1094, %v1238
  %v1240 = vpop.f32.mrf.mxu0
  %1241 = vmatprep.mubr.f32.mxu0 %v636
  %1242 = vmatmul.mubr.f32.gmra.mxu0 %v635
  %v1243 = vpop.f32.mrf.mxu0
  %v1244 = vadd.f32 %v1099, %v1243
  %v1245 = vpop.f32.mrf.mxu0
  %1246 = vmatprep.mubr.f32.mxu0 %v645
  %1247 = vmatmul.mubr.f32.gmra.mxu0 %v644
  %v1248 = vpop.f32.mrf.mxu0
  %v1249 = vadd.f32 %v1104, %v1248
  %v1250 = vpop.f32.mrf.mxu0
  %1251 = vmatprep.mubr.f32.mxu0 %v654
  %1252 = vmatmul.mubr.f32.gmra.mxu0 %v653
  %v1253 = vpop.f32.mrf.mxu0
  %v1254 = vadd.f32 %v1109, %v1253
  %v1255 = vpop.f32.mrf.mxu0
  %1256 = vmatprep.mubr.f32.mxu0 %v663
  %1257 = vmatmul.mubr.f32.gmra.mxu0 %v662
  %v1258 = vpop.f32.mrf.mxu0
  %v1259 = vadd.f32 %v1114, %v1258
  %v1260 = vpop.f32.mrf.mxu0
  %1261 = vmatprep.mubr.f32.mxu0 %v672
  %1262 = vmatmul.mubr.f32.gmra.mxu0 %v671
  %v1263 = vpop.f32.mrf.mxu0
  %v1264 = vadd.f32 %v1119, %v1263
  %v1265 = vpop.f32.mrf.mxu0
  %1266 = vmatprep.mubr.f32.mxu0 %v681
  %1267 = vmatmul.mubr.f32.gmra.mxu0 %v680
  %v1268 = vpop.f32.mrf.mxu0
  %v1269 = vadd.f32 %v1124, %v1268
  %v1270 = vpop.f32.mrf.mxu0
  %1271 = vmatprep.mubr.f32.mxu0 %v690
  %1272 = vmatmul.mubr.f32.gmra.mxu0 %v689
  %v1273 = vpop.f32.mrf.mxu0
  %v1274 = vadd.f32 %v1129, %v1273
  %v1275 = vpop.f32.mrf.mxu0
  %1276 = vmatprep.mubr.f32.mxu0 %v699
  %1277 = vmatmul.mubr.f32.gmra.mxu0 %v698
  %v1278 = vpop.f32.mrf.mxu0
  %v1279 = vadd.f32 %v1134, %v1278
  %v1280 = vpop.f32.mrf.mxu0
  %1281 = vdwg.mxu0
  %1282 = vmatprep.subr.mxu0 0.0
  %1283 = vmatpush1.msra.mxu0 %v814
  %1284 = vmatprep.subr.mxu0 0.0
  %1285 = vmatpush1.msra.mxu0 %v813
  %1286 = vmatprep.subr.mxu0 0.0
  %1287 = vmatpush1.msra.mxu0 %v812
  %1288 = vmatprep.subr.mxu0 0.0
  %1289 = vmatpush1.msra.mxu0 %v811
  %1290 = vmatprep.subr.mxu0 0.0
  %1291 = vmatpush1.msra.mxu0 %v810
  %1292 = vmatprep.subr.mxu0 0.0
  %1293 = vmatpush1.msra.mxu0 %v809
  %1294 = vmatprep.subr.mxu0 0.0
  %1295 = vmatpush1.msra.mxu0 %v808
  %1296 = vmatprep.subr.mxu0 0.0
  %1297 = vmatpush1.msra.mxu0 %v807
  %1298 = vmatprep.subr.mxu0 0.0
  %1299 = vmatpush1.msra.mxu0 %v806
  %1300 = vmatprep.subr.mxu0 0.0
  %1301 = vmatpush1.msra.mxu0 %v805
  %1302 = vmatprep.subr.mxu0 0.0
  %1303 = vmatpush1.msra.mxu0 %v804
  %1304 = vmatprep.subr.mxu0 0.0
  %1305 = vmatpush1.msra.mxu0 %v803
  %1306 = vmatprep.subr.mxu0 0.0
  %1307 = vmatpush1.msra.mxu0 %v802
  %1308 = vmatprep.subr.mxu0 0.0
  %1309 = vmatpush1.msra.mxu0 %v801
  %1310 = vmatprep.subr.mxu0 0.0
  %1311 = vmatpush1.msra.mxu0 %v800
  %1312 = vmatprep.subr.mxu0 0.0
  %1313 = vmatpush1.msra.mxu0 %v799
  %1314 = vmatprep.subr.mxu0 0.0
  %1315 = vmatpush2.msra.mxu0 %v830
  %1316 = vmatprep.subr.mxu0 0.0
  %1317 = vmatpush2.msra.mxu0 %v829
  %1318 = vmatprep.subr.mxu0 0.0
  %1319 = vmatpush2.msra.mxu0 %v828
  %1320 = vmatprep.subr.mxu0 0.0
  %1321 = vmatpush2.msra.mxu0 %v827
  %1322 = vmatprep.subr.mxu0 0.0
  %1323 = vmatpush2.msra.mxu0 %v826
  %1324 = vmatprep.subr.mxu0 0.0
  %1325 = vmatpush2.msra.mxu0 %v825
  %1326 = vmatprep.subr.mxu0 0.0
  %1327 = vmatpush2.msra.mxu0 %v824
  %1328 = vmatprep.subr.mxu0 0.0
  %1329 = vmatpush2.msra.mxu0 %v823
  %1330 = vmatprep.subr.mxu0 0.0
  %1331 = vmatpush2.msra.mxu0 %v822
  %1332 = vmatprep.subr.mxu0 0.0
  %1333 = vmatpush2.msra.mxu0 %v821
  %1334 = vmatprep.subr.mxu0 0.0
  %1335 = vmatpush2.msra.mxu0 %v820
  %1336 = vmatprep.subr.mxu0 0.0
  %1337 = vmatpush2.msra.mxu0 %v819
  %1338 = vmatprep.subr.mxu0 0.0
  %1339 = vmatpush2.msra.mxu0 %v818
  %1340 = vmatprep.subr.mxu0 0.0
  %1341 = vmatpush2.msra.mxu0 %v817
  %1342 = vmatprep.subr.mxu0 0.0
  %1343 = vmatpush2.msra.mxu0 %v816
  %1344 = vmatprep.subr.mxu0 0.0
  %1345 = vmatpush2.msra.mxu0 %v815
  %1346 = vmatprep.mubr.f32.mxu0 %v566
  %1347 = vmatmul.mubr.f32.gmra.mxu0 %v565
  %v1348 = vpop.f32.mrf.mxu0
  %v1349 = vadd.f32 %v1204, %v1348
  %v1350 = vpop.f32.mrf.mxu0
  %1351 = vmatprep.mubr.f32.mxu0 %v575
  %1352 = vmatmul.mubr.f32.gmra.mxu0 %v574
  %v1353 = vpop.f32.mrf.mxu0
  %v1354 = vadd.f32 %v1209, %v1353
  %v1355 = vpop.f32.mrf.mxu0
  %1356 = vmatprep.mubr.f32.mxu0 %v584
  %1357 = vmatmul.mubr.f32.gmra.mxu0 %v583
  %v1358 = vpop.f32.mrf.mxu0
  %v1359 = vadd.f32 %v1214, %v1358
  %v1360 = vpop.f32.mrf.mxu0
  %1361 = vmatprep.mubr.f32.mxu0 %v593
  %1362 = vmatmul.mubr.f32.gmra.mxu0 %v592
  %v1363 = vpop.f32.mrf.mxu0
  %v1364 = vadd.f32 %v1219, %v1363
  %v1365 = vpop.f32.mrf.mxu0
  %1366 = vmatprep.mubr.f32.mxu0 %v602
  %1367 = vmatmul.mubr.f32.gmra.mxu0 %v601
  %v1368 = vpop.f32.mrf.mxu0
  %v1369 = vadd.f32 %v1224, %v1368
  %v1370 = vpop.f32.mrf.mxu0
  %1371 = vmatprep.mubr.f32.mxu0 %v611
  %1372 = vmatmul.mubr.f32.gmra.mxu0 %v610
  %v1373 = vpop.f32.mrf.mxu0
  %v1374 = vadd.f32 %v1229, %v1373
  %v1375 = vpop.f32.mrf.mxu0
  %1376 = vmatprep.mubr.f32.mxu0 %v620
  %1377 = vmatmul.mubr.f32.gmra.mxu0 %v619
  %v1378 = vpop.f32.mrf.mxu0
  %v1379 = vadd.f32 %v1234, %v1378
  %v1380 = vpop.f32.mrf.mxu0
  %1381 = vmatprep.mubr.f32.mxu0 %v629
  %1382 = vmatmul.mubr.f32.gmra.mxu0 %v628
  %v1383 = vpop.f32.mrf.mxu0
  %v1384 = vadd.f32 %v1239, %v1383
  %v1385 = vpop.f32.mrf.mxu0
  %1386 = vmatprep.mubr.f32.mxu0 %v638
  %1387 = vmatmul.mubr.f32.gmra.mxu0 %v637
  %v1388 = vpop.f32.mrf.mxu0
  %v1389 = vadd.f32 %v1244, %v1388
  %v1390 = vpop.f32.mrf.mxu0
  %1391 = vmatprep.mubr.f32.mxu0 %v647
  %1392 = vmatmul.mubr.f32.gmra.mxu0 %v646
  %v1393 = vpop.f32.mrf.mxu0
  %v1394 = vadd.f32 %v1249, %v1393
  %v1395 = vpop.f32.mrf.mxu0
  %1396 = vmatprep.mubr.f32.mxu0 %v656
  %1397 = vmatmul.mubr.f32.gmra.mxu0 %v655
  %v1398 = vpop.f32.mrf.mxu0
  %v1399 = vadd.f32 %v1254, %v1398
  %v1400 = vpop.f32.mrf.mxu0
  %1401 = vmatprep.mubr.f32.mxu0 %v665
  %1402 = vmatmul.mubr.f32.gmra.mxu0 %v664
  %v1403 = vpop.f32.mrf.mxu0
  %v1404 = vadd.f32 %v1259, %v1403
  %v1405 = vpop.f32.mrf.mxu0
  %1406 = vmatprep.mubr.f32.mxu0 %v674
  %1407 = vmatmul.mubr.f32.gmra.mxu0 %v673
  %v1408 = vpop.f32.mrf.mxu0
  %v1409 = vadd.f32 %v1264, %v1408
  %v1410 = vpop.f32.mrf.mxu0
  %1411 = vmatprep.mubr.f32.mxu0 %v683
  %1412 = vmatmul.mubr.f32.gmra.mxu0 %v682
  %v1413 = vpop.f32.mrf.mxu0
  %v1414 = vadd.f32 %v1269, %v1413
  %v1415 = vpop.f32.mrf.mxu0
  %1416 = vmatprep.mubr.f32.mxu0 %v692
  %1417 = vmatmul.mubr.f32.gmra.mxu0 %v691
  %v1418 = vpop.f32.mrf.mxu0
  %v1419 = vadd.f32 %v1274, %v1418
  %v1420 = vpop.f32.mrf.mxu0
  %1421 = vmatprep.mubr.f32.mxu0 %v701
  %1422 = vmatmul.mubr.f32.gmra.mxu0 %v700
  %v1423 = vpop.f32.mrf.mxu0
  %v1424 = vadd.f32 %v1279, %v1423
  %v1425 = vpop.f32.mrf.mxu0
  %1426 = vdwg.mxu0
  %1427 = vmatprep.subr.mxu0 0.0
  %1428 = vmatpush1.msra.mxu0 %v846
  %1429 = vmatprep.subr.mxu0 0.0
  %1430 = vmatpush1.msra.mxu0 %v845
  %1431 = vmatprep.subr.mxu0 0.0
  %1432 = vmatpush1.msra.mxu0 %v844
  %1433 = vmatprep.subr.mxu0 0.0
  %1434 = vmatpush1.msra.mxu0 %v843
  %1435 = vmatprep.subr.mxu0 0.0
  %1436 = vmatpush1.msra.mxu0 %v842
  %1437 = vmatprep.subr.mxu0 0.0
  %1438 = vmatpush1.msra.mxu0 %v841
  %1439 = vmatprep.subr.mxu0 0.0
  %1440 = vmatpush1.msra.mxu0 %v840
  %1441 = vmatprep.subr.mxu0 0.0
  %1442 = vmatpush1.msra.mxu0 %v839
  %1443 = vmatprep.subr.mxu0 0.0
  %1444 = vmatpush1.msra.mxu0 %v838
  %1445 = vmatprep.subr.mxu0 0.0
  %1446 = vmatpush1.msra.mxu0 %v837
  %1447 = vmatprep.subr.mxu0 0.0
  %1448 = vmatpush1.msra.mxu0 %v836
  %1449 = vmatprep.subr.mxu0 0.0
  %1450 = vmatpush1.msra.mxu0 %v835
  %1451 = vmatprep.subr.mxu0 0.0
  %1452 = vmatpush1.msra.mxu0 %v834
  %1453 = vmatprep.subr.mxu0 0.0
  %1454 = vmatpush1.msra.mxu0 %v833
  %1455 = vmatprep.subr.mxu0 0.0
  %1456 = vmatpush1.msra.mxu0 %v832
  %1457 = vmatprep.subr.mxu0 0.0
  %1458 = vmatpush1.msra.mxu0 %v831
  %1459 = vmatprep.subr.mxu0 0.0
  %1460 = vmatpush2.msra.mxu0 0.0
  %1461 = vmatprep.subr.mxu0 0.0
  %1462 = vmatpush2.msra.mxu0 0.0
  %1463 = vmatprep.subr.mxu0 0.0
  %1464 = vmatpush2.msra.mxu0 0.0
  %1465 = vmatprep.subr.mxu0 0.0
  %1466 = vmatpush2.msra.mxu0 0.0
  %1467 = vmatprep.subr.mxu0 0.0
  %1468 = vmatpush2.msra.mxu0 0.0
  %1469 = vmatprep.subr.mxu0 0.0
  %1470 = vmatpush2.msra.mxu0 0.0
  %1471 = vmatprep.subr.mxu0 0.0
  %1472 = vmatpush2.msra.mxu0 0.0
  %1473 = vmatprep.subr.mxu0 0.0
  %1474 = vmatpush2.msra.mxu0 0.0
  %1475 = vmatprep.subr.mxu0 0.0
  %1476 = vmatpush2.msra.mxu0 0.0
  %1477 = vmatprep.subr.mxu0 0.0
  %1478 = vmatpush2.msra.mxu0 0.0
  %1479 = vmatprep.subr.mxu0 0.0
  %1480 = vmatpush2.msra.mxu0 0.0
  %1481 = vmatprep.subr.mxu0 0.0
  %1482 = vmatpush2.msra.mxu0 0.0
  %1483 = vmatprep.subr.mxu0 0.0
  %1484 = vmatpush2.msra.mxu0 0.0
  %1485 = vmatprep.subr.mxu0 0.0
  %1486 = vmatpush2.msra.mxu0 0.0
  %1487 = vmatprep.subr.mxu0 0.0
  %1488 = vmatpush2.msra.mxu0 0.0
  %1489 = vmatprep.subr.mxu0 0.0
  %1490 = vmatpush2.msra.mxu0 0.0
  %1491 = vmatprep.mubr.f32.mxu0 0.0
  %1492 = vmatmul.mubr.f32.gmra.mxu0 %v567
  %v1493 = vpop.f32.mrf.mxu0
  %v1494 = vadd.f32 %v1349, %v1493
  %v1495 = vpop.f32.mrf.mxu0
  %1496 = vmatprep.mubr.f32.mxu0 0.0
  %1497 = vmatmul.mubr.f32.gmra.mxu0 %v576
  %v1498 = vpop.f32.mrf.mxu0
  %v1499 = vadd.f32 %v1354, %v1498
  %v1500 = vpop.f32.mrf.mxu0
  %1501 = vmatprep.mubr.f32.mxu0 0.0
  %1502 = vmatmul.mubr.f32.gmra.mxu0 %v585
  %v1503 = vpop.f32.mrf.mxu0
  %v1504 = vadd.f32 %v1359, %v1503
  %v1505 = vpop.f32.mrf.mxu0
  %1506 = vmatprep.mubr.f32.mxu0 0.0
  %1507 = vmatmul.mubr.f32.gmra.mxu0 %v594
  %v1508 = vpop.f32.mrf.mxu0
  %v1509 = vadd.f32 %v1364, %v1508
  %v1510 = vpop.f32.mrf.mxu0
  %1511 = vmatprep.mubr.f32.mxu0 0.0
  %1512 = vmatmul.mubr.f32.gmra.mxu0 %v603
  %v1513 = vpop.f32.mrf.mxu0
  %v1514 = vadd.f32 %v1369, %v1513
  %v1515 = vpop.f32.mrf.mxu0
  %1516 = vmatprep.mubr.f32.mxu0 0.0
  %1517 = vmatmul.mubr.f32.gmra.mxu0 %v612
  %v1518 = vpop.f32.mrf.mxu0
  %v1519 = vadd.f32 %v1374, %v1518
  %v1520 = vpop.f32.mrf.mxu0
  %1521 = vmatprep.mubr.f32.mxu0 0.0
  %1522 = vmatmul.mubr.f32.gmra.mxu0 %v621
  %v1523 = vpop.f32.mrf.mxu0
  %v1524 = vadd.f32 %v1379, %v1523
  %v1525 = vpop.f32.mrf.mxu0
  %1526 = vmatprep.mubr.f32.mxu0 0.0
  %1527 = vmatmul.mubr.f32.gmra.mxu0 %v630
  %v1528 = vpop.f32.mrf.mxu0
  %v1529 = vadd.f32 %v1384, %v1528
  %v1530 = vpop.f32.mrf.mxu0
  %1531 = vmatprep.mubr.f32.mxu0 0.0
  %1532 = vmatmul.mubr.f32.gmra.mxu0 %v639
  %v1533 = vpop.f32.mrf.mxu0
  %v1534 = vadd.f32 %v1389, %v1533
  %v1535 = vpop.f32.mrf.mxu0
  %1536 = vmatprep.mubr.f32.mxu0 0.0
  %1537 = vmatmul.mubr.f32.gmra.mxu0 %v648
  %v1538 = vpop.f32.mrf.mxu0
  %v1539 = vadd.f32 %v1394, %v1538
  %v1540 = vpop.f32.mrf.mxu0
  %1541 = vmatprep.mubr.f32.mxu0 0.0
  %1542 = vmatmul.mubr.f32.gmra.mxu0 %v657
  %v1543 = vpop.f32.mrf.mxu0
  %v1544 = vadd.f32 %v1399, %v1543
  %v1545 = vpop.f32.mrf.mxu0
  %1546 = vmatprep.mubr.f32.mxu0 0.0
  %1547 = vmatmul.mubr.f32.gmra.mxu0 %v666
  %v1548 = vpop.f32.mrf.mxu0
  %v1549 = vadd.f32 %v1404, %v1548
  %v1550 = vpop.f32.mrf.mxu0
  %1551 = vmatprep.mubr.f32.mxu0 0.0
  %1552 = vmatmul.mubr.f32.gmra.mxu0 %v675
  %v1553 = vpop.f32.mrf.mxu0
  %v1554 = vadd.f32 %v1409, %v1553
  %v1555 = vpop.f32.mrf.mxu0
  %1556 = vmatprep.mubr.f32.mxu0 0.0
  %1557 = vmatmul.mubr.f32.gmra.mxu0 %v684
  %v1558 = vpop.f32.mrf.mxu0
  %v1559 = vadd.f32 %v1414, %v1558
  %v1560 = vpop.f32.mrf.mxu0
  %1561 = vmatprep.mubr.f32.mxu0 0.0
  %1562 = vmatmul.mubr.f32.gmra.mxu0 %v693
  %v1563 = vpop.f32.mrf.mxu0
  %v1564 = vadd.f32 %v1419, %v1563
  %v1565 = vpop.f32.mrf.mxu0
  %1566 = vmatprep.mubr.f32.mxu0 0.0
  %1567 = vmatmul.mubr.f32.gmra.mxu0 %v702
  %v1568 = vpop.f32.mrf.mxu0
  %v1569 = vadd.f32 %v1424, %v1568
  %v1570 = vpop.f32.mrf.mxu0
  %1571 = vdwg.mxu0
  %v1572 = vld [vmem:[%s4] sm:$0xff]
  %v1573 = vld [vmem:[%s4 + $0x8] sm:$0xff]
  %v1574 = vld [vmem:[%s4 + $0x10] sm:$0xff]
  %v1575 = vld [vmem:[%s4 + $0x18] sm:$0xff]
  %v1576 = vld [vmem:[%s4 + $0x20] sm:$0xff]
  %v1577 = vld [vmem:[%s4 + $0x28] sm:$0xff]
  %v1578 = vld [vmem:[%s4 + $0x30] sm:$0xff]
  %v1579 = vld [vmem:[%s4 + $0x38] sm:$0xff]
  %v1580 = vld [vmem:[%s4 + $0x40] sm:$0xff]
  %v1581 = vld [vmem:[%s4 + $0x48] sm:$0xff]
  %v1582 = vld [vmem:[%s4 + $0x50] sm:$0xff]
  %v1583 = vld [vmem:[%s4 + $0x58] sm:$0xff]
  %v1584 = vld [vmem:[%s4 + $0x60] sm:$0xff]
  %v1585 = vld [vmem:[%s4 + $0x68] sm:$0xff]
  %v1586 = vld [vmem:[%s4 + $0x70] sm:$0xff]
  %v1587 = vld [vmem:[%s4 + $0x78] sm:$0xff]
  %v1588 = vld [vmem:[%s5] sm:$0xff]
  %v1589 = vld [vmem:[%s5 + $0x8] sm:$0xff]
  %v1590 = vld [vmem:[%s5 + $0x10] sm:$0xff]
  %v1591 = vld [vmem:[%s5 + $0x18] sm:$0xff]
  %v1592 = vld [vmem:[%s5 + $0x20] sm:$0xff]
  %v1593 = vld [vmem:[%s5 + $0x28] sm:$0xff]
  %v1594 = vld [vmem:[%s5 + $0x30] sm:$0xff]
  %v1595 = vld [vmem:[%s5 + $0x38] sm:$0xff]
  %v1596 = vld [vmem:[%s5 + $0x40] sm:$0xff]
  %v1597 = vld [vmem:[%s5 + $0x48] sm:$0xff]
  %v1598 = vld [vmem:[%s5 + $0x50] sm:$0xff]
  %v1599 = vld [vmem:[%s5 + $0x58] sm:$0xff]
  %v1600 = vld [vmem:[%s5 + $0x60] sm:$0xff]
  %v1601 = vld [vmem:[%s5 + $0x68] sm:$0xff]
  %v1602 = vld [vmem:[%s5 + $0x70] sm:$0xff]
  %v1603 = vld [vmem:[%s5 + $0x78] sm:$0xff]
  %1604 = vmatprep.subr.mxu0 0.0
  %1605 = vmatpush1.msra.mxu0 %v1603
  %1606 = vmatprep.subr.mxu0 0.0
  %1607 = vmatpush1.msra.mxu0 %v1602
  %1608 = vmatprep.subr.mxu0 0.0
  %1609 = vmatpush1.msra.mxu0 %v1601
  %1610 = vmatprep.subr.mxu0 0.0
  %1611 = vmatpush1.msra.mxu0 %v1600
  %1612 = vmatprep.subr.mxu0 0.0
  %1613 = vmatpush1.msra.mxu0 %v1599
  %1614 = vmatprep.subr.mxu0 0.0
  %1615 = vmatpush1.msra.mxu0 %v1598
  %1616 = vmatprep.subr.mxu0 0.0
  %1617 = vmatpush1.msra.mxu0 %v1597
  %1618 = vmatprep.subr.mxu0 0.0
  %1619 = vmatpush1.msra.mxu0 %v1596
  %1620 = vmatprep.subr.mxu0 0.0
  %1621 = vmatpush1.msra.mxu0 %v1595
  %1622 = vmatprep.subr.mxu0 0.0
  %1623 = vmatpush1.msra.mxu0 %v1594
  %1624 = vmatprep.subr.mxu0 0.0
  %1625 = vmatpush1.msra.mxu0 %v1593
  %1626 = vmatprep.subr.mxu0 0.0
  %1627 = vmatpush1.msra.mxu0 %v1592
  %1628 = vmatprep.subr.mxu0 0.0
  %1629 = vmatpush1.msra.mxu0 %v1591
  %1630 = vmatprep.subr.mxu0 0.0
  %1631 = vmatpush1.msra.mxu0 %v1590
  %1632 = vmatprep.subr.mxu0 0.0
  %1633 = vmatpush1.msra.mxu0 %v1589
  %1634 = vmatprep.subr.mxu0 0.0
  %1635 = vmatpush1.msra.mxu0 %v1588
  %1636 = vmatprep.subr.mxu0 0.0
  %1637 = vmatpush2.msra.mxu0 0.0
  %1638 = vmatprep.subr.mxu0 0.0
  %1639 = vmatpush2.msra.mxu0 0.0
  %1640 = vmatprep.subr.mxu0 0.0
  %1641 = vmatpush2.msra.mxu0 0.0
  %1642 = vmatprep.subr.mxu0 0.0
  %1643 = vmatpush2.msra.mxu0 0.0
  %1644 = vmatprep.subr.mxu0 0.0
  %1645 = vmatpush2.msra.mxu0 0.0
  %1646 = vmatprep.subr.mxu0 0.0
  %1647 = vmatpush2.msra.mxu0 0.0
  %1648 = vmatprep.subr.mxu0 0.0
  %1649 = vmatpush2.msra.mxu0 0.0
  %1650 = vmatprep.subr.mxu0 0.0
  %1651 = vmatpush2.msra.mxu0 0.0
  %1652 = vmatprep.subr.mxu0 0.0
  %1653 = vmatpush2.msra.mxu0 0.0
  %1654 = vmatprep.subr.mxu0 0.0
  %1655 = vmatpush2.msra.mxu0 0.0
  %1656 = vmatprep.subr.mxu0 0.0
  %1657 = vmatpush2.msra.mxu0 0.0
  %1658 = vmatprep.subr.mxu0 0.0
  %1659 = vmatpush2.msra.mxu0 0.0
  %1660 = vmatprep.subr.mxu0 0.0
  %1661 = vmatpush2.msra.mxu0 0.0
  %1662 = vmatprep.subr.mxu0 0.0
  %1663 = vmatpush2.msra.mxu0 0.0
  %1664 = vmatprep.subr.mxu0 0.0
  %1665 = vmatpush2.msra.mxu0 0.0
  %1666 = vmatprep.subr.mxu0 0.0
  %1667 = vmatpush2.msra.mxu0 0.0
  %1668 = vmatprep.mubr.f32.mxu0 0.0
  %1669 = vmatmul.mubr.f32.gmra.mxu0 %v1572
  %v1670 = vpop.f32.mrf.mxu0
  %v1671 = vadd.f32 0.0, %v1670
  %v1672 = vpop.f32.mrf.mxu0
  %1673 = vmatprep.mubr.f32.mxu0 0.0
  %1674 = vmatmul.mubr.f32.gmra.mxu0 %v1573
  %v1675 = vpop.f32.mrf.mxu0
  %v1676 = vadd.f32 0.0, %v1675
  %v1677 = vpop.f32.mrf.mxu0
  %1678 = vmatprep.mubr.f32.mxu0 0.0
  %1679 = vmatmul.mubr.f32.gmra.mxu0 %v1574
  %v1680 = vpop.f32.mrf.mxu0
  %v1681 = vadd.f32 0.0, %v1680
  %v1682 = vpop.f32.mrf.mxu0
  %1683 = vmatprep.mubr.f32.mxu0 0.0
  %1684 = vmatmul.mubr.f32.gmra.mxu0 %v1575
  %v1685 = vpop.f32.mrf.mxu0
  %v1686 = vadd.f32 0.0, %v1685
  %v1687 = vpop.f32.mrf.mxu0
  %1688 = vmatprep.mubr.f32.mxu0 0.0
  %1689 = vmatmul.mubr.f32.gmra.mxu0 %v1576
  %v1690 = vpop.f32.mrf.mxu0
  %v1691 = vadd.f32 0.0, %v1690
  %v1692 = vpop.f32.mrf.mxu0
  %1693 = vmatprep.mubr.f32.mxu0 0.0
  %1694 = vmatmul.mubr.f32.gmra.mxu0 %v1577
  %v1695 = vpop.f32.mrf.mxu0
  %v1696 = vadd.f32 0.0, %v1695
  %v1697 = vpop.f32.mrf.mxu0
  %1698 = vmatprep.mubr.f32.mxu0 0.0
  %1699 = vmatmul.mubr.f32.gmra.mxu0 %v1578
  %v1700 = vpop.f32.mrf.mxu0
  %v1701 = vadd.f32 0.0, %v1700
  %v1702 = vpop.f32.mrf.mxu0
  %1703 = vmatprep.mubr.f32.mxu0 0.0
  %1704 = vmatmul.mubr.f32.gmra.mxu0 %v1579
  %v1705 = vpop.f32.mrf.mxu0
  %v1706 = vadd.f32 0.0, %v1705
  %v1707 = vpop.f32.mrf.mxu0
  %1708 = vmatprep.mubr.f32.mxu0 0.0
  %1709 = vmatmul.mubr.f32.gmra.mxu0 %v1580
  %v1710 = vpop.f32.mrf.mxu0
  %v1711 = vadd.f32 0.0, %v1710
  %v1712 = vpop.f32.mrf.mxu0
  %1713 = vmatprep.mubr.f32.mxu0 0.0
  %1714 = vmatmul.mubr.f32.gmra.mxu0 %v1581
  %v1715 = vpop.f32.mrf.mxu0
  %v1716 = vadd.f32 0.0, %v1715
  %v1717 = vpop.f32.mrf.mxu0
  %1718 = vmatprep.mubr.f32.mxu0 0.0
  %1719 = vmatmul.mubr.f32.gmra.mxu0 %v1582
  %v1720 = vpop.f32.mrf.mxu0
  %v1721 = vadd.f32 0.0, %v1720
  %v1722 = vpop.f32.mrf.mxu0
  %1723 = vmatprep.mubr.f32.mxu0 0.0
  %1724 = vmatmul.mubr.f32.gmra.mxu0 %v1583
  %v1725 = vpop.f32.mrf.mxu0
  %v1726 = vadd.f32 0.0, %v1725
  %v1727 = vpop.f32.mrf.mxu0
  %1728 = vmatprep.mubr.f32.mxu0 0.0
  %1729 = vmatmul.mubr.f32.gmra.mxu0 %v1584
  %v1730 = vpop.f32.mrf.mxu0
  %v1731 = vadd.f32 0.0, %v1730
  %v1732 = vpop.f32.mrf.mxu0
  %1733 = vmatprep.mubr.f32.mxu0 0.0
  %1734 = vmatmul.mubr.f32.gmra.mxu0 %v1585
  %v1735 = vpop.f32.mrf.mxu0
  %v1736 = vadd.f32 0.0, %v1735
  %v1737 = vpop.f32.mrf.mxu0
  %1738 = vmatprep.mubr.f32.mxu0 0.0
  %1739 = vmatmul.mubr.f32.gmra.mxu0 %v1586
  %v1740 = vpop.f32.mrf.mxu0
  %v1741 = vadd.f32 0.0, %v1740
  %v1742 = vpop.f32.mrf.mxu0
  %1743 = vmatprep.mubr.f32.mxu0 0.0
  %1744 = vmatmul.mubr.f32.gmra.mxu0 %v1587
  %v1745 = vpop.f32.mrf.mxu0
  %v1746 = vadd.f32 0.0, %v1745
  %v1747 = vpop.f32.mrf.mxu0
  %1748 = vdwg.mxu0
  %1749 = vst [vmem:[%s6] sm:$0xff] %v1494
  %1750 = vst [vmem:[%s6 + $0x8] sm:$0xff] %v1499
  %1751 = vst [vmem:[%s6 + $0x10] sm:$0xff] %v1504
  %1752 = vst [vmem:[%s6 + $0x18] sm:$0xff] %v1509
  %1753 = vst [vmem:[%s6 + $0x20] sm:$0xff] %v1514
  %1754 = vst [vmem:[%s6 + $0x28] sm:$0xff] %v1519
  %1755 = vst [vmem:[%s6 + $0x30] sm:$0xff] %v1524
  %1756 = vst [vmem:[%s6 + $0x38] sm:$0xff] %v1529
  %1757 = vst [vmem:[%s6 + $0x40] sm:$0xff] %v1534
  %1758 = vst [vmem:[%s6 + $0x48] sm:$0xff] %v1539
  %1759 = vst [vmem:[%s6 + $0x50] sm:$0xff] %v1544
  %1760 = vst [vmem:[%s6 + $0x58] sm:$0xff] %v1549
  %1761 = vst [vmem:[%s6 + $0x60] sm:$0xff] %v1554
  %1762 = vst [vmem:[%s6 + $0x68] sm:$0xff] %v1559
  %1763 = vst [vmem:[%s6 + $0x70] sm:$0xff] %v1564
  %1764 = vst [vmem:[%s6 + $0x78] sm:$0xff] %v1569
  %1765 = vst [vmem:[%s7] sm:$0xff] %v1671
  %1766 = vst [vmem:[%s7 + $0x8] sm:$0xff] %v1676
  %1767 = vst [vmem:[%s7 + $0x10] sm:$0xff] %v1681
  %1768 = vst [vmem:[%s7 + $0x18] sm:$0xff] %v1686
  %1769 = vst [vmem:[%s7 + $0x20] sm:$0xff] %v1691
  %1770 = vst [vmem:[%s7 + $0x28] sm:$0xff] %v1696
  %1771 = vst [vmem:[%s7 + $0x30] sm:$0xff] %v1701
  %1772 = vst [vmem:[%s7 + $0x38] sm:$0xff] %v1706
  %1773 = vst [vmem:[%s7 + $0x40] sm:$0xff] %v1711
  %1774 = vst [vmem:[%s7 + $0x48] sm:$0xff] %v1716
  %1775 = vst [vmem:[%s7 + $0x50] sm:$0xff] %v1721
  %1776 = vst [vmem:[%s7 + $0x58] sm:$0xff] %v1726
  %1777 = vst [vmem:[%s7 + $0x60] sm:$0xff] %v1731
  %1778 = vst [vmem:[%s7 + $0x68] sm:$0xff] %v1736
  %1779 = vst [vmem:[%s7 + $0x70] sm:$0xff] %v1741
  %1780 = vst [vmem:[%s7 + $0x78] sm:$0xff] %v1746
  %s1781 = smul.u32 0, 128
  %v1782 = vlaneseq
  %v1783 = vshrl.u32 %v1782, 7
  %v1784 = vadd.s32 %v1783, 8
  %v1785 = vadd.s32 %v1783, 16
  %v1786 = vadd.s32 %v1783, 24
  %v1787 = vadd.s32 %v1783, 32
  %v1788 = vadd.s32 %v1783, 40
  %v1789 = vadd.s32 %v1783, 48
  %v1790 = vadd.s32 %v1783, 56
  %v1791 = vadd.s32 %v1783, 64
  %v1792 = vadd.s32 %v1783, 72
  %v1793 = vadd.s32 %v1783, 80
  %v1794 = vadd.s32 %v1783, 88
  %v1795 = vadd.s32 %v1783, 96
  %v1796 = vadd.s32 %v1783, 104
  %v1797 = vadd.s32 %v1783, 112
  %v1798 = vadd.s32 %v1783, 120
  %v1799 = vstv %s1781
  %v1800 = vadd.s32 %v1799, %v1783
  %v1801 = vadd.s32 %v1799, %v1784
  %v1802 = vadd.s32 %v1799, %v1785
  %v1803 = vadd.s32 %v1799, %v1786
  %v1804 = vadd.s32 %v1799, %v1787
  %v1805 = vadd.s32 %v1799, %v1788
  %v1806 = vadd.s32 %v1799, %v1789
  %v1807 = vadd.s32 %v1799, %v1790
  %v1808 = vadd.s32 %v1799, %v1791
  %v1809 = vadd.s32 %v1799, %v1792
  %v1810 = vadd.s32 %v1799, %v1793
  %v1811 = vadd.s32 %v1799, %v1794
  %v1812 = vadd.s32 %v1799, %v1795
  %v1813 = vadd.s32 %v1799, %v1796
  %v1814 = vadd.s32 %v1799, %v1797
  %v1815 = vadd.s32 %v1799, %v1798
  %vm1816 = vcmp.lt.s32.totalorder %v1800, 128
  %vm1817 = vcmp.lt.s32.totalorder %v1801, 128
  %vm1818 = vcmp.lt.s32.totalorder %v1802, 128
  %vm1819 = vcmp.lt.s32.totalorder %v1803, 128
  %vm1820 = vcmp.lt.s32.totalorder %v1804, 128
  %vm1821 = vcmp.lt.s32.totalorder %v1805, 128
  %vm1822 = vcmp.lt.s32.totalorder %v1806, 128
  %vm1823 = vcmp.lt.s32.totalorder %v1807, 128
  %vm1824 = vcmp.lt.s32.totalorder %v1808, 128
  %vm1825 = vcmp.lt.s32.totalorder %v1809, 128
  %vm1826 = vcmp.lt.s32.totalorder %v1810, 128
  %vm1827 = vcmp.lt.s32.totalorder %v1811, 128
  %vm1828 = vcmp.lt.s32.totalorder %v1812, 128
  %vm1829 = vcmp.lt.s32.totalorder %v1813, 128
  %vm1830 = vcmp.lt.s32.totalorder %v1814, 128
  %vm1831 = vcmp.lt.s32.totalorder %v1815, 128
  %v1832 = vsel %vm1816, 1, 0
  %v1833 = vsel %vm1817, 1, 0
  %v1834 = vsel %vm1818, 1, 0
  %v1835 = vsel %vm1819, 1, 0
  %v1836 = vsel %vm1820, 1, 0
  %v1837 = vsel %vm1821, 1, 0
  %v1838 = vsel %vm1822, 1, 0
  %v1839 = vsel %vm1823, 1, 0
  %v1840 = vsel %vm1824, 1, 0
  %v1841 = vsel %vm1825, 1, 0
  %v1842 = vsel %vm1826, 1, 0
  %v1843 = vsel %vm1827, 1, 0
  %v1844 = vsel %vm1828, 1, 0
  %v1845 = vsel %vm1829, 1, 0
  %v1846 = vsel %vm1830, 1, 0
  %v1847 = vsel %vm1831, 1, 0
  %vm1848 = vcmp.eq.s32.totalorder %v1832, 1
  %vm1849 = vcmp.eq.s32.totalorder %v1833, 1
  %vm1850 = vcmp.eq.s32.totalorder %v1834, 1
  %vm1851 = vcmp.eq.s32.totalorder %v1835, 1
  %vm1852 = vcmp.eq.s32.totalorder %v1836, 1
  %vm1853 = vcmp.eq.s32.totalorder %v1837, 1
  %vm1854 = vcmp.eq.s32.totalorder %v1838, 1
  %vm1855 = vcmp.eq.s32.totalorder %v1839, 1
  %vm1856 = vcmp.eq.s32.totalorder %v1840, 1
  %vm1857 = vcmp.eq.s32.totalorder %v1841, 1
  %vm1858 = vcmp.eq.s32.totalorder %v1842, 1
  %vm1859 = vcmp.eq.s32.totalorder %v1843, 1
  %vm1860 = vcmp.eq.s32.totalorder %v1844, 1
  %vm1861 = vcmp.eq.s32.totalorder %v1845, 1
  %vm1862 = vcmp.eq.s32.totalorder %v1846, 1
  %vm1863 = vcmp.eq.s32.totalorder %v1847, 1
  %v1864 = vsel %vm1848, %v1494, 0.0
  %v1865 = vsel %vm1849, %v1499, 0.0
  %v1866 = vsel %vm1850, %v1504, 0.0
  %v1867 = vsel %vm1851, %v1509, 0.0
  %v1868 = vsel %vm1852, %v1514, 0.0
  %v1869 = vsel %vm1853, %v1519, 0.0
  %v1870 = vsel %vm1854, %v1524, 0.0
  %v1871 = vsel %vm1855, %v1529, 0.0
  %v1872 = vsel %vm1856, %v1534, 0.0
  %v1873 = vsel %vm1857, %v1539, 0.0
  %v1874 = vsel %vm1858, %v1544, 0.0
  %v1875 = vsel %vm1859, %v1549, 0.0
  %v1876 = vsel %vm1860, %v1554, 0.0
  %v1877 = vsel %vm1861, %v1559, 0.0
  %v1878 = vsel %vm1862, %v1564, 0.0
  %v1879 = vsel %vm1863, %v1569, 0.0
  %v1880 = vsel %vm1848, %v1671, 0.0
  %v1881 = vsel %vm1849, %v1676, 0.0
  %v1882 = vsel %vm1850, %v1681, 0.0
  %v1883 = vsel %vm1851, %v1686, 0.0
  %v1884 = vsel %vm1852, %v1691, 0.0
  %v1885 = vsel %vm1853, %v1696, 0.0
  %v1886 = vsel %vm1854, %v1701, 0.0
  %v1887 = vsel %vm1855, %v1706, 0.0
  %v1888 = vsel %vm1856, %v1711, 0.0
  %v1889 = vsel %vm1857, %v1716, 0.0
  %v1890 = vsel %vm1858, %v1721, 0.0
  %v1891 = vsel %vm1859, %v1726, 0.0
  %v1892 = vsel %vm1860, %v1731, 0.0
  %v1893 = vsel %vm1861, %v1736, 0.0
  %v1894 = vsel %vm1862, %v1741, 0.0
  %v1895 = vsel %vm1863, %v1746, 0.0
  %v1896 = vadd.f32 %v1864, %v1865
  %v1897 = vadd.f32 %v1896, %v1866
  %v1898 = vadd.f32 %v1897, %v1867
  %v1899 = vadd.f32 %v1898, %v1868
  %v1900 = vadd.f32 %v1899, %v1869
  %v1901 = vadd.f32 %v1900, %v1870
  %v1902 = vadd.f32 %v1901, %v1871
  %v1903 = vadd.f32 %v1902, %v1872
  %v1904 = vadd.f32 %v1903, %v1873
  %v1905 = vadd.f32 %v1904, %v1874
  %v1906 = vadd.f32 %v1905, %v1875
  %v1907 = vadd.f32 %v1906, %v1876
  %v1908 = vadd.f32 %v1907, %v1877
  %v1909 = vadd.f32 %v1908, %v1878
  %v1910 = vadd.f32 %v1909, %v1879
  %v1911 = vrot.slane %v1910, 4
  %v1912 = vadd.f32 %v1910, %v1911
  %v1913 = vrot.slane %v1912, 2
  %v1914 = vadd.f32 %v1912, %v1913
  %v1915 = vrot.slane %v1914, 1
  %v1916 = vadd.f32 %v1914, %v1915
  %1917 = vst [vmem:[%s8] sm:$0xff] %v1916
  %v1918 = vmul.f32 %v1864, %v1864
  %v1919 = vmul.f32 %v1865, %v1865
  %v1920 = vmul.f32 %v1866, %v1866
  %v1921 = vmul.f32 %v1867, %v1867
  %v1922 = vmul.f32 %v1868, %v1868
  %v1923 = vmul.f32 %v1869, %v1869
  %v1924 = vmul.f32 %v1870, %v1870
  %v1925 = vmul.f32 %v1871, %v1871
  %v1926 = vmul.f32 %v1872, %v1872
  %v1927 = vmul.f32 %v1873, %v1873
  %v1928 = vmul.f32 %v1874, %v1874
  %v1929 = vmul.f32 %v1875, %v1875
  %v1930 = vmul.f32 %v1876, %v1876
  %v1931 = vmul.f32 %v1877, %v1877
  %v1932 = vmul.f32 %v1878, %v1878
  %v1933 = vmul.f32 %v1879, %v1879
  %v1934 = vadd.f32 %v1918, %v1919
  %v1935 = vadd.f32 %v1934, %v1920
  %v1936 = vadd.f32 %v1935, %v1921
  %v1937 = vadd.f32 %v1936, %v1922
  %v1938 = vadd.f32 %v1937, %v1923
  %v1939 = vadd.f32 %v1938, %v1924
  %v1940 = vadd.f32 %v1939, %v1925
  %v1941 = vadd.f32 %v1940, %v1926
  %v1942 = vadd.f32 %v1941, %v1927
  %v1943 = vadd.f32 %v1942, %v1928
  %v1944 = vadd.f32 %v1943, %v1929
  %v1945 = vadd.f32 %v1944, %v1930
  %v1946 = vadd.f32 %v1945, %v1931
  %v1947 = vadd.f32 %v1946, %v1932
  %v1948 = vadd.f32 %v1947, %v1933
  %v1949 = vrot.slane %v1948, 4
  %v1950 = vadd.f32 %v1948, %v1949
  %v1951 = vrot.slane %v1950, 2
  %v1952 = vadd.f32 %v1950, %v1951
  %v1953 = vrot.slane %v1952, 1
  %v1954 = vadd.f32 %v1952, %v1953
  %1955 = vst [vmem:[%s9] sm:$0xff] %v1954
  %v1956 = vadd.f32 %v1880, %v1881
  %v1957 = vadd.f32 %v1956, %v1882
  %v1958 = vadd.f32 %v1957, %v1883
  %v1959 = vadd.f32 %v1958, %v1884
  %v1960 = vadd.f32 %v1959, %v1885
  %v1961 = vadd.f32 %v1960, %v1886
  %v1962 = vadd.f32 %v1961, %v1887
  %v1963 = vadd.f32 %v1962, %v1888
  %v1964 = vadd.f32 %v1963, %v1889
  %v1965 = vadd.f32 %v1964, %v1890
  %v1966 = vadd.f32 %v1965, %v1891
  %v1967 = vadd.f32 %v1966, %v1892
  %v1968 = vadd.f32 %v1967, %v1893
  %v1969 = vadd.f32 %v1968, %v1894
  %v1970 = vadd.f32 %v1969, %v1895
  %v1971 = vrot.slane %v1970, 4
  %v1972 = vadd.f32 %v1970, %v1971
  %v1973 = vrot.slane %v1972, 2
  %v1974 = vadd.f32 %v1972, %v1973
  %v1975 = vrot.slane %v1974, 1
  %v1976 = vadd.f32 %v1974, %v1975
  %1977 = vst [vmem:[%s10] sm:$0xff] %v1976
  %v1978 = vmul.f32 %v1880, %v1880
  %v1979 = vmul.f32 %v1881, %v1881
  %v1980 = vmul.f32 %v1882, %v1882
  %v1981 = vmul.f32 %v1883, %v1883
  %v1982 = vmul.f32 %v1884, %v1884
  %v1983 = vmul.f32 %v1885, %v1885
  %v1984 = vmul.f32 %v1886, %v1886
  %v1985 = vmul.f32 %v1887, %v1887
  %v1986 = vmul.f32 %v1888, %v1888
  %v1987 = vmul.f32 %v1889, %v1889
  %v1988 = vmul.f32 %v1890, %v1890
  %v1989 = vmul.f32 %v1891, %v1891
  %v1990 = vmul.f32 %v1892, %v1892
  %v1991 = vmul.f32 %v1893, %v1893
  %v1992 = vmul.f32 %v1894, %v1894
  %v1993 = vmul.f32 %v1895, %v1895
  %v1994 = vadd.f32 %v1978, %v1979
  %v1995 = vadd.f32 %v1994, %v1980
  %v1996 = vadd.f32 %v1995, %v1981
  %v1997 = vadd.f32 %v1996, %v1982
  %v1998 = vadd.f32 %v1997, %v1983
  %v1999 = vadd.f32 %v1998, %v1984
  %v2000 = vadd.f32 %v1999, %v1985
  %v2001 = vadd.f32 %v2000, %v1986
  %v2002 = vadd.f32 %v2001, %v1987
  %v2003 = vadd.f32 %v2002, %v1988
  %v2004 = vadd.f32 %v2003, %v1989
  %v2005 = vadd.f32 %v2004, %v1990
  %v2006 = vadd.f32 %v2005, %v1991
  %v2007 = vadd.f32 %v2006, %v1992
  %v2008 = vadd.f32 %v2007, %v1993
  %v2009 = vrot.slane %v2008, 4
  %v2010 = vadd.f32 %v2008, %v2009
  %v2011 = vrot.slane %v2010, 2
  %v2012 = vadd.f32 %v2010, %v2011
  %v2013 = vrot.slane %v2012, 1
  %v2014 = vadd.f32 %v2012, %v2013
  %2015 = vst [vmem:[%s11] sm:$0xff] %v2014
  // Predicated region
  $region26: #{resblk_forward.4} parent=0 // pred_check
    _
  $region27: #{resblk_forward.4} parent=0 // pred_check_branch
    %2017 = sbr.rel (0) target = $region29
  $region28: #{resblk_forward.4} parent=0 // pred_region
    _
  $region29: #{resblk_forward.4} parent=0 // pred_fallthru
    _
  // Predicated region
  $region30: #{resblk_forward.4} parent=0 // pred_check
    _
  $region31: #{resblk_forward.4} parent=0 // pred_check_branch
    %2019 = sbr.rel (0) target = $region33
  $region32: #{resblk_forward.4} parent=0 // pred_region
    _
  $region33: #{resblk_forward.4} parent=0 // pred_fallthru
    _
  // Predicated region
  $region34: #{resblk_forward.4} parent=0 // pred_check
    _
  $region35: #{resblk_forward.4} parent=0 // pred_check_branch
    %2021 = sbr.rel (0) target = $region37
  $region36: #{resblk_forward.4} parent=0 // pred_region
    _
  $region37: #{resblk_forward.4} parent=0 // pred_fallthru
    _
  // Predicated region
  $region38: #{resblk_forward.4} parent=0 // pred_check
    _
  $region39: #{resblk_forward.4} parent=0 // pred_check_branch
    %2023 = sbr.rel (0) target = $region41
  $region40: #{resblk_forward.4} parent=0 // pred_region
    _
  $region41: #{resblk_forward.4} parent=0 // pred_fallthru
    _
  // Predicated region
  $region42: #{resblk_forward.4} parent=0 // pred_check
    _
  $region43: #{resblk_forward.4} parent=0 // pred_check_branch
    %2025 = sbr.rel (0) target = $region45
  $region44: #{resblk_forward.4} parent=0 // pred_region
    _
  $region45: #{resblk_forward.4} parent=0 // pred_fallthru
    _
  // Predicated region
  $region46: #{resblk_forward.4} parent=0 // pred_check
    _
  $region47: #{resblk_forward.4} parent=0 // pred_check_branch
    %2027 = sbr.rel (0) target = $region49
  $region48: #{resblk_forward.4} parent=0 // pred_region
    _
  $region49: #{resblk_forward.4} parent=0 // pred_fallthru
    _
  // Predicated region
  $region50: #{resblk_forward.4} parent=0 // pred_check
    _
  $region51: #{resblk_forward.4} parent=0 // pred_check_branch
    %2029 = sbr.rel (0) target = $region53
  $region52: #{resblk_forward.4} parent=0 // pred_region
    _
  $region53: #{resblk_forward.4} parent=0 // pred_fallthru
    _
  // Predicated region
  $region54: #{resblk_forward.4} parent=0 // pred_check
    _
  $region55: #{resblk_forward.4} parent=0 // pred_check_branch
    %2031 = sbr.rel (0) target = $region57
  $region56: #{resblk_forward.4} parent=0 // pred_region
    _
  $region57: #{resblk_forward.4} parent=0 // pred_fallthru
    _
  // Predicated region
  $region58: #{resblk_forward.4} parent=0 // pred_check
    _
  $region59: #{resblk_forward.4} parent=0 // pred_check_branch
    %2033 = sbr.rel (0) target = $region61
  $region60: #{resblk_forward.4} parent=0 // pred_region
    _
  $region61: #{resblk_forward.4} parent=0 // pred_fallthru
    _
  // Predicated region
  $region62: #{resblk_forward.4} parent=0 // pred_check
    _
  $region63: #{resblk_forward.4} parent=0 // pred_check_branch
    %2035 = sbr.rel (0) target = $region65
  $region64: #{resblk_forward.4} parent=0 // pred_region
    _
  $region65: #{resblk_forward.4} parent=0 // pred_fallthru
    _
  // Predicated region
  $region66: #{resblk_forward.4} parent=0 // pred_check
    _
  $region67: #{resblk_forward.4} parent=0 // pred_check_branch
    %2037 = sbr.rel (0) target = $region69
  $region68: #{resblk_forward.4} parent=0 // pred_region
    _
  $region69: #{resblk_forward.4} parent=0 // pred_fallthru
    _
  // Predicated region
  $region70: #{resblk_forward.4} parent=0 // pred_check
    _
  $region71: #{resblk_forward.4} parent=0 // pred_check_branch
    %2039 = sbr.rel (0) target = $region73
  $region72: #{resblk_forward.4} parent=0 // pred_region
    _
  $region73: #{resblk_forward.4} parent=0 // pred_fallthru
    _

</llo_original>
